<compile_context>
chip_gen: v7x
topology: tpu7x:2x2x1
jax: 0.10.0
libtpu: 0.0.40
codegen_flags: <defaults>
</compile_context>

<pallas_src>
import jax
import jax.numpy as jnp
import numpy as np
from jax import lax
from jax.experimental import pallas as pl
from jax.experimental.pallas import tpu as pltpu

K = 4        # conv kernel size
STRIDE = 2   # down/up stride
PAD = 1      # conv padding
EPS = 1e-5   # BatchNorm eps

_MAX_TILE_ROWS = 512                 # >=512-row tiles reach ~85% of HBM roofline
_VMEM_BUDGET = 24 * 1024 * 1024      # conservative, fits v5e/v6e/v7x scoped VMEM
_VMEM_LIMIT = 32 * 1024 * 1024


# ----------------------------- Pallas kernels ------------------------------ #

def _matmul_kernel(a_ref, w_ref, o_ref):
    """Plain im2col conv matmul, f32 MXU accumulation."""
    o_ref[...] = jnp.dot(a_ref[...], w_ref[...],
                         preferred_element_type=jnp.float32)


def _relu_matmul_kernel(a_ref, w_ref, o_ref):
    """ConvTranspose matmul with the module's uprelu fused as the prologue."""
    a = jnp.maximum(a_ref[...], 0).astype(a_ref.dtype)
    o_ref[...] = jnp.dot(a, w_ref[...], preferred_element_type=jnp.float32)


def _scale_shift_kernel(t_ref, scale_ref, shift_ref, o_ref):
    """BatchNorm apply: y = t*scale + shift (scale/shift from GLOBAL stats)."""
    o_ref[...] = t_ref[...] * scale_ref[...] + shift_ref[...]


def _bias_tanh_kernel(t_ref, bias_ref, o_ref):
    """Outermost epilogue: y = tanh(t + bias)."""
    o_ref[...] = jnp.tanh(t_ref[...] + bias_ref[...])


# ------------------------------- helpers ----------------------------------- #

def _round_up(x, m):
    return ((x + m - 1) // m) * m


def _choose_tile_rows(n_rows, in_cols, out_cols, in_bytes, out_bytes,
                      resident_bytes):
    """Largest row tile (multiple of 8, <= 512) whose double-buffered input and
    output tiles plus the grid-resident operands fit the VMEM budget."""
    tile = min(_round_up(max(n_rows, 1), 8), _MAX_TILE_ROWS)

    def vmem_need(t):
        return (2 * t * in_cols * in_bytes
                + 2 * t * out_cols * out_bytes
                + resident_bytes)

    while tile > 8 and vmem_need(tile) > _VMEM_BUDGET:
        tile = max(8, _round_up(tile // 2, 8))
    return tile


def _mosaic_params():
    return pltpu.CompilerParams(dimension_semantics=("parallel",),
                                vmem_limit_bytes=_VMEM_LIMIT)


def _extract_patches(x_padded, ksize, stride):
    """im2col on an already-padded NHWC array. Flatten order: (kh, kw, c)."""
    N, Hp, Wp, C = x_padded.shape
    Ho = (Hp - ksize) // stride + 1
    Wo = (Wp - ksize) // stride + 1
    cols = []
    for kh in range(ksize):
        for kw in range(ksize):
            cols.append(x_padded[:, kh:kh + stride * Ho:stride,
                                 kw:kw + stride * Wo:stride, :])
    patches = jnp.stack(cols, axis=3)                      # (N, Ho, Wo, k*k, C)
    return patches.reshape(N * Ho * Wo, ksize * ksize * C), Ho, Wo


# --------------------------- Pallas building blocks ------------------------- #

def conv_down_4x4s2(x_nhwc, w_oihw, compute_dtype):
    """Conv2d(Cin, Cout, k=4, s=2, p=1, bias=False) on NHWC input."""
    N, H, W, Cin = x_nhwc.shape
    Cout = w_oihw.shape[0]
    x_pad = jnp.pad(x_nhwc, ((0, 0), (PAD, PAD), (PAD, PAD), (0, 0)))
    patches, Ho, Wo = _extract_patches(x_pad, K, STRIDE)    # (M, 16*Cin)
    M, K1 = patches.shape
    Cp = _round_up(Cout, 128)                               # lane-dense output

    w_mat = jnp.transpose(w_oihw, (2, 3, 1, 0)).reshape(K1, Cout)   # (kh,kw,ci,co)
    w_mat = jnp.pad(w_mat, ((0, 0), (0, Cp - Cout))).astype(compute_dtype)

    in_b = jnp.dtype(compute_dtype).itemsize
    tile_m = _choose_tile_rows(M, K1, Cp, in_b, 4, K1 * Cp * in_b)
    Mp = _round_up(M, tile_m)
    a = jnp.pad(patches.astype(compute_dtype), ((0, Mp - M), (0, 0)))

    out = pl.pallas_call(
        _matmul_kernel,
        grid=(Mp // tile_m,),
        in_specs=[pl.BlockSpec((tile_m, K1), lambda i: (i, 0)),
                  pl.BlockSpec((K1, Cp), lambda i: (0, 0))],
        out_specs=pl.BlockSpec((tile_m, Cp), lambda i: (i, 0)),
        out_shape=jax.ShapeDtypeStruct((Mp, Cp), jnp.float32),
        compiler_params=_mosaic_params(),
        cost_estimate=pl.CostEstimate(
            flops=2 * Mp * K1 * Cp, transcendentals=0,
            bytes_accessed=(Mp * K1 + K1 * Cp) * in_b + Mp * Cp * 4),
    )(a, w_mat)
    return out[:M, :Cout].reshape(N, Ho, Wo, Cout)


def convT_up_4x4s2(s_nhwc, w_iohw, compute_dtype):
    """ReLU -> ConvTranspose2d(Cin, Cout, k=4, s=2, p=1, bias=False).
    Matmul (Pallas, ReLU fused) + col2im overlap-add (XLA layout glue)."""
    N, Ho, Wo, Cin = s_nhwc.shape
    Cout = w_iohw.shape[1]
    Cp8 = _round_up(Cout, 8)
    n_up = K * K * Cp8                                      # multiple of 128

    w = jnp.transpose(w_iohw, (0, 2, 3, 1))                 # (ci, kh, kw, co)
    w = jnp.pad(w, ((0, 0), (0, 0), (0, 0), (0, Cp8 - Cout)))
    w = w.reshape(Cin, n_up).astype(compute_dtype)

    M = N * Ho * Wo
    d = s_nhwc.reshape(M, Cin).astype(compute_dtype)
    in_b = jnp.dtype(compute_dtype).itemsize
    tile_m = _choose_tile_rows(M, Cin, n_up, in_b, 4, Cin * n_up * in_b)
    Mp = _round_up(M, tile_m)
    d = jnp.pad(d, ((0, Mp - M), (0, 0)))

    u = pl.pallas_call(
        _relu_matmul_kernel,
        grid=(Mp // tile_m,),
        in_specs=[pl.BlockSpec((tile_m, Cin), lambda i: (i, 0)),
                  pl.BlockSpec((Cin, n_up), lambda i: (0, 0))],
        out_specs=pl.BlockSpec((tile_m, n_up), lambda i: (i, 0)),
        out_shape=jax.ShapeDtypeStruct((Mp, n_up), jnp.float32),
        compiler_params=_mosaic_params(),
        cost_estimate=pl.CostEstimate(
            flops=2 * Mp * Cin * n_up, transcendentals=0,
            bytes_accessed=(Mp * Cin + Cin * n_up) * in_b + Mp * n_up * 4),
    )(d, w)

    # col2im overlap-add: output pixel y=2i-1+kh, x=2j-1+kw gets U[i,j,kh,kw,:].
    U6 = u[:M].reshape(N, Ho, Wo, K, K, Cp8)
    u_kh = lambda kk: U6[:, :, :, kk, :, :]                         # (N,Ho,Wo,K,C)
    row_m1 = lambda a: jnp.pad(a, ((0, 0), (1, 0), (0, 0), (0, 0), (0, 0)))[:, :Ho]
    row_p1 = lambda a: jnp.pad(a, ((0, 0), (0, 1), (0, 0), (0, 0), (0, 0)))[:, 1:]
    E = u_kh(1) + row_m1(u_kh(3))      # even output rows
    O = u_kh(2) + row_p1(u_kh(0))      # odd  output rows
    col = lambda a, kk: a[:, :, :, kk, :]                           # (N,Ho,Wo,C)
    col_m1 = lambda a: jnp.pad(a, ((0, 0), (0, 0), (1, 0), (0, 0)))[:, :, :Wo]
    col_p1 = lambda a: jnp.pad(a, ((0, 0), (0, 0), (0, 1), (0, 0)))[:, :, 1:]
    EE = col(E, 1) + col_m1(col(E, 3))
    EO = col(E, 2) + col_p1(col(E, 0))
    OE = col(O, 1) + col_m1(col(O, 3))
    OO = col(O, 2) + col_p1(col(O, 0))
    t = jnp.stack([jnp.stack([EE, EO], axis=3),
                   jnp.stack([OE, OO], axis=3)], axis=2)            # (N,Ho,2,Wo,2,C)
    t = t.reshape(N, 2 * Ho, 2 * Wo, Cp8)
    return t[..., :Cout]


def batchnorm2d(t_nhwc, gamma, beta):
    """Training-mode BatchNorm2d. Statistics are a GLOBAL XLA reduction; the
    normalize+affine runs as a lane-dense tiled Pallas scale/shift kernel."""
    N, H, W, C = t_nhwc.shape
    mean = jnp.mean(t_nhwc, axis=(0, 1, 2))
    var = jnp.mean(jnp.square(t_nhwc - mean), axis=(0, 1, 2))       # biased var
    scale = gamma * lax.rsqrt(var + EPS)
    shift = beta - mean * scale

    R, L = N * H, W * C
    t2d = t_nhwc.reshape(R, L).astype(jnp.float32)
    scale_row = jnp.tile(scale, W).reshape(1, L).astype(jnp.float32)
    shift_row = jnp.tile(shift, W).reshape(1, L).astype(jnp.float32)
    tile_r = _choose_tile_rows(R, L, L, 4, 4, 2 * L * 4)
    Rp = _round_up(R, tile_r)
    t2d = jnp.pad(t2d, ((0, Rp - R), (0, 0)))

    y = pl.pallas_call(
        _scale_shift_kernel,
        grid=(Rp // tile_r,),
        in_specs=[pl.BlockSpec((tile_r, L), lambda i: (i, 0)),
                  pl.BlockSpec((1, L), lambda i: (0, 0)),
                  pl.BlockSpec((1, L), lambda i: (0, 0))],
        out_specs=pl.BlockSpec((tile_r, L), lambda i: (i, 0)),
        out_shape=jax.ShapeDtypeStruct((Rp, L), jnp.float32),
        compiler_params=_mosaic_params(),
        cost_estimate=pl.CostEstimate(
            flops=2 * Rp * L, transcendentals=0,
            bytes_accessed=2 * Rp * L * 4 + 2 * L * 4),
    )(t2d, scale_row, shift_row)
    return y[:R].reshape(N, H, W, C)


def bias_tanh(t_nhwc, bias):
    """Outermost epilogue: tanh(t + bias), lane-dense tiled Pallas kernel."""
    N, H, W, C = t_nhwc.shape
    R, L = N * H, W * C
    t2d = t_nhwc.reshape(R, L).astype(jnp.float32)
    b_row = jnp.tile(bias, W).reshape(1, L).astype(jnp.float32)
    tile_r = _choose_tile_rows(R, L, L, 4, 4, L * 4)
    Rp = _round_up(R, tile_r)
    t2d = jnp.pad(t2d, ((0, Rp - R), (0, 0)))

    y = pl.pallas_call(
        _bias_tanh_kernel,
        grid=(Rp // tile_r,),
        in_specs=[pl.BlockSpec((tile_r, L), lambda i: (i, 0)),
                  pl.BlockSpec((1, L), lambda i: (0, 0))],
        out_specs=pl.BlockSpec((tile_r, L), lambda i: (i, 0)),
        out_shape=jax.ShapeDtypeStruct((Rp, L), jnp.float32),
        compiler_params=_mosaic_params(),
        cost_estimate=pl.CostEstimate(
            flops=Rp * L, transcendentals=Rp * L,
            bytes_accessed=2 * Rp * L * 4 + L * 4),
    )(t2d, b_row)
    return y[:R].reshape(N, H, W, C)


# --------------------------- recursive UNet forward ------------------------- #

def _block_forward(x_nhwc, bp, compute_dtype):
    kind = bp["kind"]
    if kind == "outermost":
        d = conv_down_4x4s2(x_nhwc, bp["down_w"], compute_dtype)
        s = _block_forward(d, bp["submodule"], compute_dtype)
        t = convT_up_4x4s2(s, bp["up_w"], compute_dtype)     # ReLU fused in kernel
        return bias_tanh(t, bp["up_b"])

    # innermost / middle: downrelu (LeakyReLU 0.2) applied once pre-im2col.
    h = jnp.where(x_nhwc >= 0, x_nhwc, 0.2 * x_nhwc)
    d = conv_down_4x4s2(h, bp["down_w"], compute_dtype)
    if kind == "middle":
        d = batchnorm2d(d, bp["down_gamma"], bp["down_beta"])
        s = _block_forward(d, bp["submodule"], compute_dtype)
    else:                                                     # innermost
        s = d
    t = convT_up_4x4s2(s, bp["up_w"], compute_dtype)          # ReLU fused in kernel
    t = batchnorm2d(t, bp["up_gamma"], bp["up_beta"])
    return jnp.concatenate([x_nhwc, t], axis=-1)              # skip connection


def unet_forward(x_nchw, params, compute_dtype=jnp.bfloat16):
    x_nhwc = jnp.transpose(x_nchw, (0, 2, 3, 1))
    y = _block_forward(x_nhwc, params, compute_dtype)
    return jnp.transpose(y, (0, 3, 1, 2))


# ------------------------------- parameters --------------------------------- #

def _init_block(key, outer_nc, inner_nc, input_nc=None, submodule=None,
                outermost=False, innermost=False):
    if input_nc is None:
        input_nc = outer_nc
    k = jax.random.split(key, 8)
    kind = "outermost" if outermost else ("innermost" if innermost else "middle")
    p = {"kind": kind, "submodule": submodule}
    p["down_w"] = 0.1 * jax.random.normal(k[0], (inner_nc, input_nc, K, K),
                                          jnp.float32)
    if kind == "middle":
        p["down_gamma"] = 1.0 + 0.1 * jax.random.normal(k[1], (inner_nc,), jnp.float32)
        p["down_beta"] = 0.1 * jax.random.normal(k[2], (inner_nc,), jnp.float32)
    up_in = inner_nc if innermost else 2 * inner_nc
    p["up_w"] = 0.1 * jax.random.normal(k[3], (up_in, outer_nc, K, K), jnp.float32)
    if kind == "outermost":
        p["up_b"] = 0.1 * jax.random.normal(k[4], (outer_nc,), jnp.float32)
    else:
        p["up_gamma"] = 1.0 + 0.1 * jax.random.normal(k[5], (outer_nc,), jnp.float32)
        p["up_beta"] = 0.1 * jax.random.normal(k[6], (outer_nc,), jnp.float32)
    return p


def init_unet_params(key, input_nc, output_nc, num_downs, ngf):
    keys = list(jax.random.split(key, num_downs))
    block = _init_block(keys.pop(), ngf * 8, ngf * 8, innermost=True)
    for _ in range(num_downs - 5):
        block = _init_block(keys.pop(), ngf * 8, ngf * 8, submodule=block)
    block = _init_block(keys.pop(), ngf * 4, ngf * 8, submodule=block)
    block = _init_block(keys.pop(), ngf * 2, ngf * 4, submodule=block)
    block = _init_block(keys.pop(), ngf, ngf * 2, submodule=block)
    block = _init_block(keys.pop(), output_nc, ngf, input_nc=input_nc,
                        submodule=block, outermost=True)
    return block


# --------------------------- pure-JAX reference ----------------------------- #

def _ref_conv(h, w):
    return lax.conv_general_dilated(
        h, w, window_strides=(2, 2), padding=((1, 1), (1, 1)),
        dimension_numbers=("NCHW", "OIHW", "NCHW"),
        precision=lax.Precision.HIGHEST)


def _ref_convT(h, w):
    w_eq = jnp.transpose(w[:, :, ::-1, ::-1], (1, 0, 2, 3))
    return lax.conv_general_dilated(
        h, w_eq, window_strides=(1, 1), padding=((2, 2), (2, 2)),
        lhs_dilation=(2, 2), dimension_numbers=("NCHW", "OIHW", "NCHW"),
        precision=lax.Precision.HIGHEST)


def _ref_bn(t, gamma, beta):
    mean = jnp.mean(t, axis=(0, 2, 3), keepdims=True)
    var = jnp.mean((t - mean) ** 2, axis=(0, 2, 3), keepdims=True)
    y = (t - mean) / jnp.sqrt(var + EPS)
    return y * gamma.reshape(1, -1, 1, 1) + beta.reshape(1, -1, 1, 1)


def reference_forward(x_nchw, bp):
    kind = bp["kind"]
    if kind == "outermost":
        d = _ref_conv(x_nchw, bp["down_w"])
        s = reference_forward(d, bp["submodule"])
        t = _ref_convT(jnp.maximum(s, 0.0), bp["up_w"])
        t = t + bp["up_b"].reshape(1, -1, 1, 1)
        return jnp.tanh(t)
    h = jnp.where(x_nchw >= 0, x_nchw, 0.2 * x_nchw)
    d = _ref_conv(h, bp["down_w"])
    if kind == "middle":
        d = _ref_bn(d, bp["down_gamma"], bp["down_beta"])
        s = reference_forward(d, bp["submodule"])
    else:
        s = d
    t = _ref_convT(jnp.maximum(s, 0.0), bp["up_w"])
    t = _ref_bn(t, bp["up_gamma"], bp["up_beta"])
    return jnp.concatenate([x_nchw, t], axis=1)


# ---------------------------------- main ------------------------------------ #

if __name__ == "__main__":
    key = jax.random.PRNGKey(0)
    kx, kp = jax.random.split(key)

    # Small UnetGenerator: num_downs=5 needs spatial >= 32 (bottleneck 1x1).
    N, input_nc, output_nc, ngf, num_downs = 2, 3, 3, 8, 5
    H = W = 32

    x = jax.random.normal(kx, (N, input_nc, H, W), jnp.float32)
    params = init_unet_params(kp, input_nc, output_nc, num_downs, ngf)

    ref = reference_forward(x, params)

    # Strict numerical validation of the Pallas path (f32 compute dtype).
    fwd_f32 = jax.jit(lambda inp: unet_forward(inp, params,
                                               compute_dtype=jnp.float32))
    out_f32 = jax.block_until_ready(fwd_f32(x))
    assert out_f32.shape == (N, output_nc, H, W), out_f32.shape
    np.testing.assert_allclose(np.asarray(out_f32), np.asarray(ref),
                               atol=1e-2, rtol=1e-2)

    # Production path: bf16 MXU inputs with f32 accumulation.
    fwd_bf16 = jax.jit(lambda inp: unet_forward(inp, params,
                                                compute_dtype=jnp.bfloat16))
    out_bf16 = jax.block_until_ready(fwd_bf16(x))
    assert out_bf16.shape == (N, output_nc, H, W), out_bf16.shape
    assert bool(jnp.all(jnp.isfinite(out_bf16)))

    print("KERNEL_OK")
</pallas_src>

<mosaic_0001>
module attributes {stable_mosaic.version = 11 : i64} {
  func.func @_matmul_kernel(%arg0: i32, %arg1: memref<512x48xf32, #tpu.memory_space<vmem>>, %arg2: memref<48x128xf32, #tpu.memory_space<vmem>>, %arg3: memref<512x128xf32, #tpu.memory_space<vmem>>) attributes {dimension_semantics = [#tpu.dimension_semantics<parallel>], iteration_bounds = array<i64: 1>, scalar_prefetch = 0 : i64, scratch_operands = 0 : i64, tpu.core_type = #tpu.core_type<tc>, window_params = [{transform_indices = @transform_0, window_bounds = array<i64: 512, 48>}, {pipeline_mode = #tpu.pipeline_mode<synchronous>, transform_indices = @transform_1, window_bounds = array<i64: 48, 128>}, {transform_indices = @transform_2, window_bounds = array<i64: 512, 128>}]} {
    %c0 = arith.constant 0 : index
    %c0_0 = arith.constant 0 : index
    %0 = vector.load %arg1[%c0, %c0_0] : memref<512x48xf32, #tpu.memory_space<vmem>>, vector<512x48xf32>
    %c0_1 = arith.constant 0 : index
    %c0_2 = arith.constant 0 : index
    %1 = vector.load %arg2[%c0_1, %c0_2] : memref<48x128xf32, #tpu.memory_space<vmem>>, vector<48x128xf32>
    %cst = arith.constant dense<0.000000e+00> : vector<512x128xf32>
    %2 = tpu.matmul %0, %1, %cst {dimension_numbers = #tpu.dot_dimension_numbers<[1], [0], [0], [1], [0, 0, 1, 1], [], []>} : vector<512x48xf32>, vector<48x128xf32>, vector<512x128xf32> -> vector<512x128xf32>
    %c0_3 = arith.constant 0 : index
    %c0_4 = arith.constant 0 : index
    %3 = vector.load %arg3[%c0_3, %c0_4] : memref<512x128xf32, #tpu.memory_space<vmem>>, vector<512x128xf32>
    tpu.vector_store %arg3[%c0_3, %c0_4], %2 {strides = array<i32>} : memref<512x128xf32, #tpu.memory_space<vmem>>, vector<512x128xf32>,
    return
  }
  func.func @transform_0(%arg0: i32) -> (i32, i32) {
    %c0_i32 = arith.constant 0 : i32
    %c0_i32_0 = arith.constant 0 : i32
    return %arg0, %c0_i32 : i32, i32
  }
  func.func @transform_1(%arg0: i32) -> (i32, i32) {
    %c0_i32 = arith.constant 0 : i32
    %c0_i32_0 = arith.constant 0 : i32
    %c0_i32_1 = arith.constant 0 : i32
    return %c0_i32, %c0_i32_0 : i32, i32
  }
  func.func @transform_2(%arg0: i32) -> (i32, i32) {
    %c0_i32 = arith.constant 0 : i32
    %c0_i32_0 = arith.constant 0 : i32
    return %arg0, %c0_i32 : i32, i32
  }
}

module attributes {stable_mosaic.version = 11 : i64} {
  func.func @_matmul_kernel(%arg0: i32, %arg1: memref<128x128xf32, #tpu.memory_space<vmem>>, %arg2: memref<128x128xf32, #tpu.memory_space<vmem>>, %arg3: memref<128x128xf32, #tpu.memory_space<vmem>>) attributes {dimension_semantics = [#tpu.dimension_semantics<parallel>], iteration_bounds = array<i64: 1>, scalar_prefetch = 0 : i64, scratch_operands = 0 : i64, tpu.core_type = #tpu.core_type<tc>, window_params = [{transform_indices = @transform_0, window_bounds = array<i64: 128, 128>}, {pipeline_mode = #tpu.pipeline_mode<synchronous>, transform_indices = @transform_1, window_bounds = array<i64: 128, 128>}, {transform_indices = @transform_2, window_bounds = array<i64: 128, 128>}]} {
    %c0 = arith.constant 0 : index
    %c0_0 = arith.constant 0 : index
    %0 = vector.load %arg1[%c0, %c0_0] : memref<128x128xf32, #tpu.memory_space<vmem>>, vector<128x128xf32>
    %c0_1 = arith.constant 0 : index
    %c0_2 = arith.constant 0 : index
    %1 = vector.load %arg2[%c0_1, %c0_2] : memref<128x128xf32, #tpu.memory_space<vmem>>, vector<128x128xf32>
    %cst = arith.constant dense<0.000000e+00> : vector<128x128xf32>
    %2 = tpu.matmul %0, %1, %cst {dimension_numbers = #tpu.dot_dimension_numbers<[1], [0], [0], [1], [0, 0, 1, 1], [], []>} : vector<128x128xf32>, vector<128x128xf32>, vector<128x128xf32> -> vector<128x128xf32>
    %c0_3 = arith.constant 0 : index
    %c0_4 = arith.constant 0 : index
    %3 = vector.load %arg3[%c0_3, %c0_4] : memref<128x128xf32, #tpu.memory_space<vmem>>, vector<128x128xf32>
    tpu.vector_store %arg3[%c0_3, %c0_4], %2 {strides = array<i32>} : memref<128x128xf32, #tpu.memory_space<vmem>>, vector<128x128xf32>,
    return
  }
  func.func @transform_0(%arg0: i32) -> (i32, i32) {
    %c0_i32 = arith.constant 0 : i32
    %c0_i32_0 = arith.constant 0 : i32
    return %arg0, %c0_i32 : i32, i32
  }
  func.func @transform_1(%arg0: i32) -> (i32, i32) {
    %c0_i32 = arith.constant 0 : i32
    %c0_i32_0 = arith.constant 0 : i32
    %c0_i32_1 = arith.constant 0 : i32
    return %c0_i32, %c0_i32_0 : i32, i32
  }
  func.func @transform_2(%arg0: i32) -> (i32, i32) {
    %c0_i32 = arith.constant 0 : i32
    %c0_i32_0 = arith.constant 0 : i32
    return %arg0, %c0_i32 : i32, i32
  }
}

module attributes {stable_mosaic.version = 11 : i64} {
  func.func @_scale_shift_kernel(%arg0: i32, %arg1: memref<16x128xf32, #tpu.memory_space<vmem>>, %arg2: memref<1x128xf32, #tpu.memory_space<vmem>>, %arg3: memref<1x128xf32, #tpu.memory_space<vmem>>, %arg4: memref<16x128xf32, #tpu.memory_space<vmem>>) attributes {dimension_semantics = [#tpu.dimension_semantics<parallel>], iteration_bounds = array<i64: 1>, scalar_prefetch = 0 : i64, scratch_operands = 0 : i64, tpu.core_type = #tpu.core_type<tc>, window_params = [{transform_indices = @transform_0, window_bounds = array<i64: 16, 128>}, {pipeline_mode = #tpu.pipeline_mode<synchronous>, transform_indices = @transform_1, window_bounds = array<i64: 1, 128>}, {pipeline_mode = #tpu.pipeline_mode<synchronous>, transform_indices = @transform_2, window_bounds = array<i64: 1, 128>}, {transform_indices = @transform_3, window_bounds = array<i64: 16, 128>}]} {
    %c0 = arith.constant 0 : index
    %c0_0 = arith.constant 0 : index
    %0 = vector.load %arg1[%c0, %c0_0] : memref<16x128xf32, #tpu.memory_space<vmem>>, vector<16x128xf32>
    %c0_1 = arith.constant 0 : index
    %c0_2 = arith.constant 0 : index
    %1 = vector.load %arg2[%c0_1, %c0_2] : memref<1x128xf32, #tpu.memory_space<vmem>>, vector<1x128xf32>
    %2 = vector.broadcast %1 : vector<1x128xf32> to vector<16x128xf32>
    %3 = arith.mulf %0, %2 : vector<16x128xf32>
    %c0_3 = arith.constant 0 : index
    %c0_4 = arith.constant 0 : index
    %4 = vector.load %arg3[%c0_3, %c0_4] : memref<1x128xf32, #tpu.memory_space<vmem>>, vector<1x128xf32>
    %5 = vector.broadcast %4 : vector<1x128xf32> to vector<16x128xf32>
    %6 = arith.addf %3, %5 : vector<16x128xf32>
    %c0_5 = arith.constant 0 : index
    %c0_6 = arith.constant 0 : index
    %7 = vector.load %arg4[%c0_5, %c0_6] : memref<16x128xf32, #tpu.memory_space<vmem>>, vector<16x128xf32>
    tpu.vector_store %arg4[%c0_5, %c0_6], %6 {strides = array<i32>} : memref<16x128xf32, #tpu.memory_space<vmem>>, vector<16x128xf32>,
    return
  }
  func.func @transform_0(%arg0: i32) -> (i32, i32) {
    %c0_i32 = arith.constant 0 : i32
    %c0_i32_0 = arith.constant 0 : i32
    return %arg0, %c0_i32 : i32, i32
  }
  func.func @transform_1(%arg0: i32) -> (i32, i32) {
    %c0_i32 = arith.constant 0 : i32
    %c0_i32_0 = arith.constant 0 : i32
    %c0_i32_1 = arith.constant 0 : i32
    return %c0_i32, %c0_i32_0 : i32, i32
  }
  func.func @transform_2(%arg0: i32) -> (i32, i32) {
    %c0_i32 = arith.constant 0 : i32
    %c0_i32_0 = arith.constant 0 : i32
    %c0_i32_1 = arith.constant 0 : i32
    return %c0_i32, %c0_i32_0 : i32, i32
  }
  func.func @transform_3(%arg0: i32) -> (i32, i32) {
    %c0_i32 = arith.constant 0 : i32
    %c0_i32_0 = arith.constant 0 : i32
    return %arg0, %c0_i32 : i32, i32
  }
}

module attributes {stable_mosaic.version = 11 : i64} {
  func.func @_matmul_kernel(%arg0: i32, %arg1: memref<32x256xf32, #tpu.memory_space<vmem>>, %arg2: memref<256x128xf32, #tpu.memory_space<vmem>>, %arg3: memref<32x128xf32, #tpu.memory_space<vmem>>) attributes {dimension_semantics = [#tpu.dimension_semantics<parallel>], iteration_bounds = array<i64: 1>, scalar_prefetch = 0 : i64, scratch_operands = 0 : i64, tpu.core_type = #tpu.core_type<tc>, window_params = [{transform_indices = @transform_0, window_bounds = array<i64: 32, 256>}, {pipeline_mode = #tpu.pipeline_mode<synchronous>, transform_indices = @transform_1, window_bounds = array<i64: 256, 128>}, {transform_indices = @transform_2, window_bounds = array<i64: 32, 128>}]} {
    %c0 = arith.constant 0 : index
    %c0_0 = arith.constant 0 : index
    %0 = vector.load %arg1[%c0, %c0_0] : memref<32x256xf32, #tpu.memory_space<vmem>>, vector<32x256xf32>
    %c0_1 = arith.constant 0 : index
    %c0_2 = arith.constant 0 : index
    %1 = vector.load %arg2[%c0_1, %c0_2] : memref<256x128xf32, #tpu.memory_space<vmem>>, vector<256x128xf32>
    %cst = arith.constant dense<0.000000e+00> : vector<32x128xf32>
    %2 = tpu.matmul %0, %1, %cst {dimension_numbers = #tpu.dot_dimension_numbers<[1], [0], [0], [1], [0, 0, 1, 1], [], []>} : vector<32x256xf32>, vector<256x128xf32>, vector<32x128xf32> -> vector<32x128xf32>
    %c0_3 = arith.constant 0 : index
    %c0_4 = arith.constant 0 : index
    %3 = vector.load %arg3[%c0_3, %c0_4] : memref<32x128xf32, #tpu.memory_space<vmem>>, vector<32x128xf32>
    tpu.vector_store %arg3[%c0_3, %c0_4], %2 {strides = array<i32>} : memref<32x128xf32, #tpu.memory_space<vmem>>, vector<32x128xf32>,
    return
  }
  func.func @transform_0(%arg0: i32) -> (i32, i32) {
    %c0_i32 = arith.constant 0 : i32
    %c0_i32_0 = arith.constant 0 : i32
    return %arg0, %c0_i32 : i32, i32
  }
  func.func @transform_1(%arg0: i32) -> (i32, i32) {
    %c0_i32 = arith.constant 0 : i32
    %c0_i32_0 = arith.constant 0 : i32
    %c0_i32_1 = arith.constant 0 : i32
    return %c0_i32, %c0_i32_0 : i32, i32
  }
  func.func @transform_2(%arg0: i32) -> (i32, i32) {
    %c0_i32 = arith.constant 0 : i32
    %c0_i32_0 = arith.constant 0 : i32
    return %arg0, %c0_i32 : i32, i32
  }
}

module attributes {stable_mosaic.version = 11 : i64} {
  func.func @_scale_shift_kernel(%arg0: i32, %arg1: memref<8x128xf32, #tpu.memory_space<vmem>>, %arg2: memref<1x128xf32, #tpu.memory_space<vmem>>, %arg3: memref<1x128xf32, #tpu.memory_space<vmem>>, %arg4: memref<8x128xf32, #tpu.memory_space<vmem>>) attributes {dimension_semantics = [#tpu.dimension_semantics<parallel>], iteration_bounds = array<i64: 1>, scalar_prefetch = 0 : i64, scratch_operands = 0 : i64, tpu.core_type = #tpu.core_type<tc>, window_params = [{transform_indices = @transform_0, window_bounds = array<i64: 8, 128>}, {pipeline_mode = #tpu.pipeline_mode<synchronous>, transform_indices = @transform_1, window_bounds = array<i64: 1, 128>}, {pipeline_mode = #tpu.pipeline_mode<synchronous>, transform_indices = @transform_2, window_bounds = array<i64: 1, 128>}, {transform_indices = @transform_3, window_bounds = array<i64: 8, 128>}]} {
    %c0 = arith.constant 0 : index
    %c0_0 = arith.constant 0 : index
    %0 = vector.load %arg1[%c0, %c0_0] : memref<8x128xf32, #tpu.memory_space<vmem>>, vector<8x128xf32>
    %c0_1 = arith.constant 0 : index
    %c0_2 = arith.constant 0 : index
    %1 = vector.load %arg2[%c0_1, %c0_2] : memref<1x128xf32, #tpu.memory_space<vmem>>, vector<1x128xf32>
    %2 = vector.broadcast %1 : vector<1x128xf32> to vector<8x128xf32>
    %3 = arith.mulf %0, %2 : vector<8x128xf32>
    %c0_3 = arith.constant 0 : index
    %c0_4 = arith.constant 0 : index
    %4 = vector.load %arg3[%c0_3, %c0_4] : memref<1x128xf32, #tpu.memory_space<vmem>>, vector<1x128xf32>
    %5 = vector.broadcast %4 : vector<1x128xf32> to vector<8x128xf32>
    %6 = arith.addf %3, %5 : vector<8x128xf32>
    %c0_5 = arith.constant 0 : index
    %c0_6 = arith.constant 0 : index
    %7 = vector.load %arg4[%c0_5, %c0_6] : memref<8x128xf32, #tpu.memory_space<vmem>>, vector<8x128xf32>
    tpu.vector_store %arg4[%c0_5, %c0_6], %6 {strides = array<i32>} : memref<8x128xf32, #tpu.memory_space<vmem>>, vector<8x128xf32>,
    return
  }
  func.func @transform_0(%arg0: i32) -> (i32, i32) {
    %c0_i32 = arith.constant 0 : i32
    %c0_i32_0 = arith.constant 0 : i32
    return %arg0, %c0_i32 : i32, i32
  }
  func.func @transform_1(%arg0: i32) -> (i32, i32) {
    %c0_i32 = arith.constant 0 : i32
    %c0_i32_0 = arith.constant 0 : i32
    %c0_i32_1 = arith.constant 0 : i32
    return %c0_i32, %c0_i32_0 : i32, i32
  }
  func.func @transform_2(%arg0: i32) -> (i32, i32) {
    %c0_i32 = arith.constant 0 : i32
    %c0_i32_0 = arith.constant 0 : i32
    %c0_i32_1 = arith.constant 0 : i32
    return %c0_i32, %c0_i32_0 : i32, i32
  }
  func.func @transform_3(%arg0: i32) -> (i32, i32) {
    %c0_i32 = arith.constant 0 : i32
    %c0_i32_0 = arith.constant 0 : i32
    return %arg0, %c0_i32 : i32, i32
  }
}

module attributes {stable_mosaic.version = 11 : i64} {
  func.func @_matmul_kernel(%arg0: i32, %arg1: memref<8x512xf32, #tpu.memory_space<vmem>>, %arg2: memref<512x128xf32, #tpu.memory_space<vmem>>, %arg3: memref<8x128xf32, #tpu.memory_space<vmem>>) attributes {dimension_semantics = [#tpu.dimension_semantics<parallel>], iteration_bounds = array<i64: 1>, scalar_prefetch = 0 : i64, scratch_operands = 0 : i64, tpu.core_type = #tpu.core_type<tc>, window_params = [{transform_indices = @transform_0, window_bounds = array<i64: 8, 512>}, {pipeline_mode = #tpu.pipeline_mode<synchronous>, transform_indices = @transform_1, window_bounds = array<i64: 512, 128>}, {transform_indices = @transform_2, window_bounds = array<i64: 8, 128>}]} {
    %c0 = arith.constant 0 : index
    %c0_0 = arith.constant 0 : index
    %0 = vector.load %arg1[%c0, %c0_0] : memref<8x512xf32, #tpu.memory_space<vmem>>, vector<8x512xf32>
    %c0_1 = arith.constant 0 : index
    %c0_2 = arith.constant 0 : index
    %1 = vector.load %arg2[%c0_1, %c0_2] : memref<512x128xf32, #tpu.memory_space<vmem>>, vector<512x128xf32>
    %cst = arith.constant dense<0.000000e+00> : vector<8x128xf32>
    %2 = tpu.matmul %0, %1, %cst {dimension_numbers = #tpu.dot_dimension_numbers<[1], [0], [0], [1], [0, 0, 1, 1], [], []>} : vector<8x512xf32>, vector<512x128xf32>, vector<8x128xf32> -> vector<8x128xf32>
    %c0_3 = arith.constant 0 : index
    %c0_4 = arith.constant 0 : index
    %3 = vector.load %arg3[%c0_3, %c0_4] : memref<8x128xf32, #tpu.memory_space<vmem>>, vector<8x128xf32>
    tpu.vector_store %arg3[%c0_3, %c0_4], %2 {strides = array<i32>} : memref<8x128xf32, #tpu.memory_space<vmem>>, vector<8x128xf32>,
    return
  }
  func.func @transform_0(%arg0: i32) -> (i32, i32) {
    %c0_i32 = arith.constant 0 : i32
    %c0_i32_0 = arith.constant 0 : i32
    return %arg0, %c0_i32 : i32, i32
  }
  func.func @transform_1(%arg0: i32) -> (i32, i32) {
    %c0_i32 = arith.constant 0 : i32
    %c0_i32_0 = arith.constant 0 : i32
    %c0_i32_1 = arith.constant 0 : i32
    return %c0_i32, %c0_i32_0 : i32, i32
  }
  func.func @transform_2(%arg0: i32) -> (i32, i32) {
    %c0_i32 = arith.constant 0 : i32
    %c0_i32_0 = arith.constant 0 : i32
    return %arg0, %c0_i32 : i32, i32
  }
}

module attributes {stable_mosaic.version = 11 : i64} {
  func.func @_matmul_kernel(%arg0: i32, %arg1: memref<8x1024xf32, #tpu.memory_space<vmem>>, %arg2: memref<1024x128xf32, #tpu.memory_space<vmem>>, %arg3: memref<8x128xf32, #tpu.memory_space<vmem>>) attributes {dimension_semantics = [#tpu.dimension_semantics<parallel>], iteration_bounds = array<i64: 1>, scalar_prefetch = 0 : i64, scratch_operands = 0 : i64, tpu.core_type = #tpu.core_type<tc>, window_params = [{transform_indices = @transform_0, window_bounds = array<i64: 8, 1024>}, {pipeline_mode = #tpu.pipeline_mode<synchronous>, transform_indices = @transform_1, window_bounds = array<i64: 1024, 128>}, {transform_indices = @transform_2, window_bounds = array<i64: 8, 128>}]} {
    %c0 = arith.constant 0 : index
    %c0_0 = arith.constant 0 : index
    %0 = vector.load %arg1[%c0, %c0_0] : memref<8x1024xf32, #tpu.memory_space<vmem>>, vector<8x1024xf32>
    %c0_1 = arith.constant 0 : index
    %c0_2 = arith.constant 0 : index
    %1 = vector.load %arg2[%c0_1, %c0_2] : memref<1024x128xf32, #tpu.memory_space<vmem>>, vector<1024x128xf32>
    %cst = arith.constant dense<0.000000e+00> : vector<8x128xf32>
    %2 = tpu.matmul %0, %1, %cst {dimension_numbers = #tpu.dot_dimension_numbers<[1], [0], [0], [1], [0, 0, 1, 1], [], []>} : vector<8x1024xf32>, vector<1024x128xf32>, vector<8x128xf32> -> vector<8x128xf32>
    %c0_3 = arith.constant 0 : index
    %c0_4 = arith.constant 0 : index
    %3 = vector.load %arg3[%c0_3, %c0_4] : memref<8x128xf32, #tpu.memory_space<vmem>>, vector<8x128xf32>
    tpu.vector_store %arg3[%c0_3, %c0_4], %2 {strides = array<i32>} : memref<8x128xf32, #tpu.memory_space<vmem>>, vector<8x128xf32>,
    return
  }
  func.func @transform_0(%arg0: i32) -> (i32, i32) {
    %c0_i32 = arith.constant 0 : i32
    %c0_i32_0 = arith.constant 0 : i32
    return %arg0, %c0_i32 : i32, i32
  }
  func.func @transform_1(%arg0: i32) -> (i32, i32) {
    %c0_i32 = arith.constant 0 : i32
    %c0_i32_0 = arith.constant 0 : i32
    %c0_i32_1 = arith.constant 0 : i32
    return %c0_i32, %c0_i32_0 : i32, i32
  }
  func.func @transform_2(%arg0: i32) -> (i32, i32) {
    %c0_i32 = arith.constant 0 : i32
    %c0_i32_0 = arith.constant 0 : i32
    return %arg0, %c0_i32 : i32, i32
  }
}

module attributes {stable_mosaic.version = 11 : i64} {
  func.func @_relu_matmul_kernel(%arg0: i32, %arg1: memref<8x64xf32, #tpu.memory_space<vmem>>, %arg2: memref<64x1024xf32, #tpu.memory_space<vmem>>, %arg3: memref<8x1024xf32, #tpu.memory_space<vmem>>) attributes {dimension_semantics = [#tpu.dimension_semantics<parallel>], iteration_bounds = array<i64: 1>, scalar_prefetch = 0 : i64, scratch_operands = 0 : i64, tpu.core_type = #tpu.core_type<tc>, window_params = [{transform_indices = @transform_0, window_bounds = array<i64: 8, 64>}, {pipeline_mode = #tpu.pipeline_mode<synchronous>, transform_indices = @transform_1, window_bounds = array<i64: 64, 1024>}, {transform_indices = @transform_2, window_bounds = array<i64: 8, 1024>}]} {
    %c0 = arith.constant 0 : index
    %c0_0 = arith.constant 0 : index
    %0 = vector.load %arg1[%c0, %c0_0] : memref<8x64xf32, #tpu.memory_space<vmem>>, vector<8x64xf32>
    %cst = arith.constant 0.000000e+00 : f32
    %1 = vector.broadcast %cst : f32 to vector<8x64xf32>
    %2 = arith.maximumf %0, %1 : vector<8x64xf32>
    %c0_1 = arith.constant 0 : index
    %c0_2 = arith.constant 0 : index
    %3 = vector.load %arg2[%c0_1, %c0_2] : memref<64x1024xf32, #tpu.memory_space<vmem>>, vector<64x1024xf32>
    %cst_3 = arith.constant dense<0.000000e+00> : vector<8x1024xf32>
    %4 = tpu.matmul %2, %3, %cst_3 {dimension_numbers = #tpu.dot_dimension_numbers<[1], [0], [0], [1], [0, 0, 1, 1], [], []>} : vector<8x64xf32>, vector<64x1024xf32>, vector<8x1024xf32> -> vector<8x1024xf32>
    %c0_4 = arith.constant 0 : index
    %c0_5 = arith.constant 0 : index
    %5 = vector.load %arg3[%c0_4, %c0_5] : memref<8x1024xf32, #tpu.memory_space<vmem>>, vector<8x1024xf32>
    tpu.vector_store %arg3[%c0_4, %c0_5], %4 {strides = array<i32>} : memref<8x1024xf32, #tpu.memory_space<vmem>>, vector<8x1024xf32>,
    return
  }
  func.func @transform_0(%arg0: i32) -> (i32, i32) {
    %c0_i32 = arith.constant 0 : i32
    %c0_i32_0 = arith.constant 0 : i32
    return %arg0, %c0_i32 : i32, i32
  }
  func.func @transform_1(%arg0: i32) -> (i32, i32) {
    %c0_i32 = arith.constant 0 : i32
    %c0_i32_0 = arith.constant 0 : i32
    %c0_i32_1 = arith.constant 0 : i32
    return %c0_i32, %c0_i32_0 : i32, i32
  }
  func.func @transform_2(%arg0: i32) -> (i32, i32) {
    %c0_i32 = arith.constant 0 : i32
    %c0_i32_0 = arith.constant 0 : i32
    return %arg0, %c0_i32 : i32, i32
  }
}

module attributes {stable_mosaic.version = 11 : i64} {
  func.func @_relu_matmul_kernel(%arg0: i32, %arg1: memref<8x128xf32, #tpu.memory_space<vmem>>, %arg2: memref<128x512xf32, #tpu.memory_space<vmem>>, %arg3: memref<8x512xf32, #tpu.memory_space<vmem>>) attributes {dimension_semantics = [#tpu.dimension_semantics<parallel>], iteration_bounds = array<i64: 1>, scalar_prefetch = 0 : i64, scratch_operands = 0 : i64, tpu.core_type = #tpu.core_type<tc>, window_params = [{transform_indices = @transform_0, window_bounds = array<i64: 8, 128>}, {pipeline_mode = #tpu.pipeline_mode<synchronous>, transform_indices = @transform_1, window_bounds = array<i64: 128, 512>}, {transform_indices = @transform_2, window_bounds = array<i64: 8, 512>}]} {
    %c0 = arith.constant 0 : index
    %c0_0 = arith.constant 0 : index
    %0 = vector.load %arg1[%c0, %c0_0] : memref<8x128xf32, #tpu.memory_space<vmem>>, vector<8x128xf32>
    %cst = arith.constant 0.000000e+00 : f32
    %1 = vector.broadcast %cst : f32 to vector<8x128xf32>
    %2 = arith.maximumf %0, %1 : vector<8x128xf32>
    %c0_1 = arith.constant 0 : index
    %c0_2 = arith.constant 0 : index
    %3 = vector.load %arg2[%c0_1, %c0_2] : memref<128x512xf32, #tpu.memory_space<vmem>>, vector<128x512xf32>
    %cst_3 = arith.constant dense<0.000000e+00> : vector<8x512xf32>
    %4 = tpu.matmul %2, %3, %cst_3 {dimension_numbers = #tpu.dot_dimension_numbers<[1], [0], [0], [1], [0, 0, 1, 1], [], []>} : vector<8x128xf32>, vector<128x512xf32>, vector<8x512xf32> -> vector<8x512xf32>
    %c0_4 = arith.constant 0 : index
    %c0_5 = arith.constant 0 : index
    %5 = vector.load %arg3[%c0_4, %c0_5] : memref<8x512xf32, #tpu.memory_space<vmem>>, vector<8x512xf32>
    tpu.vector_store %arg3[%c0_4, %c0_5], %4 {strides = array<i32>} : memref<8x512xf32, #tpu.memory_space<vmem>>, vector<8x512xf32>,
    return
  }
  func.func @transform_0(%arg0: i32) -> (i32, i32) {
    %c0_i32 = arith.constant 0 : i32
    %c0_i32_0 = arith.constant 0 : i32
    return %arg0, %c0_i32 : i32, i32
  }
  func.func @transform_1(%arg0: i32) -> (i32, i32) {
    %c0_i32 = arith.constant 0 : i32
    %c0_i32_0 = arith.constant 0 : i32
    %c0_i32_1 = arith.constant 0 : i32
    return %c0_i32, %c0_i32_0 : i32, i32
  }
  func.func @transform_2(%arg0: i32) -> (i32, i32) {
    %c0_i32 = arith.constant 0 : i32
    %c0_i32_0 = arith.constant 0 : i32
    return %arg0, %c0_i32 : i32, i32
  }
}

module attributes {stable_mosaic.version = 11 : i64} {
  func.func @_relu_matmul_kernel(%arg0: i32, %arg1: memref<32x64xf32, #tpu.memory_space<vmem>>, %arg2: memref<64x256xf32, #tpu.memory_space<vmem>>, %arg3: memref<32x256xf32, #tpu.memory_space<vmem>>) attributes {dimension_semantics = [#tpu.dimension_semantics<parallel>], iteration_bounds = array<i64: 1>, scalar_prefetch = 0 : i64, scratch_operands = 0 : i64, tpu.core_type = #tpu.core_type<tc>, window_params = [{transform_indices = @transform_0, window_bounds = array<i64: 32, 64>}, {pipeline_mode = #tpu.pipeline_mode<synchronous>, transform_indices = @transform_1, window_bounds = array<i64: 64, 256>}, {transform_indices = @transform_2, window_bounds = array<i64: 32, 256>}]} {
    %c0 = arith.constant 0 : index
    %c0_0 = arith.constant 0 : index
    %0 = vector.load %arg1[%c0, %c0_0] : memref<32x64xf32, #tpu.memory_space<vmem>>, vector<32x64xf32>
    %cst = arith.constant 0.000000e+00 : f32
    %1 = vector.broadcast %cst : f32 to vector<32x64xf32>
    %2 = arith.maximumf %0, %1 : vector<32x64xf32>
    %c0_1 = arith.constant 0 : index
    %c0_2 = arith.constant 0 : index
    %3 = vector.load %arg2[%c0_1, %c0_2] : memref<64x256xf32, #tpu.memory_space<vmem>>, vector<64x256xf32>
    %cst_3 = arith.constant dense<0.000000e+00> : vector<32x256xf32>
    %4 = tpu.matmul %2, %3, %cst_3 {dimension_numbers = #tpu.dot_dimension_numbers<[1], [0], [0], [1], [0, 0, 1, 1], [], []>} : vector<32x64xf32>, vector<64x256xf32>, vector<32x256xf32> -> vector<32x256xf32>
    %c0_4 = arith.constant 0 : index
    %c0_5 = arith.constant 0 : index
    %5 = vector.load %arg3[%c0_4, %c0_5] : memref<32x256xf32, #tpu.memory_space<vmem>>, vector<32x256xf32>
    tpu.vector_store %arg3[%c0_4, %c0_5], %4 {strides = array<i32>} : memref<32x256xf32, #tpu.memory_space<vmem>>, vector<32x256xf32>,
    return
  }
  func.func @transform_0(%arg0: i32) -> (i32, i32) {
    %c0_i32 = arith.constant 0 : i32
    %c0_i32_0 = arith.constant 0 : i32
    return %arg0, %c0_i32 : i32, i32
  }
  func.func @transform_1(%arg0: i32) -> (i32, i32) {
    %c0_i32 = arith.constant 0 : i32
    %c0_i32_0 = arith.constant 0 : i32
    %c0_i32_1 = arith.constant 0 : i32
    return %c0_i32, %c0_i32_0 : i32, i32
  }
  func.func @transform_2(%arg0: i32) -> (i32, i32) {
    %c0_i32 = arith.constant 0 : i32
    %c0_i32_0 = arith.constant 0 : i32
    return %arg0, %c0_i32 : i32, i32
  }
}

module attributes {stable_mosaic.version = 11 : i64} {
  func.func @_relu_matmul_kernel(%arg0: i32, %arg1: memref<128x32xf32, #tpu.memory_space<vmem>>, %arg2: memref<32x128xf32, #tpu.memory_space<vmem>>, %arg3: memref<128x128xf32, #tpu.memory_space<vmem>>) attributes {dimension_semantics = [#tpu.dimension_semantics<parallel>], iteration_bounds = array<i64: 1>, scalar_prefetch = 0 : i64, scratch_operands = 0 : i64, tpu.core_type = #tpu.core_type<tc>, window_params = [{transform_indices = @transform_0, window_bounds = array<i64: 128, 32>}, {pipeline_mode = #tpu.pipeline_mode<synchronous>, transform_indices = @transform_1, window_bounds = array<i64: 32, 128>}, {transform_indices = @transform_2, window_bounds = array<i64: 128, 128>}]} {
    %c0 = arith.constant 0 : index
    %c0_0 = arith.constant 0 : index
    %0 = vector.load %arg1[%c0, %c0_0] : memref<128x32xf32, #tpu.memory_space<vmem>>, vector<128x32xf32>
    %cst = arith.constant 0.000000e+00 : f32
    %1 = vector.broadcast %cst : f32 to vector<128x32xf32>
    %2 = arith.maximumf %0, %1 : vector<128x32xf32>
    %c0_1 = arith.constant 0 : index
    %c0_2 = arith.constant 0 : index
    %3 = vector.load %arg2[%c0_1, %c0_2] : memref<32x128xf32, #tpu.memory_space<vmem>>, vector<32x128xf32>
    %cst_3 = arith.constant dense<0.000000e+00> : vector<128x128xf32>
    %4 = tpu.matmul %2, %3, %cst_3 {dimension_numbers = #tpu.dot_dimension_numbers<[1], [0], [0], [1], [0, 0, 1, 1], [], []>} : vector<128x32xf32>, vector<32x128xf32>, vector<128x128xf32> -> vector<128x128xf32>
    %c0_4 = arith.constant 0 : index
    %c0_5 = arith.constant 0 : index
    %5 = vector.load %arg3[%c0_4, %c0_5] : memref<128x128xf32, #tpu.memory_space<vmem>>, vector<128x128xf32>
    tpu.vector_store %arg3[%c0_4, %c0_5], %4 {strides = array<i32>} : memref<128x128xf32, #tpu.memory_space<vmem>>, vector<128x128xf32>,
    return
  }
  func.func @transform_0(%arg0: i32) -> (i32, i32) {
    %c0_i32 = arith.constant 0 : i32
    %c0_i32_0 = arith.constant 0 : i32
    return %arg0, %c0_i32 : i32, i32
  }
  func.func @transform_1(%arg0: i32) -> (i32, i32) {
    %c0_i32 = arith.constant 0 : i32
    %c0_i32_0 = arith.constant 0 : i32
    %c0_i32_1 = arith.constant 0 : i32
    return %c0_i32, %c0_i32_0 : i32, i32
  }
  func.func @transform_2(%arg0: i32) -> (i32, i32) {
    %c0_i32 = arith.constant 0 : i32
    %c0_i32_0 = arith.constant 0 : i32
    return %arg0, %c0_i32 : i32, i32
  }
}

module attributes {stable_mosaic.version = 11 : i64} {
  func.func @_scale_shift_kernel(%arg0: i32, %arg1: memref<32x128xf32, #tpu.memory_space<vmem>>, %arg2: memref<1x128xf32, #tpu.memory_space<vmem>>, %arg3: memref<1x128xf32, #tpu.memory_space<vmem>>, %arg4: memref<32x128xf32, #tpu.memory_space<vmem>>) attributes {dimension_semantics = [#tpu.dimension_semantics<parallel>], iteration_bounds = array<i64: 1>, scalar_prefetch = 0 : i64, scratch_operands = 0 : i64, tpu.core_type = #tpu.core_type<tc>, window_params = [{transform_indices = @transform_0, window_bounds = array<i64: 32, 128>}, {pipeline_mode = #tpu.pipeline_mode<synchronous>, transform_indices = @transform_1, window_bounds = array<i64: 1, 128>}, {pipeline_mode = #tpu.pipeline_mode<synchronous>, transform_indices = @transform_2, window_bounds = array<i64: 1, 128>}, {transform_indices = @transform_3, window_bounds = array<i64: 32, 128>}]} {
    %c0 = arith.constant 0 : index
    %c0_0 = arith.constant 0 : index
    %0 = vector.load %arg1[%c0, %c0_0] : memref<32x128xf32, #tpu.memory_space<vmem>>, vector<32x128xf32>
    %c0_1 = arith.constant 0 : index
    %c0_2 = arith.constant 0 : index
    %1 = vector.load %arg2[%c0_1, %c0_2] : memref<1x128xf32, #tpu.memory_space<vmem>>, vector<1x128xf32>
    %2 = vector.broadcast %1 : vector<1x128xf32> to vector<32x128xf32>
    %3 = arith.mulf %0, %2 : vector<32x128xf32>
    %c0_3 = arith.constant 0 : index
    %c0_4 = arith.constant 0 : index
    %4 = vector.load %arg3[%c0_3, %c0_4] : memref<1x128xf32, #tpu.memory_space<vmem>>, vector<1x128xf32>
    %5 = vector.broadcast %4 : vector<1x128xf32> to vector<32x128xf32>
    %6 = arith.addf %3, %5 : vector<32x128xf32>
    %c0_5 = arith.constant 0 : index
    %c0_6 = arith.constant 0 : index
    %7 = vector.load %arg4[%c0_5, %c0_6] : memref<32x128xf32, #tpu.memory_space<vmem>>, vector<32x128xf32>
    tpu.vector_store %arg4[%c0_5, %c0_6], %6 {strides = array<i32>} : memref<32x128xf32, #tpu.memory_space<vmem>>, vector<32x128xf32>,
    return
  }
  func.func @transform_0(%arg0: i32) -> (i32, i32) {
    %c0_i32 = arith.constant 0 : i32
    %c0_i32_0 = arith.constant 0 : i32
    return %arg0, %c0_i32 : i32, i32
  }
  func.func @transform_1(%arg0: i32) -> (i32, i32) {
    %c0_i32 = arith.constant 0 : i32
    %c0_i32_0 = arith.constant 0 : i32
    %c0_i32_1 = arith.constant 0 : i32
    return %c0_i32, %c0_i32_0 : i32, i32
  }
  func.func @transform_2(%arg0: i32) -> (i32, i32) {
    %c0_i32 = arith.constant 0 : i32
    %c0_i32_0 = arith.constant 0 : i32
    %c0_i32_1 = arith.constant 0 : i32
    return %c0_i32, %c0_i32_0 : i32, i32
  }
  func.func @transform_3(%arg0: i32) -> (i32, i32) {
    %c0_i32 = arith.constant 0 : i32
    %c0_i32_0 = arith.constant 0 : i32
    return %arg0, %c0_i32 : i32, i32
  }
}

module attributes {stable_mosaic.version = 11 : i64} {
  func.func @_relu_matmul_kernel(%arg0: i32, %arg1: memref<512x16xf32, #tpu.memory_space<vmem>>, %arg2: memref<16x128xf32, #tpu.memory_space<vmem>>, %arg3: memref<512x128xf32, #tpu.memory_space<vmem>>) attributes {dimension_semantics = [#tpu.dimension_semantics<parallel>], iteration_bounds = array<i64: 1>, scalar_prefetch = 0 : i64, scratch_operands = 0 : i64, tpu.core_type = #tpu.core_type<tc>, window_params = [{transform_indices = @transform_0, window_bounds = array<i64: 512, 16>}, {pipeline_mode = #tpu.pipeline_mode<synchronous>, transform_indices = @transform_1, window_bounds = array<i64: 16, 128>}, {transform_indices = @transform_2, window_bounds = array<i64: 512, 128>}]} {
    %c0 = arith.constant 0 : index
    %c0_0 = arith.constant 0 : index
    %0 = vector.load %arg1[%c0, %c0_0] : memref<512x16xf32, #tpu.memory_space<vmem>>, vector<512x16xf32>
    %cst = arith.constant 0.000000e+00 : f32
    %1 = vector.broadcast %cst : f32 to vector<512x16xf32>
    %2 = arith.maximumf %0, %1 : vector<512x16xf32>
    %c0_1 = arith.constant 0 : index
    %c0_2 = arith.constant 0 : index
    %3 = vector.load %arg2[%c0_1, %c0_2] : memref<16x128xf32, #tpu.memory_space<vmem>>, vector<16x128xf32>
    %cst_3 = arith.constant dense<0.000000e+00> : vector<512x128xf32>
    %4 = tpu.matmul %2, %3, %cst_3 {dimension_numbers = #tpu.dot_dimension_numbers<[1], [0], [0], [1], [0, 0, 1, 1], [], []>} : vector<512x16xf32>, vector<16x128xf32>, vector<512x128xf32> -> vector<512x128xf32>
    %c0_4 = arith.constant 0 : index
    %c0_5 = arith.constant 0 : index
    %5 = vector.load %arg3[%c0_4, %c0_5] : memref<512x128xf32, #tpu.memory_space<vmem>>, vector<512x128xf32>
    tpu.vector_store %arg3[%c0_4, %c0_5], %4 {strides = array<i32>} : memref<512x128xf32, #tpu.memory_space<vmem>>, vector<512x128xf32>,
    return
  }
  func.func @transform_0(%arg0: i32) -> (i32, i32) {
    %c0_i32 = arith.constant 0 : i32
    %c0_i32_0 = arith.constant 0 : i32
    return %arg0, %c0_i32 : i32, i32
  }
  func.func @transform_1(%arg0: i32) -> (i32, i32) {
    %c0_i32 = arith.constant 0 : i32
    %c0_i32_0 = arith.constant 0 : i32
    %c0_i32_1 = arith.constant 0 : i32
    return %c0_i32, %c0_i32_0 : i32, i32
  }
  func.func @transform_2(%arg0: i32) -> (i32, i32) {
    %c0_i32 = arith.constant 0 : i32
    %c0_i32_0 = arith.constant 0 : i32
    return %arg0, %c0_i32 : i32, i32
  }
}

module attributes {stable_mosaic.version = 11 : i64} {
  func.func @_bias_tanh_kernel(%arg0: i32, %arg1: memref<64x96xf32, #tpu.memory_space<vmem>>, %arg2: memref<1x96xf32, #tpu.memory_space<vmem>>, %arg3: memref<64x96xf32, #tpu.memory_space<vmem>>) attributes {dimension_semantics = [#tpu.dimension_semantics<parallel>], iteration_bounds = array<i64: 1>, scalar_prefetch = 0 : i64, scratch_operands = 0 : i64, tpu.core_type = #tpu.core_type<tc>, window_params = [{transform_indices = @transform_0, window_bounds = array<i64: 64, 96>}, {pipeline_mode = #tpu.pipeline_mode<synchronous>, transform_indices = @transform_1, window_bounds = array<i64: 1, 96>}, {transform_indices = @transform_2, window_bounds = array<i64: 64, 96>}]} {
    %c0 = arith.constant 0 : index
    %c0_0 = arith.constant 0 : index
    %0 = vector.load %arg1[%c0, %c0_0] : memref<64x96xf32, #tpu.memory_space<vmem>>, vector<64x96xf32>
    %c0_1 = arith.constant 0 : index
    %c0_2 = arith.constant 0 : index
    %1 = vector.load %arg2[%c0_1, %c0_2] : memref<1x96xf32, #tpu.memory_space<vmem>>, vector<1x96xf32>
    %2 = vector.broadcast %1 : vector<1x96xf32> to vector<64x96xf32>
    %3 = arith.addf %0, %2 : vector<64x96xf32>
    %4 = math.tanh %3 : vector<64x96xf32>
    %c0_3 = arith.constant 0 : index
    %c0_4 = arith.constant 0 : index
    %5 = vector.load %arg3[%c0_3, %c0_4] : memref<64x96xf32, #tpu.memory_space<vmem>>, vector<64x96xf32>
    tpu.vector_store %arg3[%c0_3, %c0_4], %4 {strides = array<i32>} : memref<64x96xf32, #tpu.memory_space<vmem>>, vector<64x96xf32>,
    return
  }
  func.func @transform_0(%arg0: i32) -> (i32, i32) {
    %c0_i32 = arith.constant 0 : i32
    %c0_i32_0 = arith.constant 0 : i32
    return %arg0, %c0_i32 : i32, i32
  }
  func.func @transform_1(%arg0: i32) -> (i32, i32) {
    %c0_i32 = arith.constant 0 : i32
    %c0_i32_0 = arith.constant 0 : i32
    %c0_i32_1 = arith.constant 0 : i32
    return %c0_i32, %c0_i32_0 : i32, i32
  }
  func.func @transform_2(%arg0: i32) -> (i32, i32) {
    %c0_i32 = arith.constant 0 : i32
    %c0_i32_0 = arith.constant 0 : i32
    return %arg0, %c0_i32 : i32, i32
  }
}

</mosaic_0001>

<llo_original>
// kernel: _lambda_.18
$region0: #{_lambda_.18}
  #allocation0 [shape = 'u32[]', space=smem, size = 0x4, offset = 0x4, fixed_abs, tag = 'smem constant byte address 0x4 - core index']
  #allocation1 [shape = 'u32[144,128]{1,0:T(1,128)}', space=vmem, size = 0x12000, scoped, tag = 'internal scratch']
  %s0 = inlined_call_operand.vmem [shape: f32[512,48], index: 0, kind: input, shape index: {}]
  %s1 = inlined_call_operand.vmem [shape: f32[48,128], index: 1, kind: input, shape index: {}]
  %s2 = inlined_call_operand.vmem [shape: f32[512,128], index: 2, kind: output, shape index: {}]
  %s3 = sld [smem:[#allocation0]]
  $region18: #{_lambda_.18} parent=0
    _
  %s5 = ssub.s32 1, %s3
  %s6 = scalar_select 0, %s5, %s3
  // Predicated region
  $region2: #{_lambda_.18} parent=0 // pred_check
    _
  $region3: #{_lambda_.18} parent=0 // pred_check_branch
    %8 = sbr.rel (0) target = $region5
  $region4: #{_lambda_.18} parent=0 // pred_region
    _
  $region5: #{_lambda_.18} parent=0 // pred_fallthru
    _
  // Predicated region
  $region6: #{_lambda_.18} parent=0 // pred_check
    _
  $region7: #{_lambda_.18} parent=0 // pred_check_branch
    %10 = sbr.rel (0) target = $region9
  $region8: #{_lambda_.18} parent=0 // pred_region
    _
  $region9: #{_lambda_.18} parent=0 // pred_fallthru
    _
  %v11 = vld [vmem:[%s0] sm:$0xff]
  %v12 = vld [vmem:[%s0 + $0x8] sm:$0xff]
  %v13 = vld [vmem:[%s0 + $0x10] sm:$0xff]
  %v14 = vld [vmem:[%s0 + $0x18] sm:$0xff]
  %v15 = vld [vmem:[%s0 + $0x20] sm:$0xff]
  %v16 = vld [vmem:[%s0 + $0x28] sm:$0xff]
  %v17 = vld [vmem:[%s0 + $0x30] sm:$0xff]
  %v18 = vld [vmem:[%s0 + $0x38] sm:$0xff]
  %v19 = vld [vmem:[%s0 + $0x40] sm:$0xff]
  %v20 = vld [vmem:[%s0 + $0x48] sm:$0xff]
  %v21 = vld [vmem:[%s0 + $0x50] sm:$0xff]
  %v22 = vld [vmem:[%s0 + $0x58] sm:$0xff]
  %v23 = vld [vmem:[%s0 + $0x60] sm:$0xff]
  %v24 = vld [vmem:[%s0 + $0x68] sm:$0xff]
  %v25 = vld [vmem:[%s0 + $0x70] sm:$0xff]
  %v26 = vld [vmem:[%s0 + $0x78] sm:$0xff]
  %v27 = vld [vmem:[%s0 + $0x80] sm:$0xff]
  %v28 = vld [vmem:[%s0 + $0x88] sm:$0xff]
  %v29 = vld [vmem:[%s0 + $0x90] sm:$0xff]
  %v30 = vld [vmem:[%s0 + $0x98] sm:$0xff]
  %v31 = vld [vmem:[%s0 + $0xa0] sm:$0xff]
  %v32 = vld [vmem:[%s0 + $0xa8] sm:$0xff]
  %v33 = vld [vmem:[%s0 + $0xb0] sm:$0xff]
  %v34 = vld [vmem:[%s0 + $0xb8] sm:$0xff]
  %v35 = vld [vmem:[%s0 + $0xc0] sm:$0xff]
  %v36 = vld [vmem:[%s0 + $0xc8] sm:$0xff]
  %v37 = vld [vmem:[%s0 + $0xd0] sm:$0xff]
  %v38 = vld [vmem:[%s0 + $0xd8] sm:$0xff]
  %v39 = vld [vmem:[%s0 + $0xe0] sm:$0xff]
  %v40 = vld [vmem:[%s0 + $0xe8] sm:$0xff]
  %v41 = vld [vmem:[%s0 + $0xf0] sm:$0xff]
  %v42 = vld [vmem:[%s0 + $0xf8] sm:$0xff]
  %v43 = vld [vmem:[%s0 + $0x100] sm:$0xff]
  %v44 = vld [vmem:[%s0 + $0x108] sm:$0xff]
  %v45 = vld [vmem:[%s0 + $0x110] sm:$0xff]
  %v46 = vld [vmem:[%s0 + $0x118] sm:$0xff]
  %v47 = vld [vmem:[%s0 + $0x120] sm:$0xff]
  %v48 = vld [vmem:[%s0 + $0x128] sm:$0xff]
  %v49 = vld [vmem:[%s0 + $0x130] sm:$0xff]
  %v50 = vld [vmem:[%s0 + $0x138] sm:$0xff]
  %v51 = vld [vmem:[%s0 + $0x140] sm:$0xff]
  %v52 = vld [vmem:[%s0 + $0x148] sm:$0xff]
  %v53 = vld [vmem:[%s0 + $0x150] sm:$0xff]
  %v54 = vld [vmem:[%s0 + $0x158] sm:$0xff]
  %v55 = vld [vmem:[%s0 + $0x160] sm:$0xff]
  %v56 = vld [vmem:[%s0 + $0x168] sm:$0xff]
  %v57 = vld [vmem:[%s0 + $0x170] sm:$0xff]
  %v58 = vld [vmem:[%s0 + $0x178] sm:$0xff]
  %v59 = vld [vmem:[%s0 + $0x180] sm:$0xff]
  %v60 = vld [vmem:[%s0 + $0x188] sm:$0xff]
  %v61 = vld [vmem:[%s0 + $0x190] sm:$0xff]
  %v62 = vld [vmem:[%s0 + $0x198] sm:$0xff]
  %v63 = vld [vmem:[%s0 + $0x1a0] sm:$0xff]
  %v64 = vld [vmem:[%s0 + $0x1a8] sm:$0xff]
  %v65 = vld [vmem:[%s0 + $0x1b0] sm:$0xff]
  %v66 = vld [vmem:[%s0 + $0x1b8] sm:$0xff]
  %v67 = vld [vmem:[%s0 + $0x1c0] sm:$0xff]
  %v68 = vld [vmem:[%s0 + $0x1c8] sm:$0xff]
  %v69 = vld [vmem:[%s0 + $0x1d0] sm:$0xff]
  %v70 = vld [vmem:[%s0 + $0x1d8] sm:$0xff]
  %v71 = vld [vmem:[%s0 + $0x1e0] sm:$0xff]
  %v72 = vld [vmem:[%s0 + $0x1e8] sm:$0xff]
  %v73 = vld [vmem:[%s0 + $0x1f0] sm:$0xff]
  %v74 = vld [vmem:[%s0 + $0x1f8] sm:$0xff]
  %v75 = vld [vmem:[%s1] sm:$0xff]
  %v76 = vld [vmem:[%s1 + $0x8] sm:$0xff]
  %v77 = vld [vmem:[%s1 + $0x10] sm:$0xff]
  %v78 = vld [vmem:[%s1 + $0x18] sm:$0xff]
  %v79 = vld [vmem:[%s1 + $0x20] sm:$0xff]
  %v80 = vld [vmem:[%s1 + $0x28] sm:$0xff]
  %vm81 = vcmask 392192
  %v83 = vsel %vm81, %v11, 0
  %v86 = vsel %vm81, %v12, 0
  %v89 = vsel %vm81, %v13, 0
  %v92 = vsel %vm81, %v14, 0
  %v95 = vsel %vm81, %v15, 0
  %v98 = vsel %vm81, %v16, 0
  %v101 = vsel %vm81, %v17, 0
  %v104 = vsel %vm81, %v18, 0
  %v107 = vsel %vm81, %v19, 0
  %v110 = vsel %vm81, %v20, 0
  %v113 = vsel %vm81, %v21, 0
  %v116 = vsel %vm81, %v22, 0
  %v119 = vsel %vm81, %v23, 0
  %v122 = vsel %vm81, %v24, 0
  %v125 = vsel %vm81, %v25, 0
  %v128 = vsel %vm81, %v26, 0
  %v131 = vsel %vm81, %v27, 0
  %v134 = vsel %vm81, %v28, 0
  %v137 = vsel %vm81, %v29, 0
  %v140 = vsel %vm81, %v30, 0
  %v143 = vsel %vm81, %v31, 0
  %v146 = vsel %vm81, %v32, 0
  %v149 = vsel %vm81, %v33, 0
  %v152 = vsel %vm81, %v34, 0
  %v155 = vsel %vm81, %v35, 0
  %v158 = vsel %vm81, %v36, 0
  %v161 = vsel %vm81, %v37, 0
  %v164 = vsel %vm81, %v38, 0
  %v167 = vsel %vm81, %v39, 0
  %v170 = vsel %vm81, %v40, 0
  %v173 = vsel %vm81, %v41, 0
  %v176 = vsel %vm81, %v42, 0
  %v179 = vsel %vm81, %v43, 0
  %v182 = vsel %vm81, %v44, 0
  %v185 = vsel %vm81, %v45, 0
  %v188 = vsel %vm81, %v46, 0
  %v191 = vsel %vm81, %v47, 0
  %v194 = vsel %vm81, %v48, 0
  %v197 = vsel %vm81, %v49, 0
  %v200 = vsel %vm81, %v50, 0
  %v203 = vsel %vm81, %v51, 0
  %v206 = vsel %vm81, %v52, 0
  %v209 = vsel %vm81, %v53, 0
  %v212 = vsel %vm81, %v54, 0
  %v215 = vsel %vm81, %v55, 0
  %v218 = vsel %vm81, %v56, 0
  %v221 = vsel %vm81, %v57, 0
  %v224 = vsel %vm81, %v58, 0
  %v227 = vsel %vm81, %v59, 0
  %v230 = vsel %vm81, %v60, 0
  %v233 = vsel %vm81, %v61, 0
  %v236 = vsel %vm81, %v62, 0
  %v239 = vsel %vm81, %v63, 0
  %v242 = vsel %vm81, %v64, 0
  %v245 = vsel %vm81, %v65, 0
  %v248 = vsel %vm81, %v66, 0
  %v251 = vsel %vm81, %v67, 0
  %v254 = vsel %vm81, %v68, 0
  %v257 = vsel %vm81, %v69, 0
  %v260 = vsel %vm81, %v70, 0
  %v263 = vsel %vm81, %v71, 0
  %v266 = vsel %vm81, %v72, 0
  %v269 = vsel %vm81, %v73, 0
  %v272 = vsel %vm81, %v74, 0
  %274 = vmatprep.subr.mxu0 0.0
  %275 = vmatpush1.msra.mxu0 %v75
  %276 = vmatprep.subr.mxu0 0.0
  %277 = vmatpush1.msra.mxu0 %v76
  %278 = vmatprep.subr.mxu0 0.0
  %279 = vmatpush1.msra.mxu0 %v77
  %280 = vmatprep.subr.mxu0 0.0
  %281 = vmatpush1.msra.mxu0 %v78
  %282 = vmatprep.subr.mxu0 0.0
  %283 = vmatpush1.msra.mxu0 %v79
  %284 = vmatprep.subr.mxu0 0.0
  %285 = vmatpush1.msra.mxu0 %v80
  %286 = vmatprep.subr.mxu0 0.0
  %287 = vmatpush1.msra.mxu0 0.0
  %288 = vmatprep.subr.mxu0 0.0
  %289 = vmatpush1.msra.mxu0 0.0
  %290 = vmatprep.subr.mxu0 0.0
  %291 = vmatpush1.msra.mxu0 0.0
  %292 = vmatprep.subr.mxu0 0.0
  %293 = vmatpush1.msra.mxu0 0.0
  %294 = vmatprep.subr.mxu0 0.0
  %295 = vmatpush1.msra.mxu0 0.0
  %296 = vmatprep.subr.mxu0 0.0
  %297 = vmatpush1.msra.mxu0 0.0
  %298 = vmatprep.subr.mxu0 0.0
  %299 = vmatpush1.msra.mxu0 0.0
  %300 = vmatprep.subr.mxu0 0.0
  %301 = vmatpush1.msra.mxu0 0.0
  %302 = vmatprep.subr.mxu0 0.0
  %303 = vmatpush1.msra.mxu0 0.0
  %304 = vmatprep.subr.mxu0 0.0
  %305 = vmatpush1.msra.mxu0 0.0
  %306 = vmatprep.subr.mxu0 0.0
  %307 = vmatpush1.msra.mxu0 0.0
  %308 = vmatprep.subr.mxu0 0.0
  %309 = vmatpush1.msra.mxu0 0.0
  %310 = vmatprep.subr.mxu0 0.0
  %311 = vmatpush1.msra.mxu0 0.0
  %312 = vmatprep.subr.mxu0 0.0
  %313 = vmatpush1.msra.mxu0 0.0
  %314 = vmatprep.subr.mxu0 0.0
  %315 = vmatpush1.msra.mxu0 0.0
  %316 = vmatprep.subr.mxu0 0.0
  %317 = vmatpush1.msra.mxu0 0.0
  %318 = vmatprep.subr.mxu0 0.0
  %319 = vmatpush1.msra.mxu0 0.0
  %320 = vmatprep.subr.mxu0 0.0
  %321 = vmatpush1.msra.mxu0 0.0
  %322 = vmatprep.subr.mxu0 0.0
  %323 = vmatpush1.msra.mxu0 0.0
  %324 = vmatprep.subr.mxu0 0.0
  %325 = vmatpush1.msra.mxu0 0.0
  %326 = vmatprep.subr.mxu0 0.0
  %327 = vmatpush1.msra.mxu0 0.0
  %328 = vmatprep.subr.mxu0 0.0
  %329 = vmatpush1.msra.mxu0 0.0
  %330 = vmatprep.subr.mxu0 0.0
  %331 = vmatpush1.msra.mxu0 0.0
  %332 = vmatprep.subr.mxu0 0.0
  %333 = vmatpush1.msra.mxu0 0.0
  %334 = vmatprep.subr.mxu0 0.0
  %335 = vmatpush1.msra.mxu0 0.0
  %336 = vmatprep.subr.mxu0 0.0
  %337 = vmatpush1.msra.mxu0 0.0
  %338 = vmatprep.mubr.f32.mxu0 0.0
  %339 = vmatmul.mubr.f32.gmra.mrb[0].mxu0 %v83
  %v340 = vpop.f32.mrb[0].mxu0
  %v341 = vadd.f32 0.0, %v340
  %v342 = vpop.f32.mrb[0].mxu0
  %343 = vmatprep.mubr.f32.mxu0 0.0
  %344 = vmatmul.mubr.f32.gmra.mrb[0].mxu0 %v86
  %v345 = vpop.f32.mrb[0].mxu0
  %v346 = vadd.f32 0.0, %v345
  %v347 = vpop.f32.mrb[0].mxu0
  %348 = vmatprep.mubr.f32.mxu0 0.0
  %349 = vmatmul.mubr.f32.gmra.mrb[0].mxu0 %v89
  %v350 = vpop.f32.mrb[0].mxu0
  %v351 = vadd.f32 0.0, %v350
  %v352 = vpop.f32.mrb[0].mxu0
  %353 = vmatprep.mubr.f32.mxu0 0.0
  %354 = vmatmul.mubr.f32.gmra.mrb[0].mxu0 %v92
  %v355 = vpop.f32.mrb[0].mxu0
  %v356 = vadd.f32 0.0, %v355
  %v357 = vpop.f32.mrb[0].mxu0
  %358 = vmatprep.mubr.f32.mxu0 0.0
  %359 = vmatmul.mubr.f32.gmra.mrb[0].mxu0 %v95
  %v360 = vpop.f32.mrb[0].mxu0
  %v361 = vadd.f32 0.0, %v360
  %v362 = vpop.f32.mrb[0].mxu0
  %363 = vmatprep.mubr.f32.mxu0 0.0
  %364 = vmatmul.mubr.f32.gmra.mrb[0].mxu0 %v98
  %v365 = vpop.f32.mrb[0].mxu0
  %v366 = vadd.f32 0.0, %v365
  %v367 = vpop.f32.mrb[0].mxu0
  %368 = vmatprep.mubr.f32.mxu0 0.0
  %369 = vmatmul.mubr.f32.gmra.mrb[0].mxu0 %v101
  %v370 = vpop.f32.mrb[0].mxu0
  %v371 = vadd.f32 0.0, %v370
  %v372 = vpop.f32.mrb[0].mxu0
  %373 = vmatprep.mubr.f32.mxu0 0.0
  %374 = vmatmul.mubr.f32.gmra.mrb[0].mxu0 %v104
  %v375 = vpop.f32.mrb[0].mxu0
  %v376 = vadd.f32 0.0, %v375
  %v377 = vpop.f32.mrb[0].mxu0
  %378 = vmatprep.mubr.f32.mxu0 0.0
  %379 = vmatmul.mubr.f32.gmra.mrb[0].mxu0 %v107
  %v380 = vpop.f32.mrb[0].mxu0
  %v381 = vadd.f32 0.0, %v380
  %v382 = vpop.f32.mrb[0].mxu0
  %383 = vmatprep.mubr.f32.mxu0 0.0
  %384 = vmatmul.mubr.f32.gmra.mrb[0].mxu0 %v110
  %v385 = vpop.f32.mrb[0].mxu0
  %v386 = vadd.f32 0.0, %v385
  %v387 = vpop.f32.mrb[0].mxu0
  %388 = vmatprep.mubr.f32.mxu0 0.0
  %389 = vmatmul.mubr.f32.gmra.mrb[0].mxu0 %v113
  %v390 = vpop.f32.mrb[0].mxu0
  %v391 = vadd.f32 0.0, %v390
  %v392 = vpop.f32.mrb[0].mxu0
  %393 = vmatprep.mubr.f32.mxu0 0.0
  %394 = vmatmul.mubr.f32.gmra.mrb[0].mxu0 %v116
  %v395 = vpop.f32.mrb[0].mxu0
  %v396 = vadd.f32 0.0, %v395
  %v397 = vpop.f32.mrb[0].mxu0
  %398 = vmatprep.mubr.f32.mxu0 0.0
  %399 = vmatmul.mubr.f32.gmra.mrb[0].mxu0 %v119
  %v400 = vpop.f32.mrb[0].mxu0
  %v401 = vadd.f32 0.0, %v400
  %v402 = vpop.f32.mrb[0].mxu0
  %403 = vmatprep.mubr.f32.mxu0 0.0
  %404 = vmatmul.mubr.f32.gmra.mrb[0].mxu0 %v122
  %v405 = vpop.f32.mrb[0].mxu0
  %v406 = vadd.f32 0.0, %v405
  %v407 = vpop.f32.mrb[0].mxu0
  %408 = vmatprep.mubr.f32.mxu0 0.0
  %409 = vmatmul.mubr.f32.gmra.mrb[0].mxu0 %v125
  %v410 = vpop.f32.mrb[0].mxu0
  %v411 = vadd.f32 0.0, %v410
  %v412 = vpop.f32.mrb[0].mxu0
  %413 = vmatprep.mubr.f32.mxu0 0.0
  %414 = vmatmul.mubr.f32.gmra.mrb[0].mxu0 %v128
  %v415 = vpop.f32.mrb[0].mxu0
  %v416 = vadd.f32 0.0, %v415
  %v417 = vpop.f32.mrb[0].mxu0
  %418 = vmatprep.mubr.f32.mxu0 0.0
  %419 = vmatmul.mubr.f32.gmra.mrb[0].mxu0 %v131
  %v420 = vpop.f32.mrb[0].mxu0
  %v421 = vadd.f32 0.0, %v420
  %v422 = vpop.f32.mrb[0].mxu0
  %423 = vmatprep.mubr.f32.mxu0 0.0
  %424 = vmatmul.mubr.f32.gmra.mrb[0].mxu0 %v134
  %v425 = vpop.f32.mrb[0].mxu0
  %v426 = vadd.f32 0.0, %v425
  %v427 = vpop.f32.mrb[0].mxu0
  %428 = vmatprep.mubr.f32.mxu0 0.0
  %429 = vmatmul.mubr.f32.gmra.mrb[0].mxu0 %v137
  %v430 = vpop.f32.mrb[0].mxu0
  %v431 = vadd.f32 0.0, %v430
  %v432 = vpop.f32.mrb[0].mxu0
  %433 = vmatprep.mubr.f32.mxu0 0.0
  %434 = vmatmul.mubr.f32.gmra.mrb[0].mxu0 %v140
  %v435 = vpop.f32.mrb[0].mxu0
  %v436 = vadd.f32 0.0, %v435
  %v437 = vpop.f32.mrb[0].mxu0
  %438 = vmatprep.mubr.f32.mxu0 0.0
  %439 = vmatmul.mubr.f32.gmra.mrb[0].mxu0 %v143
  %v440 = vpop.f32.mrb[0].mxu0
  %v441 = vadd.f32 0.0, %v440
  %v442 = vpop.f32.mrb[0].mxu0
  %443 = vmatprep.mubr.f32.mxu0 0.0
  %444 = vmatmul.mubr.f32.gmra.mrb[0].mxu0 %v146
  %v445 = vpop.f32.mrb[0].mxu0
  %v446 = vadd.f32 0.0, %v445
  %v447 = vpop.f32.mrb[0].mxu0
  %448 = vmatprep.mubr.f32.mxu0 0.0
  %449 = vmatmul.mubr.f32.gmra.mrb[0].mxu0 %v149
  %v450 = vpop.f32.mrb[0].mxu0
  %v451 = vadd.f32 0.0, %v450
  %v452 = vpop.f32.mrb[0].mxu0
  %453 = vmatprep.mubr.f32.mxu0 0.0
  %454 = vmatmul.mubr.f32.gmra.mrb[0].mxu0 %v152
  %v455 = vpop.f32.mrb[0].mxu0
  %v456 = vadd.f32 0.0, %v455
  %v457 = vpop.f32.mrb[0].mxu0
  %458 = vmatprep.mubr.f32.mxu0 0.0
  %459 = vmatmul.mubr.f32.gmra.mrb[0].mxu0 %v155
  %v460 = vpop.f32.mrb[0].mxu0
  %v461 = vadd.f32 0.0, %v460
  %v462 = vpop.f32.mrb[0].mxu0
  %463 = vmatprep.mubr.f32.mxu0 0.0
  %464 = vmatmul.mubr.f32.gmra.mrb[0].mxu0 %v158
  %v465 = vpop.f32.mrb[0].mxu0
  %v466 = vadd.f32 0.0, %v465
  %v467 = vpop.f32.mrb[0].mxu0
  %468 = vmatprep.mubr.f32.mxu0 0.0
  %469 = vmatmul.mubr.f32.gmra.mrb[0].mxu0 %v161
  %v470 = vpop.f32.mrb[0].mxu0
  %v471 = vadd.f32 0.0, %v470
  %v472 = vpop.f32.mrb[0].mxu0
  %473 = vmatprep.mubr.f32.mxu0 0.0
  %474 = vmatmul.mubr.f32.gmra.mrb[0].mxu0 %v164
  %v475 = vpop.f32.mrb[0].mxu0
  %v476 = vadd.f32 0.0, %v475
  %v477 = vpop.f32.mrb[0].mxu0
  %478 = vmatprep.mubr.f32.mxu0 0.0
  %479 = vmatmul.mubr.f32.gmra.mrb[0].mxu0 %v167
  %v480 = vpop.f32.mrb[0].mxu0
  %v481 = vadd.f32 0.0, %v480
  %v482 = vpop.f32.mrb[0].mxu0
  %483 = vmatprep.mubr.f32.mxu0 0.0
  %484 = vmatmul.mubr.f32.gmra.mrb[0].mxu0 %v170
  %v485 = vpop.f32.mrb[0].mxu0
  %v486 = vadd.f32 0.0, %v485
  %v487 = vpop.f32.mrb[0].mxu0
  %488 = vmatprep.mubr.f32.mxu0 0.0
  %489 = vmatmul.mubr.f32.gmra.mrb[0].mxu0 %v173
  %v490 = vpop.f32.mrb[0].mxu0
  %v491 = vadd.f32 0.0, %v490
  %v492 = vpop.f32.mrb[0].mxu0
  %493 = vmatprep.mubr.f32.mxu0 0.0
  %494 = vmatmul.mubr.f32.gmra.mrb[0].mxu0 %v176
  %v495 = vpop.f32.mrb[0].mxu0
  %v496 = vadd.f32 0.0, %v495
  %v497 = vpop.f32.mrb[0].mxu0
  %498 = vmatprep.mubr.f32.mxu0 0.0
  %499 = vmatmul.mubr.f32.gmra.mrb[0].mxu0 %v179
  %v500 = vpop.f32.mrb[0].mxu0
  %v501 = vadd.f32 0.0, %v500
  %v502 = vpop.f32.mrb[0].mxu0
  %503 = vmatprep.mubr.f32.mxu0 0.0
  %504 = vmatmul.mubr.f32.gmra.mrb[0].mxu0 %v182
  %v505 = vpop.f32.mrb[0].mxu0
  %v506 = vadd.f32 0.0, %v505
  %v507 = vpop.f32.mrb[0].mxu0
  %508 = vmatprep.mubr.f32.mxu0 0.0
  %509 = vmatmul.mubr.f32.gmra.mrb[0].mxu0 %v185
  %v510 = vpop.f32.mrb[0].mxu0
  %v511 = vadd.f32 0.0, %v510
  %v512 = vpop.f32.mrb[0].mxu0
  %513 = vmatprep.mubr.f32.mxu0 0.0
  %514 = vmatmul.mubr.f32.gmra.mrb[0].mxu0 %v188
  %v515 = vpop.f32.mrb[0].mxu0
  %v516 = vadd.f32 0.0, %v515
  %v517 = vpop.f32.mrb[0].mxu0
  %518 = vmatprep.mubr.f32.mxu0 0.0
  %519 = vmatmul.mubr.f32.gmra.mrb[0].mxu0 %v191
  %v520 = vpop.f32.mrb[0].mxu0
  %v521 = vadd.f32 0.0, %v520
  %v522 = vpop.f32.mrb[0].mxu0
  %523 = vmatprep.mubr.f32.mxu0 0.0
  %524 = vmatmul.mubr.f32.gmra.mrb[0].mxu0 %v194
  %v525 = vpop.f32.mrb[0].mxu0
  %v526 = vadd.f32 0.0, %v525
  %v527 = vpop.f32.mrb[0].mxu0
  %528 = vmatprep.mubr.f32.mxu0 0.0
  %529 = vmatmul.mubr.f32.gmra.mrb[0].mxu0 %v197
  %v530 = vpop.f32.mrb[0].mxu0
  %v531 = vadd.f32 0.0, %v530
  %v532 = vpop.f32.mrb[0].mxu0
  %533 = vmatprep.mubr.f32.mxu0 0.0
  %534 = vmatmul.mubr.f32.gmra.mrb[0].mxu0 %v200
  %v535 = vpop.f32.mrb[0].mxu0
  %v536 = vadd.f32 0.0, %v535
  %v537 = vpop.f32.mrb[0].mxu0
  %538 = vmatprep.mubr.f32.mxu0 0.0
  %539 = vmatmul.mubr.f32.gmra.mrb[0].mxu0 %v203
  %v540 = vpop.f32.mrb[0].mxu0
  %v541 = vadd.f32 0.0, %v540
  %v542 = vpop.f32.mrb[0].mxu0
  %543 = vmatprep.mubr.f32.mxu0 0.0
  %544 = vmatmul.mubr.f32.gmra.mrb[0].mxu0 %v206
  %v545 = vpop.f32.mrb[0].mxu0
  %v546 = vadd.f32 0.0, %v545
  %v547 = vpop.f32.mrb[0].mxu0
  %548 = vmatprep.mubr.f32.mxu0 0.0
  %549 = vmatmul.mubr.f32.gmra.mrb[0].mxu0 %v209
  %v550 = vpop.f32.mrb[0].mxu0
  %v551 = vadd.f32 0.0, %v550
  %v552 = vpop.f32.mrb[0].mxu0
  %553 = vmatprep.mubr.f32.mxu0 0.0
  %554 = vmatmul.mubr.f32.gmra.mrb[0].mxu0 %v212
  %v555 = vpop.f32.mrb[0].mxu0
  %v556 = vadd.f32 0.0, %v555
  %v557 = vpop.f32.mrb[0].mxu0
  %558 = vmatprep.mubr.f32.mxu0 0.0
  %559 = vmatmul.mubr.f32.gmra.mrb[0].mxu0 %v215
  %v560 = vpop.f32.mrb[0].mxu0
  %v561 = vadd.f32 0.0, %v560
  %v562 = vpop.f32.mrb[0].mxu0
  %563 = vmatprep.mubr.f32.mxu0 0.0
  %564 = vmatmul.mubr.f32.gmra.mrb[0].mxu0 %v218
  %v565 = vpop.f32.mrb[0].mxu0
  %v566 = vadd.f32 0.0, %v565
  %v567 = vpop.f32.mrb[0].mxu0
  %568 = vmatprep.mubr.f32.mxu0 0.0
  %569 = vmatmul.mubr.f32.gmra.mrb[0].mxu0 %v221
  %v570 = vpop.f32.mrb[0].mxu0
  %v571 = vadd.f32 0.0, %v570
  %v572 = vpop.f32.mrb[0].mxu0
  %573 = vmatprep.mubr.f32.mxu0 0.0
  %574 = vmatmul.mubr.f32.gmra.mrb[0].mxu0 %v224
  %v575 = vpop.f32.mrb[0].mxu0
  %v576 = vadd.f32 0.0, %v575
  %v577 = vpop.f32.mrb[0].mxu0
  %578 = vmatprep.mubr.f32.mxu0 0.0
  %579 = vmatmul.mubr.f32.gmra.mrb[0].mxu0 %v227
  %v580 = vpop.f32.mrb[0].mxu0
  %v581 = vadd.f32 0.0, %v580
  %v582 = vpop.f32.mrb[0].mxu0
  %583 = vmatprep.mubr.f32.mxu0 0.0
  %584 = vmatmul.mubr.f32.gmra.mrb[0].mxu0 %v230
  %v585 = vpop.f32.mrb[0].mxu0
  %v586 = vadd.f32 0.0, %v585
  %v587 = vpop.f32.mrb[0].mxu0
  %588 = vmatprep.mubr.f32.mxu0 0.0
  %589 = vmatmul.mubr.f32.gmra.mrb[0].mxu0 %v233
  %v590 = vpop.f32.mrb[0].mxu0
  %v591 = vadd.f32 0.0, %v590
  %v592 = vpop.f32.mrb[0].mxu0
  %593 = vmatprep.mubr.f32.mxu0 0.0
  %594 = vmatmul.mubr.f32.gmra.mrb[0].mxu0 %v236
  %v595 = vpop.f32.mrb[0].mxu0
  %v596 = vadd.f32 0.0, %v595
  %v597 = vpop.f32.mrb[0].mxu0
  %598 = vmatprep.mubr.f32.mxu0 0.0
  %599 = vmatmul.mubr.f32.gmra.mrb[0].mxu0 %v239
  %v600 = vpop.f32.mrb[0].mxu0
  %v601 = vadd.f32 0.0, %v600
  %v602 = vpop.f32.mrb[0].mxu0
  %603 = vmatprep.mubr.f32.mxu0 0.0
  %604 = vmatmul.mubr.f32.gmra.mrb[0].mxu0 %v242
  %v605 = vpop.f32.mrb[0].mxu0
  %v606 = vadd.f32 0.0, %v605
  %v607 = vpop.f32.mrb[0].mxu0
  %608 = vmatprep.mubr.f32.mxu0 0.0
  %609 = vmatmul.mubr.f32.gmra.mrb[0].mxu0 %v245
  %v610 = vpop.f32.mrb[0].mxu0
  %v611 = vadd.f32 0.0, %v610
  %v612 = vpop.f32.mrb[0].mxu0
  %613 = vmatprep.mubr.f32.mxu0 0.0
  %614 = vmatmul.mubr.f32.gmra.mrb[0].mxu0 %v248
  %v615 = vpop.f32.mrb[0].mxu0
  %v616 = vadd.f32 0.0, %v615
  %v617 = vpop.f32.mrb[0].mxu0
  %618 = vmatprep.mubr.f32.mxu0 0.0
  %619 = vmatmul.mubr.f32.gmra.mrb[0].mxu0 %v251
  %v620 = vpop.f32.mrb[0].mxu0
  %v621 = vadd.f32 0.0, %v620
  %v622 = vpop.f32.mrb[0].mxu0
  %623 = vmatprep.mubr.f32.mxu0 0.0
  %624 = vmatmul.mubr.f32.gmra.mrb[0].mxu0 %v254
  %v625 = vpop.f32.mrb[0].mxu0
  %v626 = vadd.f32 0.0, %v625
  %v627 = vpop.f32.mrb[0].mxu0
  %628 = vmatprep.mubr.f32.mxu0 0.0
  %629 = vmatmul.mubr.f32.gmra.mrb[0].mxu0 %v257
  %v630 = vpop.f32.mrb[0].mxu0
  %v631 = vadd.f32 0.0, %v630
  %v632 = vpop.f32.mrb[0].mxu0
  %633 = vmatprep.mubr.f32.mxu0 0.0
  %634 = vmatmul.mubr.f32.gmra.mrb[0].mxu0 %v260
  %v635 = vpop.f32.mrb[0].mxu0
  %v636 = vadd.f32 0.0, %v635
  %v637 = vpop.f32.mrb[0].mxu0
  %638 = vmatprep.mubr.f32.mxu0 0.0
  %639 = vmatmul.mubr.f32.gmra.mrb[0].mxu0 %v263
  %v640 = vpop.f32.mrb[0].mxu0
  %v641 = vadd.f32 0.0, %v640
  %v642 = vpop.f32.mrb[0].mxu0
  %643 = vmatprep.mubr.f32.mxu0 0.0
  %644 = vmatmul.mubr.f32.gmra.mrb[0].mxu0 %v266
  %v645 = vpop.f32.mrb[0].mxu0
  %v646 = vadd.f32 0.0, %v645
  %v647 = vpop.f32.mrb[0].mxu0
  %648 = vmatprep.mubr.f32.mxu0 0.0
  %649 = vmatmul.mubr.f32.gmra.mrb[0].mxu0 %v269
  %v650 = vpop.f32.mrb[0].mxu0
  %v651 = vadd.f32 0.0, %v650
  %v652 = vpop.f32.mrb[0].mxu0
  %653 = vmatprep.mubr.f32.mxu0 0.0
  %654 = vmatmul.mubr.f32.gmra.mrb[0].mxu0 %v272
  %v655 = vpop.f32.mrb[0].mxu0
  %v656 = vadd.f32 0.0, %v655
  %v657 = vpop.f32.mrb[0].mxu0
  %658 = vdwg.mxu0
  %659 = vst [vmem:[%s2] sm:$0xff] %v341
  %660 = vst [vmem:[%s2 + $0x8] sm:$0xff] %v346
  %661 = vst [vmem:[%s2 + $0x10] sm:$0xff] %v351
  %662 = vst [vmem:[%s2 + $0x18] sm:$0xff] %v356
  %663 = vst [vmem:[%s2 + $0x20] sm:$0xff] %v361
  %664 = vst [vmem:[%s2 + $0x28] sm:$0xff] %v366
  %665 = vst [vmem:[%s2 + $0x30] sm:$0xff] %v371
  %666 = vst [vmem:[%s2 + $0x38] sm:$0xff] %v376
  %667 = vst [vmem:[%s2 + $0x40] sm:$0xff] %v381
  %668 = vst [vmem:[%s2 + $0x48] sm:$0xff] %v386
  %669 = vst [vmem:[%s2 + $0x50] sm:$0xff] %v391
  %670 = vst [vmem:[%s2 + $0x58] sm:$0xff] %v396
  %671 = vst [vmem:[%s2 + $0x60] sm:$0xff] %v401
  %672 = vst [vmem:[%s2 + $0x68] sm:$0xff] %v406
  %673 = vst [vmem:[%s2 + $0x70] sm:$0xff] %v411
  %674 = vst [vmem:[%s2 + $0x78] sm:$0xff] %v416
  %675 = vst [vmem:[%s2 + $0x80] sm:$0xff] %v421
  %676 = vst [vmem:[%s2 + $0x88] sm:$0xff] %v426
  %677 = vst [vmem:[%s2 + $0x90] sm:$0xff] %v431
  %678 = vst [vmem:[%s2 + $0x98] sm:$0xff] %v436
  %679 = vst [vmem:[%s2 + $0xa0] sm:$0xff] %v441
  %680 = vst [vmem:[%s2 + $0xa8] sm:$0xff] %v446
  %681 = vst [vmem:[%s2 + $0xb0] sm:$0xff] %v451
  %682 = vst [vmem:[%s2 + $0xb8] sm:$0xff] %v456
  %683 = vst [vmem:[%s2 + $0xc0] sm:$0xff] %v461
  %684 = vst [vmem:[%s2 + $0xc8] sm:$0xff] %v466
  %685 = vst [vmem:[%s2 + $0xd0] sm:$0xff] %v471
  %686 = vst [vmem:[%s2 + $0xd8] sm:$0xff] %v476
  %687 = vst [vmem:[%s2 + $0xe0] sm:$0xff] %v481
  %688 = vst [vmem:[%s2 + $0xe8] sm:$0xff] %v486
  %689 = vst [vmem:[%s2 + $0xf0] sm:$0xff] %v491
  %690 = vst [vmem:[%s2 + $0xf8] sm:$0xff] %v496
  %691 = vst [vmem:[%s2 + $0x100] sm:$0xff] %v501
  %692 = vst [vmem:[%s2 + $0x108] sm:$0xff] %v506
  %693 = vst [vmem:[%s2 + $0x110] sm:$0xff] %v511
  %694 = vst [vmem:[%s2 + $0x118] sm:$0xff] %v516
  %695 = vst [vmem:[%s2 + $0x120] sm:$0xff] %v521
  %696 = vst [vmem:[%s2 + $0x128] sm:$0xff] %v526
  %697 = vst [vmem:[%s2 + $0x130] sm:$0xff] %v531
  %698 = vst [vmem:[%s2 + $0x138] sm:$0xff] %v536
  %699 = vst [vmem:[%s2 + $0x140] sm:$0xff] %v541
  %700 = vst [vmem:[%s2 + $0x148] sm:$0xff] %v546
  %701 = vst [vmem:[%s2 + $0x150] sm:$0xff] %v551
  %702 = vst [vmem:[%s2 + $0x158] sm:$0xff] %v556
  %703 = vst [vmem:[%s2 + $0x160] sm:$0xff] %v561
  %704 = vst [vmem:[%s2 + $0x168] sm:$0xff] %v566
  %705 = vst [vmem:[%s2 + $0x170] sm:$0xff] %v571
  %706 = vst [vmem:[%s2 + $0x178] sm:$0xff] %v576
  %707 = vst [vmem:[%s2 + $0x180] sm:$0xff] %v581
  %708 = vst [vmem:[%s2 + $0x188] sm:$0xff] %v586
  %709 = vst [vmem:[%s2 + $0x190] sm:$0xff] %v591
  %710 = vst [vmem:[%s2 + $0x198] sm:$0xff] %v596
  %711 = vst [vmem:[%s2 + $0x1a0] sm:$0xff] %v601
  %712 = vst [vmem:[%s2 + $0x1a8] sm:$0xff] %v606
  %713 = vst [vmem:[%s2 + $0x1b0] sm:$0xff] %v611
  %714 = vst [vmem:[%s2 + $0x1b8] sm:$0xff] %v616
  %715 = vst [vmem:[%s2 + $0x1c0] sm:$0xff] %v621
  %716 = vst [vmem:[%s2 + $0x1c8] sm:$0xff] %v626
  %717 = vst [vmem:[%s2 + $0x1d0] sm:$0xff] %v631
  %718 = vst [vmem:[%s2 + $0x1d8] sm:$0xff] %v636
  %719 = vst [vmem:[%s2 + $0x1e0] sm:$0xff] %v641
  %720 = vst [vmem:[%s2 + $0x1e8] sm:$0xff] %v646
  %721 = vst [vmem:[%s2 + $0x1f0] sm:$0xff] %v651
  %722 = vst [vmem:[%s2 + $0x1f8] sm:$0xff] %v656
  // Predicated region
  $region10: #{_lambda_.18} parent=0 // pred_check
    _
  $region11: #{_lambda_.18} parent=0 // pred_check_branch
    %724 = sbr.rel (0) target = $region13
  $region12: #{_lambda_.18} parent=0 // pred_region
    _
  $region13: #{_lambda_.18} parent=0 // pred_fallthru
    _
  // Predicated region
  $region14: #{_lambda_.18} parent=0 // pred_check
    _
  $region15: #{_lambda_.18} parent=0 // pred_check_branch
    %726 = sbr.rel (0) target = $region17
  $region16: #{_lambda_.18} parent=0 // pred_region
    _
  $region17: #{_lambda_.18} parent=0 // pred_fallthru
    _

// kernel: _lambda_.19
$region0: #{_lambda_.19}
  #allocation0 [shape = 'u32[]', space=smem, size = 0x4, offset = 0x4, fixed_abs, tag = 'smem constant byte address 0x4 - core index']
  #allocation1 [shape = 'u32[144,128]{1,0:T(1,128)}', space=vmem, size = 0x12000, scoped, tag = 'internal scratch']
  %s0 = inlined_call_operand.vmem [shape: f32[128,128], index: 0, kind: input, shape index: {}]
  %s1 = inlined_call_operand.vmem [shape: f32[128,128], index: 1, kind: input, shape index: {}]
  %s2 = inlined_call_operand.vmem [shape: f32[128,128], index: 2, kind: output, shape index: {}]
  %s3 = sld [smem:[#allocation0]]
  $region18: #{_lambda_.19} parent=0
    _
  %s5 = ssub.s32 1, %s3
  %s6 = scalar_select 0, %s5, %s3
  // Predicated region
  $region2: #{_lambda_.19} parent=0 // pred_check
    _
  $region3: #{_lambda_.19} parent=0 // pred_check_branch
    %8 = sbr.rel (0) target = $region5
  $region4: #{_lambda_.19} parent=0 // pred_region
    _
  $region5: #{_lambda_.19} parent=0 // pred_fallthru
    _
  // Predicated region
  $region6: #{_lambda_.19} parent=0 // pred_check
    _
  $region7: #{_lambda_.19} parent=0 // pred_check_branch
    %10 = sbr.rel (0) target = $region9
  $region8: #{_lambda_.19} parent=0 // pred_region
    _
  $region9: #{_lambda_.19} parent=0 // pred_fallthru
    _
  %v11 = vld [vmem:[%s0] sm:$0xff]
  %v12 = vld [vmem:[%s0 + $0x8] sm:$0xff]
  %v13 = vld [vmem:[%s0 + $0x10] sm:$0xff]
  %v14 = vld [vmem:[%s0 + $0x18] sm:$0xff]
  %v15 = vld [vmem:[%s0 + $0x20] sm:$0xff]
  %v16 = vld [vmem:[%s0 + $0x28] sm:$0xff]
  %v17 = vld [vmem:[%s0 + $0x30] sm:$0xff]
  %v18 = vld [vmem:[%s0 + $0x38] sm:$0xff]
  %v19 = vld [vmem:[%s0 + $0x40] sm:$0xff]
  %v20 = vld [vmem:[%s0 + $0x48] sm:$0xff]
  %v21 = vld [vmem:[%s0 + $0x50] sm:$0xff]
  %v22 = vld [vmem:[%s0 + $0x58] sm:$0xff]
  %v23 = vld [vmem:[%s0 + $0x60] sm:$0xff]
  %v24 = vld [vmem:[%s0 + $0x68] sm:$0xff]
  %v25 = vld [vmem:[%s0 + $0x70] sm:$0xff]
  %v26 = vld [vmem:[%s0 + $0x78] sm:$0xff]
  %v27 = vld [vmem:[%s1] sm:$0xff]
  %v28 = vld [vmem:[%s1 + $0x8] sm:$0xff]
  %v29 = vld [vmem:[%s1 + $0x10] sm:$0xff]
  %v30 = vld [vmem:[%s1 + $0x18] sm:$0xff]
  %v31 = vld [vmem:[%s1 + $0x20] sm:$0xff]
  %v32 = vld [vmem:[%s1 + $0x28] sm:$0xff]
  %v33 = vld [vmem:[%s1 + $0x30] sm:$0xff]
  %v34 = vld [vmem:[%s1 + $0x38] sm:$0xff]
  %v35 = vld [vmem:[%s1 + $0x40] sm:$0xff]
  %v36 = vld [vmem:[%s1 + $0x48] sm:$0xff]
  %v37 = vld [vmem:[%s1 + $0x50] sm:$0xff]
  %v38 = vld [vmem:[%s1 + $0x58] sm:$0xff]
  %v39 = vld [vmem:[%s1 + $0x60] sm:$0xff]
  %v40 = vld [vmem:[%s1 + $0x68] sm:$0xff]
  %v41 = vld [vmem:[%s1 + $0x70] sm:$0xff]
  %v42 = vld [vmem:[%s1 + $0x78] sm:$0xff]
  %43 = vmatprep.subr.mxu0 0.0
  %44 = vmatpush1.msra.mxu0 %v27
  %45 = vmatprep.subr.mxu0 0.0
  %46 = vmatpush1.msra.mxu0 %v28
  %47 = vmatprep.subr.mxu0 0.0
  %48 = vmatpush1.msra.mxu0 %v29
  %49 = vmatprep.subr.mxu0 0.0
  %50 = vmatpush1.msra.mxu0 %v30
  %51 = vmatprep.subr.mxu0 0.0
  %52 = vmatpush1.msra.mxu0 %v31
  %53 = vmatprep.subr.mxu0 0.0
  %54 = vmatpush1.msra.mxu0 %v32
  %55 = vmatprep.subr.mxu0 0.0
  %56 = vmatpush1.msra.mxu0 %v33
  %57 = vmatprep.subr.mxu0 0.0
  %58 = vmatpush1.msra.mxu0 %v34
  %59 = vmatprep.subr.mxu0 0.0
  %60 = vmatpush1.msra.mxu0 %v35
  %61 = vmatprep.subr.mxu0 0.0
  %62 = vmatpush1.msra.mxu0 %v36
  %63 = vmatprep.subr.mxu0 0.0
  %64 = vmatpush1.msra.mxu0 %v37
  %65 = vmatprep.subr.mxu0 0.0
  %66 = vmatpush1.msra.mxu0 %v38
  %67 = vmatprep.subr.mxu0 0.0
  %68 = vmatpush1.msra.mxu0 %v39
  %69 = vmatprep.subr.mxu0 0.0
  %70 = vmatpush1.msra.mxu0 %v40
  %71 = vmatprep.subr.mxu0 0.0
  %72 = vmatpush1.msra.mxu0 %v41
  %73 = vmatprep.subr.mxu0 0.0
  %74 = vmatpush1.msra.mxu0 %v42
  %75 = vmatprep.subr.mxu0 0.0
  %76 = vmatpush1.msra.mxu0 0.0
  %77 = vmatprep.subr.mxu0 0.0
  %78 = vmatpush1.msra.mxu0 0.0
  %79 = vmatprep.subr.mxu0 0.0
  %80 = vmatpush1.msra.mxu0 0.0
  %81 = vmatprep.subr.mxu0 0.0
  %82 = vmatpush1.msra.mxu0 0.0
  %83 = vmatprep.subr.mxu0 0.0
  %84 = vmatpush1.msra.mxu0 0.0
  %85 = vmatprep.subr.mxu0 0.0
  %86 = vmatpush1.msra.mxu0 0.0
  %87 = vmatprep.subr.mxu0 0.0
  %88 = vmatpush1.msra.mxu0 0.0
  %89 = vmatprep.subr.mxu0 0.0
  %90 = vmatpush1.msra.mxu0 0.0
  %91 = vmatprep.subr.mxu0 0.0
  %92 = vmatpush1.msra.mxu0 0.0
  %93 = vmatprep.subr.mxu0 0.0
  %94 = vmatpush1.msra.mxu0 0.0
  %95 = vmatprep.subr.mxu0 0.0
  %96 = vmatpush1.msra.mxu0 0.0
  %97 = vmatprep.subr.mxu0 0.0
  %98 = vmatpush1.msra.mxu0 0.0
  %99 = vmatprep.subr.mxu0 0.0
  %100 = vmatpush1.msra.mxu0 0.0
  %101 = vmatprep.subr.mxu0 0.0
  %102 = vmatpush1.msra.mxu0 0.0
  %103 = vmatprep.subr.mxu0 0.0
  %104 = vmatpush1.msra.mxu0 0.0
  %105 = vmatprep.subr.mxu0 0.0
  %106 = vmatpush1.msra.mxu0 0.0
  %107 = vmatprep.mubr.f32.mxu0 0.0
  %108 = vmatmul.mubr.f32.gmra.mrb[0].mxu0 %v11
  %v109 = vpop.f32.mrb[0].mxu0
  %v110 = vadd.f32 0.0, %v109
  %v111 = vpop.f32.mrb[0].mxu0
  %112 = vmatprep.mubr.f32.mxu0 0.0
  %113 = vmatmul.mubr.f32.gmra.mrb[0].mxu0 %v12
  %v114 = vpop.f32.mrb[0].mxu0
  %v115 = vadd.f32 0.0, %v114
  %v116 = vpop.f32.mrb[0].mxu0
  %117 = vmatprep.mubr.f32.mxu0 0.0
  %118 = vmatmul.mubr.f32.gmra.mrb[0].mxu0 %v13
  %v119 = vpop.f32.mrb[0].mxu0
  %v120 = vadd.f32 0.0, %v119
  %v121 = vpop.f32.mrb[0].mxu0
  %122 = vmatprep.mubr.f32.mxu0 0.0
  %123 = vmatmul.mubr.f32.gmra.mrb[0].mxu0 %v14
  %v124 = vpop.f32.mrb[0].mxu0
  %v125 = vadd.f32 0.0, %v124
  %v126 = vpop.f32.mrb[0].mxu0
  %127 = vmatprep.mubr.f32.mxu0 0.0
  %128 = vmatmul.mubr.f32.gmra.mrb[0].mxu0 %v15
  %v129 = vpop.f32.mrb[0].mxu0
  %v130 = vadd.f32 0.0, %v129
  %v131 = vpop.f32.mrb[0].mxu0
  %132 = vmatprep.mubr.f32.mxu0 0.0
  %133 = vmatmul.mubr.f32.gmra.mrb[0].mxu0 %v16
  %v134 = vpop.f32.mrb[0].mxu0
  %v135 = vadd.f32 0.0, %v134
  %v136 = vpop.f32.mrb[0].mxu0
  %137 = vmatprep.mubr.f32.mxu0 0.0
  %138 = vmatmul.mubr.f32.gmra.mrb[0].mxu0 %v17
  %v139 = vpop.f32.mrb[0].mxu0
  %v140 = vadd.f32 0.0, %v139
  %v141 = vpop.f32.mrb[0].mxu0
  %142 = vmatprep.mubr.f32.mxu0 0.0
  %143 = vmatmul.mubr.f32.gmra.mrb[0].mxu0 %v18
  %v144 = vpop.f32.mrb[0].mxu0
  %v145 = vadd.f32 0.0, %v144
  %v146 = vpop.f32.mrb[0].mxu0
  %147 = vmatprep.mubr.f32.mxu0 0.0
  %148 = vmatmul.mubr.f32.gmra.mrb[0].mxu0 %v19
  %v149 = vpop.f32.mrb[0].mxu0
  %v150 = vadd.f32 0.0, %v149
  %v151 = vpop.f32.mrb[0].mxu0
  %152 = vmatprep.mubr.f32.mxu0 0.0
  %153 = vmatmul.mubr.f32.gmra.mrb[0].mxu0 %v20
  %v154 = vpop.f32.mrb[0].mxu0
  %v155 = vadd.f32 0.0, %v154
  %v156 = vpop.f32.mrb[0].mxu0
  %157 = vmatprep.mubr.f32.mxu0 0.0
  %158 = vmatmul.mubr.f32.gmra.mrb[0].mxu0 %v21
  %v159 = vpop.f32.mrb[0].mxu0
  %v160 = vadd.f32 0.0, %v159
  %v161 = vpop.f32.mrb[0].mxu0
  %162 = vmatprep.mubr.f32.mxu0 0.0
  %163 = vmatmul.mubr.f32.gmra.mrb[0].mxu0 %v22
  %v164 = vpop.f32.mrb[0].mxu0
  %v165 = vadd.f32 0.0, %v164
  %v166 = vpop.f32.mrb[0].mxu0
  %167 = vmatprep.mubr.f32.mxu0 0.0
  %168 = vmatmul.mubr.f32.gmra.mrb[0].mxu0 %v23
  %v169 = vpop.f32.mrb[0].mxu0
  %v170 = vadd.f32 0.0, %v169
  %v171 = vpop.f32.mrb[0].mxu0
  %172 = vmatprep.mubr.f32.mxu0 0.0
  %173 = vmatmul.mubr.f32.gmra.mrb[0].mxu0 %v24
  %v174 = vpop.f32.mrb[0].mxu0
  %v175 = vadd.f32 0.0, %v174
  %v176 = vpop.f32.mrb[0].mxu0
  %177 = vmatprep.mubr.f32.mxu0 0.0
  %178 = vmatmul.mubr.f32.gmra.mrb[0].mxu0 %v25
  %v179 = vpop.f32.mrb[0].mxu0
  %v180 = vadd.f32 0.0, %v179
  %v181 = vpop.f32.mrb[0].mxu0
  %182 = vmatprep.mubr.f32.mxu0 0.0
  %183 = vmatmul.mubr.f32.gmra.mrb[0].mxu0 %v26
  %v184 = vpop.f32.mrb[0].mxu0
  %v185 = vadd.f32 0.0, %v184
  %v186 = vpop.f32.mrb[0].mxu0
  %187 = vdwg.mxu0
  %188 = vst [vmem:[%s2] sm:$0xff] %v110
  %189 = vst [vmem:[%s2 + $0x8] sm:$0xff] %v115
  %190 = vst [vmem:[%s2 + $0x10] sm:$0xff] %v120
  %191 = vst [vmem:[%s2 + $0x18] sm:$0xff] %v125
  %192 = vst [vmem:[%s2 + $0x20] sm:$0xff] %v130
  %193 = vst [vmem:[%s2 + $0x28] sm:$0xff] %v135
  %194 = vst [vmem:[%s2 + $0x30] sm:$0xff] %v140
  %195 = vst [vmem:[%s2 + $0x38] sm:$0xff] %v145
  %196 = vst [vmem:[%s2 + $0x40] sm:$0xff] %v150
  %197 = vst [vmem:[%s2 + $0x48] sm:$0xff] %v155
  %198 = vst [vmem:[%s2 + $0x50] sm:$0xff] %v160
  %199 = vst [vmem:[%s2 + $0x58] sm:$0xff] %v165
  %200 = vst [vmem:[%s2 + $0x60] sm:$0xff] %v170
  %201 = vst [vmem:[%s2 + $0x68] sm:$0xff] %v175
  %202 = vst [vmem:[%s2 + $0x70] sm:$0xff] %v180
  %203 = vst [vmem:[%s2 + $0x78] sm:$0xff] %v185
  // Predicated region
  $region10: #{_lambda_.19} parent=0 // pred_check
    _
  $region11: #{_lambda_.19} parent=0 // pred_check_branch
    %205 = sbr.rel (0) target = $region13
  $region12: #{_lambda_.19} parent=0 // pred_region
    _
  $region13: #{_lambda_.19} parent=0 // pred_fallthru
    _
  // Predicated region
  $region14: #{_lambda_.19} parent=0 // pred_check
    _
  $region15: #{_lambda_.19} parent=0 // pred_check_branch
    %207 = sbr.rel (0) target = $region17
  $region16: #{_lambda_.19} parent=0 // pred_region
    _
  $region17: #{_lambda_.19} parent=0 // pred_fallthru
    _

// kernel: tile.77
$region0: #{tile.77}
  #allocation0 [shape = 's32[1]{0}', space=sflag, size = 0x4, scoped, tag = 'scoped memory for tile.77']
  %s0 = inlined_call_operand.vmem [shape: f32[16], index: 0, kind: input, shape index: {}]
  %s1 = inlined_call_operand.vmem [shape: f32[8,16], index: 1, kind: output, shape index: {}]
  // Predicated region
  $region2: #{tile.77} parent=0 // pred_check
    _
  $region3: #{tile.77} parent=0 // pred_check_branch
    %3 = sbr.rel (0) target = $region5
  $region4: #{tile.77} parent=0 // pred_region
    _
  $region5: #{tile.77} parent=0 // pred_fallthru
    _
  %v4 = vld [vmem:[%s0] ss:$0 sm:$0xff]
  %5 = vst [vmem:[%s1] sm:$0xff] %v4

// kernel: tile.78
$region0: #{tile.78}
  %s0 = inlined_call_operand.vmem [shape: f32[8,16], index: 0, kind: input, shape index: {}]
  %s1 = inlined_call_operand.vmem [shape: f32[1,128], index: 1, kind: output, shape index: {}]
  $region1: #{tile.78} parent=0
    #allocation0 [shape = 'u8[4096]{0}', space=vmem, size = 0x1000, scoped, tag = 'scoped mem for output reshape']
    %v2 = vld [vmem:[%s0] sm:$0x1]
    %vm3 = vcmask 130048
    %4 = vst.msk [vmem:[#allocation0] sm:$0x1] %vm3, %v2
    %s5 = scalar_lea.vmem %s0, 7
    %v6 = vld [vmem:[%s5] sm:$0x1]
    %7 = vrot.lane.b32.xlu0 %v6, 112
    %v8 = vpop.permute.xlu0 %7
    %vm9 = vcmask 1048448
    %10 = vst.msk [vmem:[#allocation0] sm:$0x1] %vm9, %v8
    %s11 = scalar_lea.vmem %s0, 6
    %v12 = vld [vmem:[%s11] sm:$0x1]
    %13 = vrot.lane.b32.xlu0 %v12, 96
    %v14 = vpop.permute.xlu0 %13
    %vm15 = vcmask 917248
    %16 = vst.msk [vmem:[#allocation0] sm:$0x1] %vm15, %v14
    %s17 = scalar_lea.vmem %s0, 5
    %v18 = vld [vmem:[%s17] sm:$0x1]
    %19 = vrot.lane.b32.xlu0 %v18, 80
    %v20 = vpop.permute.xlu0 %19
    %vm21 = vcmask 786048
    %22 = vst.msk [vmem:[#allocation0] sm:$0x1] %vm21, %v20
    %s23 = scalar_lea.vmem %s0, 4
    %v24 = vld [vmem:[%s23] sm:$0x1]
    %25 = vrot.lane.b32.xlu0 %v24, 64
    %v26 = vpop.permute.xlu0 %25
    %vm27 = vcmask 654848
    %28 = vst.msk [vmem:[#allocation0] sm:$0x1] %vm27, %v26
    %s29 = scalar_lea.vmem %s0, 3
    %v30 = vld [vmem:[%s29] sm:$0x1]
    %31 = vrot.lane.b32.xlu0 %v30, 48
    %v32 = vpop.permute.xlu0 %31
    %vm33 = vcmask 523648
    %34 = vst.msk [vmem:[#allocation0] sm:$0x1] %vm33, %v32
    %s35 = scalar_lea.vmem %s0, 2
    %v36 = vld [vmem:[%s35] sm:$0x1]
    %37 = vrot.lane.b32.xlu0 %v36, 32
    %v38 = vpop.permute.xlu0 %37
    %vm39 = vcmask 392448
    %40 = vst.msk [vmem:[#allocation0] sm:$0x1] %vm39, %v38
    %s41 = scalar_lea.vmem %s0, 1
    %v42 = vld [vmem:[%s41] sm:$0x1]
    %43 = vrot.lane.b32.xlu0 %v42, 16
    %v44 = vpop.permute.xlu0 %43
    %vm45 = vcmask 261248
    %46 = vst.msk [vmem:[#allocation0] sm:$0x1] %vm45, %v44
    %s48 = sshllo.u32 0, 1
    %v50 = vld [vmem:[#allocation0] sm:%s48]
    %s51 = sshllo.u32 0, 1
    %52 = vst [vmem:[%s1] sm:%s51] %v50

// kernel: _lambda_.20
$region0: #{_lambda_.20}
  #allocation0 [shape = 'u32[]', space=smem, size = 0x4, offset = 0x4, fixed_abs, tag = 'smem constant byte address 0x4 - core index']
  #allocation1 [shape = 'u32[144,128]{1,0:T(1,128)}', space=vmem, size = 0x12000, scoped, tag = 'internal scratch']
  %s0 = inlined_call_operand.vmem [shape: f32[16,128], index: 0, kind: input, shape index: {}]
  %s1 = inlined_call_operand.vmem [shape: f32[1,128], index: 1, kind: input, shape index: {}]
  %s2 = inlined_call_operand.vmem [shape: f32[1,128], index: 2, kind: input, shape index: {}]
  %s3 = inlined_call_operand.vmem [shape: f32[16,128], index: 3, kind: output, shape index: {}]
  %s4 = sld [smem:[#allocation0]]
  $region22: #{_lambda_.20} parent=0
    _
  %s6 = ssub.s32 1, %s4
  %s7 = scalar_select 0, %s6, %s4
  // Predicated region
  $region2: #{_lambda_.20} parent=0 // pred_check
    _
  $region3: #{_lambda_.20} parent=0 // pred_check_branch
    %9 = sbr.rel (0) target = $region5
  $region4: #{_lambda_.20} parent=0 // pred_region
    _
  $region5: #{_lambda_.20} parent=0 // pred_fallthru
    _
  // Predicated region
  $region6: #{_lambda_.20} parent=0 // pred_check
    _
  $region7: #{_lambda_.20} parent=0 // pred_check_branch
    %11 = sbr.rel (0) target = $region9
  $region8: #{_lambda_.20} parent=0 // pred_region
    _
  $region9: #{_lambda_.20} parent=0 // pred_fallthru
    _
  // Predicated region
  $region10: #{_lambda_.20} parent=0 // pred_check
    _
  $region11: #{_lambda_.20} parent=0 // pred_check_branch
    %13 = sbr.rel (0) target = $region13
  $region12: #{_lambda_.20} parent=0 // pred_region
    _
  $region13: #{_lambda_.20} parent=0 // pred_fallthru
    _
  %v14 = vld [vmem:[%s0] sm:$0xff]
  %v15 = vld [vmem:[%s0 + $0x8] sm:$0xff]
  %v16 = vld [vmem:[%s1] sm:$0x1]
  %v18 = vlaneseq
  %v19 = vshrl.u32 %v18, 7
  %v20 = vsub.s32 0, %v19
  %v21 = vrot.slane %v16, %v20
  %v23 = vmul.f32 %v14, %v21
  %v24 = vmul.f32 %v15, %v21
  %v25 = vld [vmem:[%s2] sm:$0x1]
  %v27 = vlaneseq
  %v28 = vshrl.u32 %v27, 7
  %v29 = vsub.s32 0, %v28
  %v30 = vrot.slane %v25, %v29
  %v32 = vadd.f32 %v23, %v30
  %v33 = vadd.f32 %v24, %v30
  %34 = vst [vmem:[%s3] sm:$0xff] %v32
  %35 = vst [vmem:[%s3 + $0x8] sm:$0xff] %v33
  // Predicated region
  $region14: #{_lambda_.20} parent=0 // pred_check
    _
  $region15: #{_lambda_.20} parent=0 // pred_check_branch
    %37 = sbr.rel (0) target = $region17
  $region16: #{_lambda_.20} parent=0 // pred_region
    _
  $region17: #{_lambda_.20} parent=0 // pred_fallthru
    _
  // Predicated region
  $region18: #{_lambda_.20} parent=0 // pred_check
    _
  $region19: #{_lambda_.20} parent=0 // pred_check_branch
    %39 = sbr.rel (0) target = $region21
  $region20: #{_lambda_.20} parent=0 // pred_region
    _
  $region21: #{_lambda_.20} parent=0 // pred_fallthru
    _

// kernel: _lambda_.21
$region0: #{_lambda_.21}
  #allocation0 [shape = 'u32[]', space=smem, size = 0x4, offset = 0x4, fixed_abs, tag = 'smem constant byte address 0x4 - core index']
  #allocation1 [shape = 'u32[144,128]{1,0:T(1,128)}', space=vmem, size = 0x12000, scoped, tag = 'internal scratch']
  %s0 = inlined_call_operand.vmem [shape: f32[32,256], index: 0, kind: input, shape index: {}]
  %s1 = inlined_call_operand.vmem [shape: f32[256,128], index: 1, kind: input, shape index: {}]
  %s2 = inlined_call_operand.vmem [shape: f32[32,128], index: 2, kind: output, shape index: {}]
  %s3 = sld [smem:[#allocation0]]
  $region18: #{_lambda_.21} parent=0
    _
  %s5 = ssub.s32 1, %s3
  %s6 = scalar_select 0, %s5, %s3
  // Predicated region
  $region2: #{_lambda_.21} parent=0 // pred_check
    _
  $region3: #{_lambda_.21} parent=0 // pred_check_branch
    %8 = sbr.rel (0) target = $region5
  $region4: #{_lambda_.21} parent=0 // pred_region
    _
  $region5: #{_lambda_.21} parent=0 // pred_fallthru
    _
  // Predicated region
  $region6: #{_lambda_.21} parent=0 // pred_check
    _
  $region7: #{_lambda_.21} parent=0 // pred_check_branch
    %10 = sbr.rel (0) target = $region9
  $region8: #{_lambda_.21} parent=0 // pred_region
    _
  $region9: #{_lambda_.21} parent=0 // pred_fallthru
    _
  %v11 = vld [vmem:[%s0] sm:$0xff]
  %v12 = vld [vmem:[%s0 + $0x8] sm:$0xff]
  %v13 = vld [vmem:[%s0 + $0x10] sm:$0xff]
  %v14 = vld [vmem:[%s0 + $0x18] sm:$0xff]
  %v15 = vld [vmem:[%s0 + $0x20] sm:$0xff]
  %v16 = vld [vmem:[%s0 + $0x28] sm:$0xff]
  %v17 = vld [vmem:[%s0 + $0x30] sm:$0xff]
  %v18 = vld [vmem:[%s0 + $0x38] sm:$0xff]
  %v19 = vld [vmem:[%s1] sm:$0xff]
  %v20 = vld [vmem:[%s1 + $0x8] sm:$0xff]
  %v21 = vld [vmem:[%s1 + $0x10] sm:$0xff]
  %v22 = vld [vmem:[%s1 + $0x18] sm:$0xff]
  %v23 = vld [vmem:[%s1 + $0x20] sm:$0xff]
  %v24 = vld [vmem:[%s1 + $0x28] sm:$0xff]
  %v25 = vld [vmem:[%s1 + $0x30] sm:$0xff]
  %v26 = vld [vmem:[%s1 + $0x38] sm:$0xff]
  %v27 = vld [vmem:[%s1 + $0x40] sm:$0xff]
  %v28 = vld [vmem:[%s1 + $0x48] sm:$0xff]
  %v29 = vld [vmem:[%s1 + $0x50] sm:$0xff]
  %v30 = vld [vmem:[%s1 + $0x58] sm:$0xff]
  %v31 = vld [vmem:[%s1 + $0x60] sm:$0xff]
  %v32 = vld [vmem:[%s1 + $0x68] sm:$0xff]
  %v33 = vld [vmem:[%s1 + $0x70] sm:$0xff]
  %v34 = vld [vmem:[%s1 + $0x78] sm:$0xff]
  %v35 = vld [vmem:[%s1 + $0x80] sm:$0xff]
  %v36 = vld [vmem:[%s1 + $0x88] sm:$0xff]
  %v37 = vld [vmem:[%s1 + $0x90] sm:$0xff]
  %v38 = vld [vmem:[%s1 + $0x98] sm:$0xff]
  %v39 = vld [vmem:[%s1 + $0xa0] sm:$0xff]
  %v40 = vld [vmem:[%s1 + $0xa8] sm:$0xff]
  %v41 = vld [vmem:[%s1 + $0xb0] sm:$0xff]
  %v42 = vld [vmem:[%s1 + $0xb8] sm:$0xff]
  %v43 = vld [vmem:[%s1 + $0xc0] sm:$0xff]
  %v44 = vld [vmem:[%s1 + $0xc8] sm:$0xff]
  %v45 = vld [vmem:[%s1 + $0xd0] sm:$0xff]
  %v46 = vld [vmem:[%s1 + $0xd8] sm:$0xff]
  %v47 = vld [vmem:[%s1 + $0xe0] sm:$0xff]
  %v48 = vld [vmem:[%s1 + $0xe8] sm:$0xff]
  %v49 = vld [vmem:[%s1 + $0xf0] sm:$0xff]
  %v50 = vld [vmem:[%s1 + $0xf8] sm:$0xff]
  %51 = vmatprep.subr.mxu0 0.0
  %52 = vmatpush1.msra.mxu0 %v19
  %53 = vmatprep.subr.mxu0 0.0
  %54 = vmatpush1.msra.mxu0 %v20
  %55 = vmatprep.subr.mxu0 0.0
  %56 = vmatpush1.msra.mxu0 %v21
  %57 = vmatprep.subr.mxu0 0.0
  %58 = vmatpush1.msra.mxu0 %v22
  %59 = vmatprep.subr.mxu0 0.0
  %60 = vmatpush1.msra.mxu0 %v23
  %61 = vmatprep.subr.mxu0 0.0
  %62 = vmatpush1.msra.mxu0 %v24
  %63 = vmatprep.subr.mxu0 0.0
  %64 = vmatpush1.msra.mxu0 %v25
  %65 = vmatprep.subr.mxu0 0.0
  %66 = vmatpush1.msra.mxu0 %v26
  %67 = vmatprep.subr.mxu0 0.0
  %68 = vmatpush1.msra.mxu0 %v27
  %69 = vmatprep.subr.mxu0 0.0
  %70 = vmatpush1.msra.mxu0 %v28
  %71 = vmatprep.subr.mxu0 0.0
  %72 = vmatpush1.msra.mxu0 %v29
  %73 = vmatprep.subr.mxu0 0.0
  %74 = vmatpush1.msra.mxu0 %v30
  %75 = vmatprep.subr.mxu0 0.0
  %76 = vmatpush1.msra.mxu0 %v31
  %77 = vmatprep.subr.mxu0 0.0
  %78 = vmatpush1.msra.mxu0 %v32
  %79 = vmatprep.subr.mxu0 0.0
  %80 = vmatpush1.msra.mxu0 %v33
  %81 = vmatprep.subr.mxu0 0.0
  %82 = vmatpush1.msra.mxu0 %v34
  %83 = vmatprep.subr.mxu0 0.0
  %84 = vmatpush1.msra.mxu0 %v35
  %85 = vmatprep.subr.mxu0 0.0
  %86 = vmatpush1.msra.mxu0 %v36
  %87 = vmatprep.subr.mxu0 0.0
  %88 = vmatpush1.msra.mxu0 %v37
  %89 = vmatprep.subr.mxu0 0.0
  %90 = vmatpush1.msra.mxu0 %v38
  %91 = vmatprep.subr.mxu0 0.0
  %92 = vmatpush1.msra.mxu0 %v39
  %93 = vmatprep.subr.mxu0 0.0
  %94 = vmatpush1.msra.mxu0 %v40
  %95 = vmatprep.subr.mxu0 0.0
  %96 = vmatpush1.msra.mxu0 %v41
  %97 = vmatprep.subr.mxu0 0.0
  %98 = vmatpush1.msra.mxu0 %v42
  %99 = vmatprep.subr.mxu0 0.0
  %100 = vmatpush1.msra.mxu0 %v43
  %101 = vmatprep.subr.mxu0 0.0
  %102 = vmatpush1.msra.mxu0 %v44
  %103 = vmatprep.subr.mxu0 0.0
  %104 = vmatpush1.msra.mxu0 %v45
  %105 = vmatprep.subr.mxu0 0.0
  %106 = vmatpush1.msra.mxu0 %v46
  %107 = vmatprep.subr.mxu0 0.0
  %108 = vmatpush1.msra.mxu0 %v47
  %109 = vmatprep.subr.mxu0 0.0
  %110 = vmatpush1.msra.mxu0 %v48
  %111 = vmatprep.subr.mxu0 0.0
  %112 = vmatpush1.msra.mxu0 %v49
  %113 = vmatprep.subr.mxu0 0.0
  %114 = vmatpush1.msra.mxu0 %v50
  %115 = vmatprep.mubr.f32.mxu0 %v12
  %116 = vmatmul.mubr.f32.gmra.mrb[0].mxu0 %v11
  %v117 = vpop.f32.mrb[0].mxu0
  %v118 = vadd.f32 0.0, %v117
  %v119 = vpop.f32.mrb[0].mxu0
  %120 = vmatprep.mubr.f32.mxu0 %v14
  %121 = vmatmul.mubr.f32.gmra.mrb[0].mxu0 %v13
  %v122 = vpop.f32.mrb[0].mxu0
  %v123 = vadd.f32 0.0, %v122
  %v124 = vpop.f32.mrb[0].mxu0
  %125 = vmatprep.mubr.f32.mxu0 %v16
  %126 = vmatmul.mubr.f32.gmra.mrb[0].mxu0 %v15
  %v127 = vpop.f32.mrb[0].mxu0
  %v128 = vadd.f32 0.0, %v127
  %v129 = vpop.f32.mrb[0].mxu0
  %130 = vmatprep.mubr.f32.mxu0 %v18
  %131 = vmatmul.mubr.f32.gmra.mrb[0].mxu0 %v17
  %v132 = vpop.f32.mrb[0].mxu0
  %v133 = vadd.f32 0.0, %v132
  %v134 = vpop.f32.mrb[0].mxu0
  %135 = vdwg.mxu0
  %136 = vst [vmem:[%s2] sm:$0xff] %v118
  %137 = vst [vmem:[%s2 + $0x8] sm:$0xff] %v123
  %138 = vst [vmem:[%s2 + $0x10] sm:$0xff] %v128
  %139 = vst [vmem:[%s2 + $0x18] sm:$0xff] %v133
  // Predicated region
  $region10: #{_lambda_.21} parent=0 // pred_check
    _
  $region11: #{_lambda_.21} parent=0 // pred_check_branch
    %141 = sbr.rel (0) target = $region13
  $region12: #{_lambda_.21} parent=0 // pred_region
    _
  $region13: #{_lambda_.21} parent=0 // pred_fallthru
    _
  // Predicated region
  $region14: #{_lambda_.21} parent=0 // pred_check
    _
  $region15: #{_lambda_.21} parent=0 // pred_check_branch
    %143 = sbr.rel (0) target = $region17
  $region16: #{_lambda_.21} parent=0 // pred_region
    _
  $region17: #{_lambda_.21} parent=0 // pred_fallthru
    _

// kernel: tile.87
$region0: #{tile.87}
  #allocation0 [shape = 's32[1]{0}', space=sflag, size = 0x4, scoped, tag = 'scoped memory for tile.87']
  %s0 = inlined_call_operand.vmem [shape: f32[32], index: 0, kind: input, shape index: {}]
  %s1 = inlined_call_operand.vmem [shape: f32[4,32], index: 1, kind: output, shape index: {}]
  // Predicated region
  $region2: #{tile.87} parent=0 // pred_check
    _
  $region3: #{tile.87} parent=0 // pred_check_branch
    %3 = sbr.rel (0) target = $region5
  $region4: #{tile.87} parent=0 // pred_region
    _
  $region5: #{tile.87} parent=0 // pred_fallthru
    _
  %v4 = vld [vmem:[%s0] ss:$0 sm:$0xff]
  %5 = vst [vmem:[%s1] sm:$0xf] %v4

// kernel: tile.88
$region0: #{tile.88}
  %s0 = inlined_call_operand.vmem [shape: f32[4,32], index: 0, kind: input, shape index: {}]
  %s1 = inlined_call_operand.vmem [shape: f32[1,128], index: 1, kind: output, shape index: {}]
  $region1: #{tile.88} parent=0
    #allocation0 [shape = 'u8[4096]{0}', space=vmem, size = 0x1000, scoped, tag = 'scoped mem for output reshape']
    #allocation1 [shape = 'u8[4096]{0}', space=vmem, size = 0x1000, scoped, tag = 'scoped mem for input reshape']
    %s3 = sshllo.u32 0, 4
    %v4 = vld [vmem:[%s0] sm:%s3]
    %5 = vst [vmem:[#allocation1] sm:%s3] %v4
    %v6 = vld [vmem:[#allocation1] sm:$0x1]
    %vm7 = vcmask 261120
    %8 = vst.msk [vmem:[#allocation0] sm:$0x1] %vm7, %v6
    %s9 = scalar_lea.vmem [#allocation1], 3
    %v10 = vld [vmem:[%s9] sm:$0x1]
    %11 = vrot.lane.b32.xlu0 %v10, 96
    %v12 = vpop.permute.xlu0 %11
    %vm13 = vcmask 1048320
    %14 = vst.msk [vmem:[#allocation0] sm:$0x1] %vm13, %v12
    %s15 = scalar_lea.vmem [#allocation1], 2
    %v16 = vld [vmem:[%s15] sm:$0x1]
    %17 = vrot.lane.b32.xlu0 %v16, 64
    %v18 = vpop.permute.xlu0 %17
    %vm19 = vcmask 785920
    %20 = vst.msk [vmem:[#allocation0] sm:$0x1] %vm19, %v18
    %s21 = scalar_lea.vmem [#allocation1], 1
    %v22 = vld [vmem:[%s21] sm:$0x1]
    %23 = vrot.lane.b32.xlu0 %v22, 32
    %v24 = vpop.permute.xlu0 %23
    %vm25 = vcmask 523520
    %26 = vst.msk [vmem:[#allocation0] sm:$0x1] %vm25, %v24
    %s28 = sshllo.u32 0, 1
    %v30 = vld [vmem:[#allocation0] sm:%s28]
    %s31 = sshllo.u32 0, 1
    %32 = vst [vmem:[%s1] sm:%s31] %v30

// kernel: _lambda_.22
$region0: #{_lambda_.22}
  #allocation0 [shape = 'u32[]', space=smem, size = 0x4, offset = 0x4, fixed_abs, tag = 'smem constant byte address 0x4 - core index']
  #allocation1 [shape = 'u32[144,128]{1,0:T(1,128)}', space=vmem, size = 0x12000, scoped, tag = 'internal scratch']
  %s0 = inlined_call_operand.vmem [shape: f32[8,128], index: 0, kind: input, shape index: {}]
  %s1 = inlined_call_operand.vmem [shape: f32[1,128], index: 1, kind: input, shape index: {}]
  %s2 = inlined_call_operand.vmem [shape: f32[1,128], index: 2, kind: input, shape index: {}]
  %s3 = inlined_call_operand.vmem [shape: f32[8,128], index: 3, kind: output, shape index: {}]
  %s4 = sld [smem:[#allocation0]]
  $region22: #{_lambda_.22} parent=0
    _
  %s6 = ssub.s32 1, %s4
  %s7 = scalar_select 0, %s6, %s4
  // Predicated region
  $region2: #{_lambda_.22} parent=0 // pred_check
    _
  $region3: #{_lambda_.22} parent=0 // pred_check_branch
    %9 = sbr.rel (0) target = $region5
  $region4: #{_lambda_.22} parent=0 // pred_region
    _
  $region5: #{_lambda_.22} parent=0 // pred_fallthru
    _
  // Predicated region
  $region6: #{_lambda_.22} parent=0 // pred_check
    _
  $region7: #{_lambda_.22} parent=0 // pred_check_branch
    %11 = sbr.rel (0) target = $region9
  $region8: #{_lambda_.22} parent=0 // pred_region
    _
  $region9: #{_lambda_.22} parent=0 // pred_fallthru
    _
  // Predicated region
  $region10: #{_lambda_.22} parent=0 // pred_check
    _
  $region11: #{_lambda_.22} parent=0 // pred_check_branch
    %13 = sbr.rel (0) target = $region13
  $region12: #{_lambda_.22} parent=0 // pred_region
    _
  $region13: #{_lambda_.22} parent=0 // pred_fallthru
    _
  %v14 = vld [vmem:[%s0] sm:$0xff]
  %v15 = vld [vmem:[%s1] sm:$0x1]
  %v17 = vlaneseq
  %v18 = vshrl.u32 %v17, 7
  %v19 = vsub.s32 0, %v18
  %v20 = vrot.slane %v15, %v19
  %v22 = vmul.f32 %v14, %v20
  %v23 = vld [vmem:[%s2] sm:$0x1]
  %v25 = vlaneseq
  %v26 = vshrl.u32 %v25, 7
  %v27 = vsub.s32 0, %v26
  %v28 = vrot.slane %v23, %v27
  %v30 = vadd.f32 %v22, %v28
  %31 = vst [vmem:[%s3] sm:$0xff] %v30
  // Predicated region
  $region14: #{_lambda_.22} parent=0 // pred_check
    _
  $region15: #{_lambda_.22} parent=0 // pred_check_branch
    %33 = sbr.rel (0) target = $region17
  $region16: #{_lambda_.22} parent=0 // pred_region
    _
  $region17: #{_lambda_.22} parent=0 // pred_fallthru
    _
  // Predicated region
  $region18: #{_lambda_.22} parent=0 // pred_check
    _
  $region19: #{_lambda_.22} parent=0 // pred_check_branch
    %35 = sbr.rel (0) target = $region21
  $region20: #{_lambda_.22} parent=0 // pred_region
    _
  $region21: #{_lambda_.22} parent=0 // pred_fallthru
    _

// kernel: tile.102
$region0: #{tile.102}
  #allocation0 [shape = 's32[1]{0}', space=sflag, size = 0x4, scoped, tag = 'scoped memory for tile.102']
  %s0 = inlined_call_operand.vmem [shape: f32[64], index: 0, kind: input, shape index: {}]
  %s1 = inlined_call_operand.vmem [shape: f32[2,64], index: 1, kind: output, shape index: {}]
  // Predicated region
  $region2: #{tile.102} parent=0 // pred_check
    _
  $region3: #{tile.102} parent=0 // pred_check_branch
    %3 = sbr.rel (0) target = $region5
  $region4: #{tile.102} parent=0 // pred_region
    _
  $region5: #{tile.102} parent=0 // pred_fallthru
    _
  %v4 = vld [vmem:[%s0] ss:$0 sm:$0xff]
  %5 = vst [vmem:[%s1] sm:$0x3] %v4

// kernel: tile.103
$region0: #{tile.103}
  %s0 = inlined_call_operand.vmem [shape: f32[2,64], index: 0, kind: input, shape index: {}]
  %s1 = inlined_call_operand.vmem [shape: f32[1,128], index: 1, kind: output, shape index: {}]
  $region1: #{tile.103} parent=0
    #allocation0 [shape = 'u8[4096]{0}', space=vmem, size = 0x1000, scoped, tag = 'scoped mem for output reshape']
    #allocation1 [shape = 'u8[4096]{0}', space=vmem, size = 0x1000, scoped, tag = 'scoped mem for input reshape']
    %s3 = sshllo.u32 0, 2
    %v4 = vld [vmem:[%s0] sm:%s3]
    %5 = vst [vmem:[#allocation1] sm:%s3] %v4
    %v6 = vld [vmem:[#allocation1] sm:$0x1]
    %vm7 = vcmask 523264
    %8 = vst.msk [vmem:[#allocation0] sm:$0x1] %vm7, %v6
    %s9 = scalar_lea.vmem [#allocation1], 1
    %v10 = vld [vmem:[%s9] sm:$0x1]
    %11 = vrot.lane.b32.xlu0 %v10, 64
    %v12 = vpop.permute.xlu0 %11
    %vm13 = vcmask 1048064
    %14 = vst.msk [vmem:[#allocation0] sm:$0x1] %vm13, %v12
    %s16 = sshllo.u32 0, 1
    %v18 = vld [vmem:[#allocation0] sm:%s16]
    %s19 = sshllo.u32 0, 1
    %20 = vst [vmem:[%s1] sm:%s19] %v18

// kernel: _lambda_.23
$region0: #{_lambda_.23}
  #allocation0 [shape = 'u32[]', space=smem, size = 0x4, offset = 0x4, fixed_abs, tag = 'smem constant byte address 0x4 - core index']
  #allocation1 [shape = 'u32[144,128]{1,0:T(1,128)}', space=vmem, size = 0x12000, scoped, tag = 'internal scratch']
  %s0 = inlined_call_operand.vmem [shape: f32[8,512], index: 0, kind: input, shape index: {}]
  %s1 = inlined_call_operand.vmem [shape: f32[512,128], index: 1, kind: input, shape index: {}]
  %s2 = inlined_call_operand.vmem [shape: f32[8,128], index: 2, kind: output, shape index: {}]
  %s3 = sld [smem:[#allocation0]]
  $region18: #{_lambda_.23} parent=0
    _
  %s5 = ssub.s32 1, %s3
  %s6 = scalar_select 0, %s5, %s3
  // Predicated region
  $region2: #{_lambda_.23} parent=0 // pred_check
    _
  $region3: #{_lambda_.23} parent=0 // pred_check_branch
    %8 = sbr.rel (0) target = $region5
  $region4: #{_lambda_.23} parent=0 // pred_region
    _
  $region5: #{_lambda_.23} parent=0 // pred_fallthru
    _
  // Predicated region
  $region6: #{_lambda_.23} parent=0 // pred_check
    _
  $region7: #{_lambda_.23} parent=0 // pred_check_branch
    %10 = sbr.rel (0) target = $region9
  $region8: #{_lambda_.23} parent=0 // pred_region
    _
  $region9: #{_lambda_.23} parent=0 // pred_fallthru
    _
  %v11 = vld [vmem:[%s0] sm:$0xff]
  %v12 = vld [vmem:[%s0 + $0x8] sm:$0xff]
  %v13 = vld [vmem:[%s0 + $0x10] sm:$0xff]
  %v14 = vld [vmem:[%s0 + $0x18] sm:$0xff]
  %v15 = vld [vmem:[%s1] sm:$0xff]
  %v16 = vld [vmem:[%s1 + $0x8] sm:$0xff]
  %v17 = vld [vmem:[%s1 + $0x10] sm:$0xff]
  %v18 = vld [vmem:[%s1 + $0x18] sm:$0xff]
  %v19 = vld [vmem:[%s1 + $0x20] sm:$0xff]
  %v20 = vld [vmem:[%s1 + $0x28] sm:$0xff]
  %v21 = vld [vmem:[%s1 + $0x30] sm:$0xff]
  %v22 = vld [vmem:[%s1 + $0x38] sm:$0xff]
  %v23 = vld [vmem:[%s1 + $0x40] sm:$0xff]
  %v24 = vld [vmem:[%s1 + $0x48] sm:$0xff]
  %v25 = vld [vmem:[%s1 + $0x50] sm:$0xff]
  %v26 = vld [vmem:[%s1 + $0x58] sm:$0xff]
  %v27 = vld [vmem:[%s1 + $0x60] sm:$0xff]
  %v28 = vld [vmem:[%s1 + $0x68] sm:$0xff]
  %v29 = vld [vmem:[%s1 + $0x70] sm:$0xff]
  %v30 = vld [vmem:[%s1 + $0x78] sm:$0xff]
  %v31 = vld [vmem:[%s1 + $0x80] sm:$0xff]
  %v32 = vld [vmem:[%s1 + $0x88] sm:$0xff]
  %v33 = vld [vmem:[%s1 + $0x90] sm:$0xff]
  %v34 = vld [vmem:[%s1 + $0x98] sm:$0xff]
  %v35 = vld [vmem:[%s1 + $0xa0] sm:$0xff]
  %v36 = vld [vmem:[%s1 + $0xa8] sm:$0xff]
  %v37 = vld [vmem:[%s1 + $0xb0] sm:$0xff]
  %v38 = vld [vmem:[%s1 + $0xb8] sm:$0xff]
  %v39 = vld [vmem:[%s1 + $0xc0] sm:$0xff]
  %v40 = vld [vmem:[%s1 + $0xc8] sm:$0xff]
  %v41 = vld [vmem:[%s1 + $0xd0] sm:$0xff]
  %v42 = vld [vmem:[%s1 + $0xd8] sm:$0xff]
  %v43 = vld [vmem:[%s1 + $0xe0] sm:$0xff]
  %v44 = vld [vmem:[%s1 + $0xe8] sm:$0xff]
  %v45 = vld [vmem:[%s1 + $0xf0] sm:$0xff]
  %v46 = vld [vmem:[%s1 + $0xf8] sm:$0xff]
  %v47 = vld [vmem:[%s1 + $0x100] sm:$0xff]
  %v48 = vld [vmem:[%s1 + $0x108] sm:$0xff]
  %v49 = vld [vmem:[%s1 + $0x110] sm:$0xff]
  %v50 = vld [vmem:[%s1 + $0x118] sm:$0xff]
  %v51 = vld [vmem:[%s1 + $0x120] sm:$0xff]
  %v52 = vld [vmem:[%s1 + $0x128] sm:$0xff]
  %v53 = vld [vmem:[%s1 + $0x130] sm:$0xff]
  %v54 = vld [vmem:[%s1 + $0x138] sm:$0xff]
  %v55 = vld [vmem:[%s1 + $0x140] sm:$0xff]
  %v56 = vld [vmem:[%s1 + $0x148] sm:$0xff]
  %v57 = vld [vmem:[%s1 + $0x150] sm:$0xff]
  %v58 = vld [vmem:[%s1 + $0x158] sm:$0xff]
  %v59 = vld [vmem:[%s1 + $0x160] sm:$0xff]
  %v60 = vld [vmem:[%s1 + $0x168] sm:$0xff]
  %v61 = vld [vmem:[%s1 + $0x170] sm:$0xff]
  %v62 = vld [vmem:[%s1 + $0x178] sm:$0xff]
  %v63 = vld [vmem:[%s1 + $0x180] sm:$0xff]
  %v64 = vld [vmem:[%s1 + $0x188] sm:$0xff]
  %v65 = vld [vmem:[%s1 + $0x190] sm:$0xff]
  %v66 = vld [vmem:[%s1 + $0x198] sm:$0xff]
  %v67 = vld [vmem:[%s1 + $0x1a0] sm:$0xff]
  %v68 = vld [vmem:[%s1 + $0x1a8] sm:$0xff]
  %v69 = vld [vmem:[%s1 + $0x1b0] sm:$0xff]
  %v70 = vld [vmem:[%s1 + $0x1b8] sm:$0xff]
  %v71 = vld [vmem:[%s1 + $0x1c0] sm:$0xff]
  %v72 = vld [vmem:[%s1 + $0x1c8] sm:$0xff]
  %v73 = vld [vmem:[%s1 + $0x1d0] sm:$0xff]
  %v74 = vld [vmem:[%s1 + $0x1d8] sm:$0xff]
  %v75 = vld [vmem:[%s1 + $0x1e0] sm:$0xff]
  %v76 = vld [vmem:[%s1 + $0x1e8] sm:$0xff]
  %v77 = vld [vmem:[%s1 + $0x1f0] sm:$0xff]
  %v78 = vld [vmem:[%s1 + $0x1f8] sm:$0xff]
  %79 = vmatprep.subr.mxu0 0.0
  %80 = vmatpush1.msra.mxu0 %v15
  %81 = vmatprep.subr.mxu0 0.0
  %82 = vmatpush1.msra.mxu0 %v16
  %83 = vmatprep.subr.mxu0 0.0
  %84 = vmatpush1.msra.mxu0 %v17
  %85 = vmatprep.subr.mxu0 0.0
  %86 = vmatpush1.msra.mxu0 %v18
  %87 = vmatprep.subr.mxu0 0.0
  %88 = vmatpush1.msra.mxu0 %v19
  %89 = vmatprep.subr.mxu0 0.0
  %90 = vmatpush1.msra.mxu0 %v20
  %91 = vmatprep.subr.mxu0 0.0
  %92 = vmatpush1.msra.mxu0 %v21
  %93 = vmatprep.subr.mxu0 0.0
  %94 = vmatpush1.msra.mxu0 %v22
  %95 = vmatprep.subr.mxu0 0.0
  %96 = vmatpush1.msra.mxu0 %v23
  %97 = vmatprep.subr.mxu0 0.0
  %98 = vmatpush1.msra.mxu0 %v24
  %99 = vmatprep.subr.mxu0 0.0
  %100 = vmatpush1.msra.mxu0 %v25
  %101 = vmatprep.subr.mxu0 0.0
  %102 = vmatpush1.msra.mxu0 %v26
  %103 = vmatprep.subr.mxu0 0.0
  %104 = vmatpush1.msra.mxu0 %v27
  %105 = vmatprep.subr.mxu0 0.0
  %106 = vmatpush1.msra.mxu0 %v28
  %107 = vmatprep.subr.mxu0 0.0
  %108 = vmatpush1.msra.mxu0 %v29
  %109 = vmatprep.subr.mxu0 0.0
  %110 = vmatpush1.msra.mxu0 %v30
  %111 = vmatprep.subr.mxu0 0.0
  %112 = vmatpush1.msra.mxu0 %v31
  %113 = vmatprep.subr.mxu0 0.0
  %114 = vmatpush1.msra.mxu0 %v32
  %115 = vmatprep.subr.mxu0 0.0
  %116 = vmatpush1.msra.mxu0 %v33
  %117 = vmatprep.subr.mxu0 0.0
  %118 = vmatpush1.msra.mxu0 %v34
  %119 = vmatprep.subr.mxu0 0.0
  %120 = vmatpush1.msra.mxu0 %v35
  %121 = vmatprep.subr.mxu0 0.0
  %122 = vmatpush1.msra.mxu0 %v36
  %123 = vmatprep.subr.mxu0 0.0
  %124 = vmatpush1.msra.mxu0 %v37
  %125 = vmatprep.subr.mxu0 0.0
  %126 = vmatpush1.msra.mxu0 %v38
  %127 = vmatprep.subr.mxu0 0.0
  %128 = vmatpush1.msra.mxu0 %v39
  %129 = vmatprep.subr.mxu0 0.0
  %130 = vmatpush1.msra.mxu0 %v40
  %131 = vmatprep.subr.mxu0 0.0
  %132 = vmatpush1.msra.mxu0 %v41
  %133 = vmatprep.subr.mxu0 0.0
  %134 = vmatpush1.msra.mxu0 %v42
  %135 = vmatprep.subr.mxu0 0.0
  %136 = vmatpush1.msra.mxu0 %v43
  %137 = vmatprep.subr.mxu0 0.0
  %138 = vmatpush1.msra.mxu0 %v44
  %139 = vmatprep.subr.mxu0 0.0
  %140 = vmatpush1.msra.mxu0 %v45
  %141 = vmatprep.subr.mxu0 0.0
  %142 = vmatpush1.msra.mxu0 %v46
  %143 = vmatprep.mubr.f32.mxu0 %v12
  %144 = vmatmul.mubr.f32.gmra.mrb[0].mxu0 %v11
  %v145 = vpop.f32.mrb[0].mxu0
  %v146 = vadd.f32 0.0, %v145
  %v147 = vpop.f32.mrb[0].mxu0
  %148 = vdwg.mxu0
  %149 = vmatprep.subr.mxu0 0.0
  %150 = vmatpush1.msra.mxu0 %v47
  %151 = vmatprep.subr.mxu0 0.0
  %152 = vmatpush1.msra.mxu0 %v48
  %153 = vmatprep.subr.mxu0 0.0
  %154 = vmatpush1.msra.mxu0 %v49
  %155 = vmatprep.subr.mxu0 0.0
  %156 = vmatpush1.msra.mxu0 %v50
  %157 = vmatprep.subr.mxu0 0.0
  %158 = vmatpush1.msra.mxu0 %v51
  %159 = vmatprep.subr.mxu0 0.0
  %160 = vmatpush1.msra.mxu0 %v52
  %161 = vmatprep.subr.mxu0 0.0
  %162 = vmatpush1.msra.mxu0 %v53
  %163 = vmatprep.subr.mxu0 0.0
  %164 = vmatpush1.msra.mxu0 %v54
  %165 = vmatprep.subr.mxu0 0.0
  %166 = vmatpush1.msra.mxu0 %v55
  %167 = vmatprep.subr.mxu0 0.0
  %168 = vmatpush1.msra.mxu0 %v56
  %169 = vmatprep.subr.mxu0 0.0
  %170 = vmatpush1.msra.mxu0 %v57
  %171 = vmatprep.subr.mxu0 0.0
  %172 = vmatpush1.msra.mxu0 %v58
  %173 = vmatprep.subr.mxu0 0.0
  %174 = vmatpush1.msra.mxu0 %v59
  %175 = vmatprep.subr.mxu0 0.0
  %176 = vmatpush1.msra.mxu0 %v60
  %177 = vmatprep.subr.mxu0 0.0
  %178 = vmatpush1.msra.mxu0 %v61
  %179 = vmatprep.subr.mxu0 0.0
  %180 = vmatpush1.msra.mxu0 %v62
  %181 = vmatprep.subr.mxu0 0.0
  %182 = vmatpush1.msra.mxu0 %v63
  %183 = vmatprep.subr.mxu0 0.0
  %184 = vmatpush1.msra.mxu0 %v64
  %185 = vmatprep.subr.mxu0 0.0
  %186 = vmatpush1.msra.mxu0 %v65
  %187 = vmatprep.subr.mxu0 0.0
  %188 = vmatpush1.msra.mxu0 %v66
  %189 = vmatprep.subr.mxu0 0.0
  %190 = vmatpush1.msra.mxu0 %v67
  %191 = vmatprep.subr.mxu0 0.0
  %192 = vmatpush1.msra.mxu0 %v68
  %193 = vmatprep.subr.mxu0 0.0
  %194 = vmatpush1.msra.mxu0 %v69
  %195 = vmatprep.subr.mxu0 0.0
  %196 = vmatpush1.msra.mxu0 %v70
  %197 = vmatprep.subr.mxu0 0.0
  %198 = vmatpush1.msra.mxu0 %v71
  %199 = vmatprep.subr.mxu0 0.0
  %200 = vmatpush1.msra.mxu0 %v72
  %201 = vmatprep.subr.mxu0 0.0
  %202 = vmatpush1.msra.mxu0 %v73
  %203 = vmatprep.subr.mxu0 0.0
  %204 = vmatpush1.msra.mxu0 %v74
  %205 = vmatprep.subr.mxu0 0.0
  %206 = vmatpush1.msra.mxu0 %v75
  %207 = vmatprep.subr.mxu0 0.0
  %208 = vmatpush1.msra.mxu0 %v76
  %209 = vmatprep.subr.mxu0 0.0
  %210 = vmatpush1.msra.mxu0 %v77
  %211 = vmatprep.subr.mxu0 0.0
  %212 = vmatpush1.msra.mxu0 %v78
  %213 = vmatprep.mubr.f32.mxu0 %v14
  %214 = vmatmul.mubr.f32.gmra.mrb[0].mxu0 %v13
  %v215 = vpop.f32.mrb[0].mxu0
  %v216 = vadd.f32 %v146, %v215
  %v217 = vpop.f32.mrb[0].mxu0
  %218 = vdwg.mxu0
  %219 = vst [vmem:[%s2] sm:$0xff] %v216
  // Predicated region
  $region10: #{_lambda_.23} parent=0 // pred_check
    _
  $region11: #{_lambda_.23} parent=0 // pred_check_branch
    %221 = sbr.rel (0) target = $region13
  $region12: #{_lambda_.23} parent=0 // pred_region
    _
  $region13: #{_lambda_.23} parent=0 // pred_fallthru
    _
  // Predicated region
  $region14: #{_lambda_.23} parent=0 // pred_check
    _
  $region15: #{_lambda_.23} parent=0 // pred_check_branch
    %223 = sbr.rel (0) target = $region17
  $region16: #{_lambda_.23} parent=0 // pred_region
    _
  $region17: #{_lambda_.23} parent=0 // pred_fallthru
    _

// kernel: _lambda_.25
$region0: #{_lambda_.25}
  #allocation0 [shape = 'u32[]', space=smem, size = 0x4, offset = 0x4, fixed_abs, tag = 'smem constant byte address 0x4 - core index']
  #allocation1 [shape = 'u32[144,128]{1,0:T(1,128)}', space=vmem, size = 0x12000, scoped, tag = 'internal scratch']
  %s0 = inlined_call_operand.vmem [shape: f32[8,1024], index: 0, kind: input, shape index: {}]
  %s1 = inlined_call_operand.vmem [shape: f32[1024,128], index: 1, kind: input, shape index: {}]
  %s2 = inlined_call_operand.vmem [shape: f32[8,128], index: 2, kind: output, shape index: {}]
  %s3 = sld [smem:[#allocation0]]
  $region18: #{_lambda_.25} parent=0
    _
  %s5 = ssub.s32 1, %s3
  %s6 = scalar_select 0, %s5, %s3
  // Predicated region
  $region2: #{_lambda_.25} parent=0 // pred_check
    _
  $region3: #{_lambda_.25} parent=0 // pred_check_branch
    %8 = sbr.rel (0) target = $region5
  $region4: #{_lambda_.25} parent=0 // pred_region
    _
  $region5: #{_lambda_.25} parent=0 // pred_fallthru
    _
  // Predicated region
  $region6: #{_lambda_.25} parent=0 // pred_check
    _
  $region7: #{_lambda_.25} parent=0 // pred_check_branch
    %10 = sbr.rel (0) target = $region9
  $region8: #{_lambda_.25} parent=0 // pred_region
    _
  $region9: #{_lambda_.25} parent=0 // pred_fallthru
    _
  %v11 = vld [vmem:[%s0] sm:$0xff]
  %v12 = vld [vmem:[%s0 + $0x8] sm:$0xff]
  %v13 = vld [vmem:[%s0 + $0x10] sm:$0xff]
  %v14 = vld [vmem:[%s0 + $0x18] sm:$0xff]
  %v15 = vld [vmem:[%s0 + $0x20] sm:$0xff]
  %v16 = vld [vmem:[%s0 + $0x28] sm:$0xff]
  %v17 = vld [vmem:[%s0 + $0x30] sm:$0xff]
  %v18 = vld [vmem:[%s0 + $0x38] sm:$0xff]
  %v19 = vld [vmem:[%s1] sm:$0xff]
  %v20 = vld [vmem:[%s1 + $0x8] sm:$0xff]
  %v21 = vld [vmem:[%s1 + $0x10] sm:$0xff]
  %v22 = vld [vmem:[%s1 + $0x18] sm:$0xff]
  %v23 = vld [vmem:[%s1 + $0x20] sm:$0xff]
  %v24 = vld [vmem:[%s1 + $0x28] sm:$0xff]
  %v25 = vld [vmem:[%s1 + $0x30] sm:$0xff]
  %v26 = vld [vmem:[%s1 + $0x38] sm:$0xff]
  %v27 = vld [vmem:[%s1 + $0x40] sm:$0xff]
  %v28 = vld [vmem:[%s1 + $0x48] sm:$0xff]
  %v29 = vld [vmem:[%s1 + $0x50] sm:$0xff]
  %v30 = vld [vmem:[%s1 + $0x58] sm:$0xff]
  %v31 = vld [vmem:[%s1 + $0x60] sm:$0xff]
  %v32 = vld [vmem:[%s1 + $0x68] sm:$0xff]
  %v33 = vld [vmem:[%s1 + $0x70] sm:$0xff]
  %v34 = vld [vmem:[%s1 + $0x78] sm:$0xff]
  %v35 = vld [vmem:[%s1 + $0x80] sm:$0xff]
  %v36 = vld [vmem:[%s1 + $0x88] sm:$0xff]
  %v37 = vld [vmem:[%s1 + $0x90] sm:$0xff]
  %v38 = vld [vmem:[%s1 + $0x98] sm:$0xff]
  %v39 = vld [vmem:[%s1 + $0xa0] sm:$0xff]
  %v40 = vld [vmem:[%s1 + $0xa8] sm:$0xff]
  %v41 = vld [vmem:[%s1 + $0xb0] sm:$0xff]
  %v42 = vld [vmem:[%s1 + $0xb8] sm:$0xff]
  %v43 = vld [vmem:[%s1 + $0xc0] sm:$0xff]
  %v44 = vld [vmem:[%s1 + $0xc8] sm:$0xff]
  %v45 = vld [vmem:[%s1 + $0xd0] sm:$0xff]
  %v46 = vld [vmem:[%s1 + $0xd8] sm:$0xff]
  %v47 = vld [vmem:[%s1 + $0xe0] sm:$0xff]
  %v48 = vld [vmem:[%s1 + $0xe8] sm:$0xff]
  %v49 = vld [vmem:[%s1 + $0xf0] sm:$0xff]
  %v50 = vld [vmem:[%s1 + $0xf8] sm:$0xff]
  %v51 = vld [vmem:[%s1 + $0x100] sm:$0xff]
  %v52 = vld [vmem:[%s1 + $0x108] sm:$0xff]
  %v53 = vld [vmem:[%s1 + $0x110] sm:$0xff]
  %v54 = vld [vmem:[%s1 + $0x118] sm:$0xff]
  %v55 = vld [vmem:[%s1 + $0x120] sm:$0xff]
  %v56 = vld [vmem:[%s1 + $0x128] sm:$0xff]
  %v57 = vld [vmem:[%s1 + $0x130] sm:$0xff]
  %v58 = vld [vmem:[%s1 + $0x138] sm:$0xff]
  %v59 = vld [vmem:[%s1 + $0x140] sm:$0xff]
  %v60 = vld [vmem:[%s1 + $0x148] sm:$0xff]
  %v61 = vld [vmem:[%s1 + $0x150] sm:$0xff]
  %v62 = vld [vmem:[%s1 + $0x158] sm:$0xff]
  %v63 = vld [vmem:[%s1 + $0x160] sm:$0xff]
  %v64 = vld [vmem:[%s1 + $0x168] sm:$0xff]
  %v65 = vld [vmem:[%s1 + $0x170] sm:$0xff]
  %v66 = vld [vmem:[%s1 + $0x178] sm:$0xff]
  %v67 = vld [vmem:[%s1 + $0x180] sm:$0xff]
  %v68 = vld [vmem:[%s1 + $0x188] sm:$0xff]
  %v69 = vld [vmem:[%s1 + $0x190] sm:$0xff]
  %v70 = vld [vmem:[%s1 + $0x198] sm:$0xff]
  %v71 = vld [vmem:[%s1 + $0x1a0] sm:$0xff]
  %v72 = vld [vmem:[%s1 + $0x1a8] sm:$0xff]
  %v73 = vld [vmem:[%s1 + $0x1b0] sm:$0xff]
  %v74 = vld [vmem:[%s1 + $0x1b8] sm:$0xff]
  %v75 = vld [vmem:[%s1 + $0x1c0] sm:$0xff]
  %v76 = vld [vmem:[%s1 + $0x1c8] sm:$0xff]
  %v77 = vld [vmem:[%s1 + $0x1d0] sm:$0xff]
  %v78 = vld [vmem:[%s1 + $0x1d8] sm:$0xff]
  %v79 = vld [vmem:[%s1 + $0x1e0] sm:$0xff]
  %v80 = vld [vmem:[%s1 + $0x1e8] sm:$0xff]
  %v81 = vld [vmem:[%s1 + $0x1f0] sm:$0xff]
  %v82 = vld [vmem:[%s1 + $0x1f8] sm:$0xff]
  %v83 = vld [vmem:[%s1 + $0x200] sm:$0xff]
  %v84 = vld [vmem:[%s1 + $0x208] sm:$0xff]
  %v85 = vld [vmem:[%s1 + $0x210] sm:$0xff]
  %v86 = vld [vmem:[%s1 + $0x218] sm:$0xff]
  %v87 = vld [vmem:[%s1 + $0x220] sm:$0xff]
  %v88 = vld [vmem:[%s1 + $0x228] sm:$0xff]
  %v89 = vld [vmem:[%s1 + $0x230] sm:$0xff]
  %v90 = vld [vmem:[%s1 + $0x238] sm:$0xff]
  %v91 = vld [vmem:[%s1 + $0x240] sm:$0xff]
  %v92 = vld [vmem:[%s1 + $0x248] sm:$0xff]
  %v93 = vld [vmem:[%s1 + $0x250] sm:$0xff]
  %v94 = vld [vmem:[%s1 + $0x258] sm:$0xff]
  %v95 = vld [vmem:[%s1 + $0x260] sm:$0xff]
  %v96 = vld [vmem:[%s1 + $0x268] sm:$0xff]
  %v97 = vld [vmem:[%s1 + $0x270] sm:$0xff]
  %v98 = vld [vmem:[%s1 + $0x278] sm:$0xff]
  %v99 = vld [vmem:[%s1 + $0x280] sm:$0xff]
  %v100 = vld [vmem:[%s1 + $0x288] sm:$0xff]
  %v101 = vld [vmem:[%s1 + $0x290] sm:$0xff]
  %v102 = vld [vmem:[%s1 + $0x298] sm:$0xff]
  %v103 = vld [vmem:[%s1 + $0x2a0] sm:$0xff]
  %v104 = vld [vmem:[%s1 + $0x2a8] sm:$0xff]
  %v105 = vld [vmem:[%s1 + $0x2b0] sm:$0xff]
  %v106 = vld [vmem:[%s1 + $0x2b8] sm:$0xff]
  %v107 = vld [vmem:[%s1 + $0x2c0] sm:$0xff]
  %v108 = vld [vmem:[%s1 + $0x2c8] sm:$0xff]
  %v109 = vld [vmem:[%s1 + $0x2d0] sm:$0xff]
  %v110 = vld [vmem:[%s1 + $0x2d8] sm:$0xff]
  %v111 = vld [vmem:[%s1 + $0x2e0] sm:$0xff]
  %v112 = vld [vmem:[%s1 + $0x2e8] sm:$0xff]
  %v113 = vld [vmem:[%s1 + $0x2f0] sm:$0xff]
  %v114 = vld [vmem:[%s1 + $0x2f8] sm:$0xff]
  %v115 = vld [vmem:[%s1 + $0x300] sm:$0xff]
  %v116 = vld [vmem:[%s1 + $0x308] sm:$0xff]
  %v117 = vld [vmem:[%s1 + $0x310] sm:$0xff]
  %v118 = vld [vmem:[%s1 + $0x318] sm:$0xff]
  %v119 = vld [vmem:[%s1 + $0x320] sm:$0xff]
  %v120 = vld [vmem:[%s1 + $0x328] sm:$0xff]
  %v121 = vld [vmem:[%s1 + $0x330] sm:$0xff]
  %v122 = vld [vmem:[%s1 + $0x338] sm:$0xff]
  %v123 = vld [vmem:[%s1 + $0x340] sm:$0xff]
  %v124 = vld [vmem:[%s1 + $0x348] sm:$0xff]
  %v125 = vld [vmem:[%s1 + $0x350] sm:$0xff]
  %v126 = vld [vmem:[%s1 + $0x358] sm:$0xff]
  %v127 = vld [vmem:[%s1 + $0x360] sm:$0xff]
  %v128 = vld [vmem:[%s1 + $0x368] sm:$0xff]
  %v129 = vld [vmem:[%s1 + $0x370] sm:$0xff]
  %v130 = vld [vmem:[%s1 + $0x378] sm:$0xff]
  %v131 = vld [vmem:[%s1 + $0x380] sm:$0xff]
  %v132 = vld [vmem:[%s1 + $0x388] sm:$0xff]
  %v133 = vld [vmem:[%s1 + $0x390] sm:$0xff]
  %v134 = vld [vmem:[%s1 + $0x398] sm:$0xff]
  %v135 = vld [vmem:[%s1 + $0x3a0] sm:$0xff]
  %v136 = vld [vmem:[%s1 + $0x3a8] sm:$0xff]
  %v137 = vld [vmem:[%s1 + $0x3b0] sm:$0xff]
  %v138 = vld [vmem:[%s1 + $0x3b8] sm:$0xff]
  %v139 = vld [vmem:[%s1 + $0x3c0] sm:$0xff]
  %v140 = vld [vmem:[%s1 + $0x3c8] sm:$0xff]
  %v141 = vld [vmem:[%s1 + $0x3d0] sm:$0xff]
  %v142 = vld [vmem:[%s1 + $0x3d8] sm:$0xff]
  %v143 = vld [vmem:[%s1 + $0x3e0] sm:$0xff]
  %v144 = vld [vmem:[%s1 + $0x3e8] sm:$0xff]
  %v145 = vld [vmem:[%s1 + $0x3f0] sm:$0xff]
  %v146 = vld [vmem:[%s1 + $0x3f8] sm:$0xff]
  %147 = vmatprep.subr.mxu0 0.0
  %148 = vmatpush1.msra.mxu0 %v19
  %149 = vmatprep.subr.mxu0 0.0
  %150 = vmatpush1.msra.mxu0 %v20
  %151 = vmatprep.subr.mxu0 0.0
  %152 = vmatpush1.msra.mxu0 %v21
  %153 = vmatprep.subr.mxu0 0.0
  %154 = vmatpush1.msra.mxu0 %v22
  %155 = vmatprep.subr.mxu0 0.0
  %156 = vmatpush1.msra.mxu0 %v23
  %157 = vmatprep.subr.mxu0 0.0
  %158 = vmatpush1.msra.mxu0 %v24
  %159 = vmatprep.subr.mxu0 0.0
  %160 = vmatpush1.msra.mxu0 %v25
  %161 = vmatprep.subr.mxu0 0.0
  %162 = vmatpush1.msra.mxu0 %v26
  %163 = vmatprep.subr.mxu0 0.0
  %164 = vmatpush1.msra.mxu0 %v27
  %165 = vmatprep.subr.mxu0 0.0
  %166 = vmatpush1.msra.mxu0 %v28
  %167 = vmatprep.subr.mxu0 0.0
  %168 = vmatpush1.msra.mxu0 %v29
  %169 = vmatprep.subr.mxu0 0.0
  %170 = vmatpush1.msra.mxu0 %v30
  %171 = vmatprep.subr.mxu0 0.0
  %172 = vmatpush1.msra.mxu0 %v31
  %173 = vmatprep.subr.mxu0 0.0
  %174 = vmatpush1.msra.mxu0 %v32
  %175 = vmatprep.subr.mxu0 0.0
  %176 = vmatpush1.msra.mxu0 %v33
  %177 = vmatprep.subr.mxu0 0.0
  %178 = vmatpush1.msra.mxu0 %v34
  %179 = vmatprep.subr.mxu0 0.0
  %180 = vmatpush1.msra.mxu0 %v35
  %181 = vmatprep.subr.mxu0 0.0
  %182 = vmatpush1.msra.mxu0 %v36
  %183 = vmatprep.subr.mxu0 0.0
  %184 = vmatpush1.msra.mxu0 %v37
  %185 = vmatprep.subr.mxu0 0.0
  %186 = vmatpush1.msra.mxu0 %v38
  %187 = vmatprep.subr.mxu0 0.0
  %188 = vmatpush1.msra.mxu0 %v39
  %189 = vmatprep.subr.mxu0 0.0
  %190 = vmatpush1.msra.mxu0 %v40
  %191 = vmatprep.subr.mxu0 0.0
  %192 = vmatpush1.msra.mxu0 %v41
  %193 = vmatprep.subr.mxu0 0.0
  %194 = vmatpush1.msra.mxu0 %v42
  %195 = vmatprep.subr.mxu0 0.0
  %196 = vmatpush1.msra.mxu0 %v43
  %197 = vmatprep.subr.mxu0 0.0
  %198 = vmatpush1.msra.mxu0 %v44
  %199 = vmatprep.subr.mxu0 0.0
  %200 = vmatpush1.msra.mxu0 %v45
  %201 = vmatprep.subr.mxu0 0.0
  %202 = vmatpush1.msra.mxu0 %v46
  %203 = vmatprep.subr.mxu0 0.0
  %204 = vmatpush1.msra.mxu0 %v47
  %205 = vmatprep.subr.mxu0 0.0
  %206 = vmatpush1.msra.mxu0 %v48
  %207 = vmatprep.subr.mxu0 0.0
  %208 = vmatpush1.msra.mxu0 %v49
  %209 = vmatprep.subr.mxu0 0.0
  %210 = vmatpush1.msra.mxu0 %v50
  %211 = vmatprep.mubr.f32.mxu0 %v12
  %212 = vmatmul.mubr.f32.gmra.mrb[0].mxu0 %v11
  %v213 = vpop.f32.mrb[0].mxu0
  %v214 = vadd.f32 0.0, %v213
  %v215 = vpop.f32.mrb[0].mxu0
  %216 = vdwg.mxu0
  %217 = vmatprep.subr.mxu0 0.0
  %218 = vmatpush1.msra.mxu0 %v51
  %219 = vmatprep.subr.mxu0 0.0
  %220 = vmatpush1.msra.mxu0 %v52
  %221 = vmatprep.subr.mxu0 0.0
  %222 = vmatpush1.msra.mxu0 %v53
  %223 = vmatprep.subr.mxu0 0.0
  %224 = vmatpush1.msra.mxu0 %v54
  %225 = vmatprep.subr.mxu0 0.0
  %226 = vmatpush1.msra.mxu0 %v55
  %227 = vmatprep.subr.mxu0 0.0
  %228 = vmatpush1.msra.mxu0 %v56
  %229 = vmatprep.subr.mxu0 0.0
  %230 = vmatpush1.msra.mxu0 %v57
  %231 = vmatprep.subr.mxu0 0.0
  %232 = vmatpush1.msra.mxu0 %v58
  %233 = vmatprep.subr.mxu0 0.0
  %234 = vmatpush1.msra.mxu0 %v59
  %235 = vmatprep.subr.mxu0 0.0
  %236 = vmatpush1.msra.mxu0 %v60
  %237 = vmatprep.subr.mxu0 0.0
  %238 = vmatpush1.msra.mxu0 %v61
  %239 = vmatprep.subr.mxu0 0.0
  %240 = vmatpush1.msra.mxu0 %v62
  %241 = vmatprep.subr.mxu0 0.0
  %242 = vmatpush1.msra.mxu0 %v63
  %243 = vmatprep.subr.mxu0 0.0
  %244 = vmatpush1.msra.mxu0 %v64
  %245 = vmatprep.subr.mxu0 0.0
  %246 = vmatpush1.msra.mxu0 %v65
  %247 = vmatprep.subr.mxu0 0.0
  %248 = vmatpush1.msra.mxu0 %v66
  %249 = vmatprep.subr.mxu0 0.0
  %250 = vmatpush1.msra.mxu0 %v67
  %251 = vmatprep.subr.mxu0 0.0
  %252 = vmatpush1.msra.mxu0 %v68
  %253 = vmatprep.subr.mxu0 0.0
  %254 = vmatpush1.msra.mxu0 %v69
  %255 = vmatprep.subr.mxu0 0.0
  %256 = vmatpush1.msra.mxu0 %v70
  %257 = vmatprep.subr.mxu0 0.0
  %258 = vmatpush1.msra.mxu0 %v71
  %259 = vmatprep.subr.mxu0 0.0
  %260 = vmatpush1.msra.mxu0 %v72
  %261 = vmatprep.subr.mxu0 0.0
  %262 = vmatpush1.msra.mxu0 %v73
  %263 = vmatprep.subr.mxu0 0.0
  %264 = vmatpush1.msra.mxu0 %v74
  %265 = vmatprep.subr.mxu0 0.0
  %266 = vmatpush1.msra.mxu0 %v75
  %267 = vmatprep.subr.mxu0 0.0
  %268 = vmatpush1.msra.mxu0 %v76
  %269 = vmatprep.subr.mxu0 0.0
  %270 = vmatpush1.msra.mxu0 %v77
  %271 = vmatprep.subr.mxu0 0.0
  %272 = vmatpush1.msra.mxu0 %v78
  %273 = vmatprep.subr.mxu0 0.0
  %274 = vmatpush1.msra.mxu0 %v79
  %275 = vmatprep.subr.mxu0 0.0
  %276 = vmatpush1.msra.mxu0 %v80
  %277 = vmatprep.subr.mxu0 0.0
  %278 = vmatpush1.msra.mxu0 %v81
  %279 = vmatprep.subr.mxu0 0.0
  %280 = vmatpush1.msra.mxu0 %v82
  %281 = vmatprep.mubr.f32.mxu0 %v14
  %282 = vmatmul.mubr.f32.gmra.mrb[0].mxu0 %v13
  %v283 = vpop.f32.mrb[0].mxu0
  %v284 = vadd.f32 %v214, %v283
  %v285 = vpop.f32.mrb[0].mxu0
  %286 = vdwg.mxu0
  %287 = vmatprep.subr.mxu0 0.0
  %288 = vmatpush1.msra.mxu0 %v83
  %289 = vmatprep.subr.mxu0 0.0
  %290 = vmatpush1.msra.mxu0 %v84
  %291 = vmatprep.subr.mxu0 0.0
  %292 = vmatpush1.msra.mxu0 %v85
  %293 = vmatprep.subr.mxu0 0.0
  %294 = vmatpush1.msra.mxu0 %v86
  %295 = vmatprep.subr.mxu0 0.0
  %296 = vmatpush1.msra.mxu0 %v87
  %297 = vmatprep.subr.mxu0 0.0
  %298 = vmatpush1.msra.mxu0 %v88
  %299 = vmatprep.subr.mxu0 0.0
  %300 = vmatpush1.msra.mxu0 %v89
  %301 = vmatprep.subr.mxu0 0.0
  %302 = vmatpush1.msra.mxu0 %v90
  %303 = vmatprep.subr.mxu0 0.0
  %304 = vmatpush1.msra.mxu0 %v91
  %305 = vmatprep.subr.mxu0 0.0
  %306 = vmatpush1.msra.mxu0 %v92
  %307 = vmatprep.subr.mxu0 0.0
  %308 = vmatpush1.msra.mxu0 %v93
  %309 = vmatprep.subr.mxu0 0.0
  %310 = vmatpush1.msra.mxu0 %v94
  %311 = vmatprep.subr.mxu0 0.0
  %312 = vmatpush1.msra.mxu0 %v95
  %313 = vmatprep.subr.mxu0 0.0
  %314 = vmatpush1.msra.mxu0 %v96
  %315 = vmatprep.subr.mxu0 0.0
  %316 = vmatpush1.msra.mxu0 %v97
  %317 = vmatprep.subr.mxu0 0.0
  %318 = vmatpush1.msra.mxu0 %v98
  %319 = vmatprep.subr.mxu0 0.0
  %320 = vmatpush1.msra.mxu0 %v99
  %321 = vmatprep.subr.mxu0 0.0
  %322 = vmatpush1.msra.mxu0 %v100
  %323 = vmatprep.subr.mxu0 0.0
  %324 = vmatpush1.msra.mxu0 %v101
  %325 = vmatprep.subr.mxu0 0.0
  %326 = vmatpush1.msra.mxu0 %v102
  %327 = vmatprep.subr.mxu0 0.0
  %328 = vmatpush1.msra.mxu0 %v103
  %329 = vmatprep.subr.mxu0 0.0
  %330 = vmatpush1.msra.mxu0 %v104
  %331 = vmatprep.subr.mxu0 0.0
  %332 = vmatpush1.msra.mxu0 %v105
  %333 = vmatprep.subr.mxu0 0.0
  %334 = vmatpush1.msra.mxu0 %v106
  %335 = vmatprep.subr.mxu0 0.0
  %336 = vmatpush1.msra.mxu0 %v107
  %337 = vmatprep.subr.mxu0 0.0
  %338 = vmatpush1.msra.mxu0 %v108
  %339 = vmatprep.subr.mxu0 0.0
  %340 = vmatpush1.msra.mxu0 %v109
  %341 = vmatprep.subr.mxu0 0.0
  %342 = vmatpush1.msra.mxu0 %v110
  %343 = vmatprep.subr.mxu0 0.0
  %344 = vmatpush1.msra.mxu0 %v111
  %345 = vmatprep.subr.mxu0 0.0
  %346 = vmatpush1.msra.mxu0 %v112
  %347 = vmatprep.subr.mxu0 0.0
  %348 = vmatpush1.msra.mxu0 %v113
  %349 = vmatprep.subr.mxu0 0.0
  %350 = vmatpush1.msra.mxu0 %v114
  %351 = vmatprep.mubr.f32.mxu0 %v16
  %352 = vmatmul.mubr.f32.gmra.mrb[0].mxu0 %v15
  %v353 = vpop.f32.mrb[0].mxu0
  %v354 = vadd.f32 %v284, %v353
  %v355 = vpop.f32.mrb[0].mxu0
  %356 = vdwg.mxu0
  %357 = vmatprep.subr.mxu0 0.0
  %358 = vmatpush1.msra.mxu0 %v115
  %359 = vmatprep.subr.mxu0 0.0
  %360 = vmatpush1.msra.mxu0 %v116
  %361 = vmatprep.subr.mxu0 0.0
  %362 = vmatpush1.msra.mxu0 %v117
  %363 = vmatprep.subr.mxu0 0.0
  %364 = vmatpush1.msra.mxu0 %v118
  %365 = vmatprep.subr.mxu0 0.0
  %366 = vmatpush1.msra.mxu0 %v119
  %367 = vmatprep.subr.mxu0 0.0
  %368 = vmatpush1.msra.mxu0 %v120
  %369 = vmatprep.subr.mxu0 0.0
  %370 = vmatpush1.msra.mxu0 %v121
  %371 = vmatprep.subr.mxu0 0.0
  %372 = vmatpush1.msra.mxu0 %v122
  %373 = vmatprep.subr.mxu0 0.0
  %374 = vmatpush1.msra.mxu0 %v123
  %375 = vmatprep.subr.mxu0 0.0
  %376 = vmatpush1.msra.mxu0 %v124
  %377 = vmatprep.subr.mxu0 0.0
  %378 = vmatpush1.msra.mxu0 %v125
  %379 = vmatprep.subr.mxu0 0.0
  %380 = vmatpush1.msra.mxu0 %v126
  %381 = vmatprep.subr.mxu0 0.0
  %382 = vmatpush1.msra.mxu0 %v127
  %383 = vmatprep.subr.mxu0 0.0
  %384 = vmatpush1.msra.mxu0 %v128
  %385 = vmatprep.subr.mxu0 0.0
  %386 = vmatpush1.msra.mxu0 %v129
  %387 = vmatprep.subr.mxu0 0.0
  %388 = vmatpush1.msra.mxu0 %v130
  %389 = vmatprep.subr.mxu0 0.0
  %390 = vmatpush1.msra.mxu0 %v131
  %391 = vmatprep.subr.mxu0 0.0
  %392 = vmatpush1.msra.mxu0 %v132
  %393 = vmatprep.subr.mxu0 0.0
  %394 = vmatpush1.msra.mxu0 %v133
  %395 = vmatprep.subr.mxu0 0.0
  %396 = vmatpush1.msra.mxu0 %v134
  %397 = vmatprep.subr.mxu0 0.0
  %398 = vmatpush1.msra.mxu0 %v135
  %399 = vmatprep.subr.mxu0 0.0
  %400 = vmatpush1.msra.mxu0 %v136
  %401 = vmatprep.subr.mxu0 0.0
  %402 = vmatpush1.msra.mxu0 %v137
  %403 = vmatprep.subr.mxu0 0.0
  %404 = vmatpush1.msra.mxu0 %v138
  %405 = vmatprep.subr.mxu0 0.0
  %406 = vmatpush1.msra.mxu0 %v139
  %407 = vmatprep.subr.mxu0 0.0
  %408 = vmatpush1.msra.mxu0 %v140
  %409 = vmatprep.subr.mxu0 0.0
  %410 = vmatpush1.msra.mxu0 %v141
  %411 = vmatprep.subr.mxu0 0.0
  %412 = vmatpush1.msra.mxu0 %v142
  %413 = vmatprep.subr.mxu0 0.0
  %414 = vmatpush1.msra.mxu0 %v143
  %415 = vmatprep.subr.mxu0 0.0
  %416 = vmatpush1.msra.mxu0 %v144
  %417 = vmatprep.subr.mxu0 0.0
  %418 = vmatpush1.msra.mxu0 %v145
  %419 = vmatprep.subr.mxu0 0.0
  %420 = vmatpush1.msra.mxu0 %v146
  %421 = vmatprep.mubr.f32.mxu0 %v18
  %422 = vmatmul.mubr.f32.gmra.mrb[0].mxu0 %v17
  %v423 = vpop.f32.mrb[0].mxu0
  %v424 = vadd.f32 %v354, %v423
  %v425 = vpop.f32.mrb[0].mxu0
  %426 = vdwg.mxu0
  %427 = vst [vmem:[%s2] sm:$0xff] %v424
  // Predicated region
  $region10: #{_lambda_.25} parent=0 // pred_check
    _
  $region11: #{_lambda_.25} parent=0 // pred_check_branch
    %429 = sbr.rel (0) target = $region13
  $region12: #{_lambda_.25} parent=0 // pred_region
    _
  $region13: #{_lambda_.25} parent=0 // pred_fallthru
    _
  // Predicated region
  $region14: #{_lambda_.25} parent=0 // pred_check
    _
  $region15: #{_lambda_.25} parent=0 // pred_check_branch
    %431 = sbr.rel (0) target = $region17
  $region16: #{_lambda_.25} parent=0 // pred_region
    _
  $region17: #{_lambda_.25} parent=0 // pred_fallthru
    _

// kernel: _lambda_.26
$region0: #{_lambda_.26}
  #allocation0 [shape = 'u32[]', space=smem, size = 0x4, offset = 0x4, fixed_abs, tag = 'smem constant byte address 0x4 - core index']
  #allocation1 [shape = 'u32[144,128]{1,0:T(1,128)}', space=vmem, size = 0x12000, scoped, tag = 'internal scratch']
  %s0 = inlined_call_operand.vmem [shape: f32[8,64], index: 0, kind: input, shape index: {}]
  %s1 = inlined_call_operand.vmem [shape: f32[64,1024], index: 1, kind: input, shape index: {}]
  %s2 = inlined_call_operand.vmem [shape: f32[8,1024], index: 2, kind: output, shape index: {}]
  %s3 = sld [smem:[#allocation0]]
  $region18: #{_lambda_.26} parent=0
    _
  %s5 = ssub.s32 1, %s3
  %s6 = scalar_select 0, %s5, %s3
  // Predicated region
  $region2: #{_lambda_.26} parent=0 // pred_check
    _
  $region3: #{_lambda_.26} parent=0 // pred_check_branch
    %8 = sbr.rel (0) target = $region5
  $region4: #{_lambda_.26} parent=0 // pred_region
    _
  $region5: #{_lambda_.26} parent=0 // pred_fallthru
    _
  // Predicated region
  $region6: #{_lambda_.26} parent=0 // pred_check
    _
  $region7: #{_lambda_.26} parent=0 // pred_check_branch
    %10 = sbr.rel (0) target = $region9
  $region8: #{_lambda_.26} parent=0 // pred_region
    _
  $region9: #{_lambda_.26} parent=0 // pred_fallthru
    _
  %v11 = vld [vmem:[%s0] sm:$0xff]
  %v12 = vmax.f32 %v11, 0.0
  %v13 = vld [vmem:[%s1] sm:$0xff]
  %v14 = vld [vmem:[%s1 + $0x8] sm:$0xff]
  %v15 = vld [vmem:[%s1 + $0x10] sm:$0xff]
  %v16 = vld [vmem:[%s1 + $0x18] sm:$0xff]
  %v17 = vld [vmem:[%s1 + $0x20] sm:$0xff]
  %v18 = vld [vmem:[%s1 + $0x28] sm:$0xff]
  %v19 = vld [vmem:[%s1 + $0x30] sm:$0xff]
  %v20 = vld [vmem:[%s1 + $0x38] sm:$0xff]
  %v21 = vld [vmem:[%s1 + $0x40] sm:$0xff]
  %v22 = vld [vmem:[%s1 + $0x48] sm:$0xff]
  %v23 = vld [vmem:[%s1 + $0x50] sm:$0xff]
  %v24 = vld [vmem:[%s1 + $0x58] sm:$0xff]
  %v25 = vld [vmem:[%s1 + $0x60] sm:$0xff]
  %v26 = vld [vmem:[%s1 + $0x68] sm:$0xff]
  %v27 = vld [vmem:[%s1 + $0x70] sm:$0xff]
  %v28 = vld [vmem:[%s1 + $0x78] sm:$0xff]
  %v29 = vld [vmem:[%s1 + $0x80] sm:$0xff]
  %v30 = vld [vmem:[%s1 + $0x88] sm:$0xff]
  %v31 = vld [vmem:[%s1 + $0x90] sm:$0xff]
  %v32 = vld [vmem:[%s1 + $0x98] sm:$0xff]
  %v33 = vld [vmem:[%s1 + $0xa0] sm:$0xff]
  %v34 = vld [vmem:[%s1 + $0xa8] sm:$0xff]
  %v35 = vld [vmem:[%s1 + $0xb0] sm:$0xff]
  %v36 = vld [vmem:[%s1 + $0xb8] sm:$0xff]
  %v37 = vld [vmem:[%s1 + $0xc0] sm:$0xff]
  %v38 = vld [vmem:[%s1 + $0xc8] sm:$0xff]
  %v39 = vld [vmem:[%s1 + $0xd0] sm:$0xff]
  %v40 = vld [vmem:[%s1 + $0xd8] sm:$0xff]
  %v41 = vld [vmem:[%s1 + $0xe0] sm:$0xff]
  %v42 = vld [vmem:[%s1 + $0xe8] sm:$0xff]
  %v43 = vld [vmem:[%s1 + $0xf0] sm:$0xff]
  %v44 = vld [vmem:[%s1 + $0xf8] sm:$0xff]
  %v45 = vld [vmem:[%s1 + $0x100] sm:$0xff]
  %v46 = vld [vmem:[%s1 + $0x108] sm:$0xff]
  %v47 = vld [vmem:[%s1 + $0x110] sm:$0xff]
  %v48 = vld [vmem:[%s1 + $0x118] sm:$0xff]
  %v49 = vld [vmem:[%s1 + $0x120] sm:$0xff]
  %v50 = vld [vmem:[%s1 + $0x128] sm:$0xff]
  %v51 = vld [vmem:[%s1 + $0x130] sm:$0xff]
  %v52 = vld [vmem:[%s1 + $0x138] sm:$0xff]
  %v53 = vld [vmem:[%s1 + $0x140] sm:$0xff]
  %v54 = vld [vmem:[%s1 + $0x148] sm:$0xff]
  %v55 = vld [vmem:[%s1 + $0x150] sm:$0xff]
  %v56 = vld [vmem:[%s1 + $0x158] sm:$0xff]
  %v57 = vld [vmem:[%s1 + $0x160] sm:$0xff]
  %v58 = vld [vmem:[%s1 + $0x168] sm:$0xff]
  %v59 = vld [vmem:[%s1 + $0x170] sm:$0xff]
  %v60 = vld [vmem:[%s1 + $0x178] sm:$0xff]
  %v61 = vld [vmem:[%s1 + $0x180] sm:$0xff]
  %v62 = vld [vmem:[%s1 + $0x188] sm:$0xff]
  %v63 = vld [vmem:[%s1 + $0x190] sm:$0xff]
  %v64 = vld [vmem:[%s1 + $0x198] sm:$0xff]
  %v65 = vld [vmem:[%s1 + $0x1a0] sm:$0xff]
  %v66 = vld [vmem:[%s1 + $0x1a8] sm:$0xff]
  %v67 = vld [vmem:[%s1 + $0x1b0] sm:$0xff]
  %v68 = vld [vmem:[%s1 + $0x1b8] sm:$0xff]
  %v69 = vld [vmem:[%s1 + $0x1c0] sm:$0xff]
  %v70 = vld [vmem:[%s1 + $0x1c8] sm:$0xff]
  %v71 = vld [vmem:[%s1 + $0x1d0] sm:$0xff]
  %v72 = vld [vmem:[%s1 + $0x1d8] sm:$0xff]
  %v73 = vld [vmem:[%s1 + $0x1e0] sm:$0xff]
  %v74 = vld [vmem:[%s1 + $0x1e8] sm:$0xff]
  %v75 = vld [vmem:[%s1 + $0x1f0] sm:$0xff]
  %v76 = vld [vmem:[%s1 + $0x1f8] sm:$0xff]
  %vm77 = vcmask 523264
  %v79 = vsel %vm77, %v12, 0
  %81 = vmatprep.subr.mxu0 %v14
  %82 = vmatpush1.msra.mxu0 %v13
  %83 = vmatprep.subr.mxu0 %v22
  %84 = vmatpush1.msra.mxu0 %v21
  %85 = vmatprep.subr.mxu0 %v30
  %86 = vmatpush1.msra.mxu0 %v29
  %87 = vmatprep.subr.mxu0 %v38
  %88 = vmatpush1.msra.mxu0 %v37
  %89 = vmatprep.subr.mxu0 %v46
  %90 = vmatpush1.msra.mxu0 %v45
  %91 = vmatprep.subr.mxu0 %v54
  %92 = vmatpush1.msra.mxu0 %v53
  %93 = vmatprep.subr.mxu0 %v62
  %94 = vmatpush1.msra.mxu0 %v61
  %95 = vmatprep.subr.mxu0 %v70
  %96 = vmatpush1.msra.mxu0 %v69
  %97 = vmatprep.subr.mxu0 0.0
  %98 = vmatpush1.msra.mxu0 0.0
  %99 = vmatprep.subr.mxu0 0.0
  %100 = vmatpush1.msra.mxu0 0.0
  %101 = vmatprep.subr.mxu0 0.0
  %102 = vmatpush1.msra.mxu0 0.0
  %103 = vmatprep.subr.mxu0 0.0
  %104 = vmatpush1.msra.mxu0 0.0
  %105 = vmatprep.subr.mxu0 0.0
  %106 = vmatpush1.msra.mxu0 0.0
  %107 = vmatprep.subr.mxu0 0.0
  %108 = vmatpush1.msra.mxu0 0.0
  %109 = vmatprep.subr.mxu0 0.0
  %110 = vmatpush1.msra.mxu0 0.0
  %111 = vmatprep.subr.mxu0 0.0
  %112 = vmatpush1.msra.mxu0 0.0
  %113 = vmatprep.subr.mxu0 0.0
  %114 = vmatpush1.msra.mxu0 0.0
  %115 = vmatprep.subr.mxu0 0.0
  %116 = vmatpush1.msra.mxu0 0.0
  %117 = vmatprep.subr.mxu0 0.0
  %118 = vmatpush1.msra.mxu0 0.0
  %119 = vmatprep.subr.mxu0 0.0
  %120 = vmatpush1.msra.mxu0 0.0
  %121 = vmatprep.subr.mxu0 0.0
  %122 = vmatpush1.msra.mxu0 0.0
  %123 = vmatprep.subr.mxu0 0.0
  %124 = vmatpush1.msra.mxu0 0.0
  %125 = vmatprep.subr.mxu0 0.0
  %126 = vmatpush1.msra.mxu0 0.0
  %127 = vmatprep.subr.mxu0 0.0
  %128 = vmatpush1.msra.mxu0 0.0
  %129 = vmatprep.subr.mxu0 0.0
  %130 = vmatpush1.msra.mxu0 0.0
  %131 = vmatprep.subr.mxu0 0.0
  %132 = vmatpush1.msra.mxu0 0.0
  %133 = vmatprep.subr.mxu0 0.0
  %134 = vmatpush1.msra.mxu0 0.0
  %135 = vmatprep.subr.mxu0 0.0
  %136 = vmatpush1.msra.mxu0 0.0
  %137 = vmatprep.subr.mxu0 0.0
  %138 = vmatpush1.msra.mxu0 0.0
  %139 = vmatprep.subr.mxu0 0.0
  %140 = vmatpush1.msra.mxu0 0.0
  %141 = vmatprep.subr.mxu0 0.0
  %142 = vmatpush1.msra.mxu0 0.0
  %143 = vmatprep.subr.mxu0 0.0
  %144 = vmatpush1.msra.mxu0 0.0
  %145 = vmatprep.mubr.f32.mxu0 0.0
  %146 = vmatmul.mubr.f32.gmra.mrb[0].mxu0 %v79
  %v147 = vpop.f32.mrb[0].mxu0
  %v148 = vadd.f32 0.0, %v147
  %v149 = vpop.f32.mrb[0].mxu0
  %v150 = vadd.f32 0.0, %v149
  %151 = vdwg.mxu0
  %152 = vmatprep.subr.mxu0 %v16
  %153 = vmatpush1.msra.mxu0 %v15
  %154 = vmatprep.subr.mxu0 %v24
  %155 = vmatpush1.msra.mxu0 %v23
  %156 = vmatprep.subr.mxu0 %v32
  %157 = vmatpush1.msra.mxu0 %v31
  %158 = vmatprep.subr.mxu0 %v40
  %159 = vmatpush1.msra.mxu0 %v39
  %160 = vmatprep.subr.mxu0 %v48
  %161 = vmatpush1.msra.mxu0 %v47
  %162 = vmatprep.subr.mxu0 %v56
  %163 = vmatpush1.msra.mxu0 %v55
  %164 = vmatprep.subr.mxu0 %v64
  %165 = vmatpush1.msra.mxu0 %v63
  %166 = vmatprep.subr.mxu0 %v72
  %167 = vmatpush1.msra.mxu0 %v71
  %168 = vmatprep.subr.mxu0 0.0
  %169 = vmatpush1.msra.mxu0 0.0
  %170 = vmatprep.subr.mxu0 0.0
  %171 = vmatpush1.msra.mxu0 0.0
  %172 = vmatprep.subr.mxu0 0.0
  %173 = vmatpush1.msra.mxu0 0.0
  %174 = vmatprep.subr.mxu0 0.0
  %175 = vmatpush1.msra.mxu0 0.0
  %176 = vmatprep.subr.mxu0 0.0
  %177 = vmatpush1.msra.mxu0 0.0
  %178 = vmatprep.subr.mxu0 0.0
  %179 = vmatpush1.msra.mxu0 0.0
  %180 = vmatprep.subr.mxu0 0.0
  %181 = vmatpush1.msra.mxu0 0.0
  %182 = vmatprep.subr.mxu0 0.0
  %183 = vmatpush1.msra.mxu0 0.0
  %184 = vmatprep.subr.mxu0 0.0
  %185 = vmatpush1.msra.mxu0 0.0
  %186 = vmatprep.subr.mxu0 0.0
  %187 = vmatpush1.msra.mxu0 0.0
  %188 = vmatprep.subr.mxu0 0.0
  %189 = vmatpush1.msra.mxu0 0.0
  %190 = vmatprep.subr.mxu0 0.0
  %191 = vmatpush1.msra.mxu0 0.0
  %192 = vmatprep.subr.mxu0 0.0
  %193 = vmatpush1.msra.mxu0 0.0
  %194 = vmatprep.subr.mxu0 0.0
  %195 = vmatpush1.msra.mxu0 0.0
  %196 = vmatprep.subr.mxu0 0.0
  %197 = vmatpush1.msra.mxu0 0.0
  %198 = vmatprep.subr.mxu0 0.0
  %199 = vmatpush1.msra.mxu0 0.0
  %200 = vmatprep.subr.mxu0 0.0
  %201 = vmatpush1.msra.mxu0 0.0
  %202 = vmatprep.subr.mxu0 0.0
  %203 = vmatpush1.msra.mxu0 0.0
  %204 = vmatprep.subr.mxu0 0.0
  %205 = vmatpush1.msra.mxu0 0.0
  %206 = vmatprep.subr.mxu0 0.0
  %207 = vmatpush1.msra.mxu0 0.0
  %208 = vmatprep.subr.mxu0 0.0
  %209 = vmatpush1.msra.mxu0 0.0
  %210 = vmatprep.subr.mxu0 0.0
  %211 = vmatpush1.msra.mxu0 0.0
  %212 = vmatprep.subr.mxu0 0.0
  %213 = vmatpush1.msra.mxu0 0.0
  %214 = vmatprep.subr.mxu0 0.0
  %215 = vmatpush1.msra.mxu0 0.0
  %216 = vmatprep.mubr.f32.mxu0 0.0
  %217 = vmatmul.mubr.f32.gmra.mrb[0].mxu0 %v79
  %v218 = vpop.f32.mrb[0].mxu0
  %v219 = vadd.f32 0.0, %v218
  %v220 = vpop.f32.mrb[0].mxu0
  %v221 = vadd.f32 0.0, %v220
  %222 = vdwg.mxu0
  %223 = vmatprep.subr.mxu0 %v18
  %224 = vmatpush1.msra.mxu0 %v17
  %225 = vmatprep.subr.mxu0 %v26
  %226 = vmatpush1.msra.mxu0 %v25
  %227 = vmatprep.subr.mxu0 %v34
  %228 = vmatpush1.msra.mxu0 %v33
  %229 = vmatprep.subr.mxu0 %v42
  %230 = vmatpush1.msra.mxu0 %v41
  %231 = vmatprep.subr.mxu0 %v50
  %232 = vmatpush1.msra.mxu0 %v49
  %233 = vmatprep.subr.mxu0 %v58
  %234 = vmatpush1.msra.mxu0 %v57
  %235 = vmatprep.subr.mxu0 %v66
  %236 = vmatpush1.msra.mxu0 %v65
  %237 = vmatprep.subr.mxu0 %v74
  %238 = vmatpush1.msra.mxu0 %v73
  %239 = vmatprep.subr.mxu0 0.0
  %240 = vmatpush1.msra.mxu0 0.0
  %241 = vmatprep.subr.mxu0 0.0
  %242 = vmatpush1.msra.mxu0 0.0
  %243 = vmatprep.subr.mxu0 0.0
  %244 = vmatpush1.msra.mxu0 0.0
  %245 = vmatprep.subr.mxu0 0.0
  %246 = vmatpush1.msra.mxu0 0.0
  %247 = vmatprep.subr.mxu0 0.0
  %248 = vmatpush1.msra.mxu0 0.0
  %249 = vmatprep.subr.mxu0 0.0
  %250 = vmatpush1.msra.mxu0 0.0
  %251 = vmatprep.subr.mxu0 0.0
  %252 = vmatpush1.msra.mxu0 0.0
  %253 = vmatprep.subr.mxu0 0.0
  %254 = vmatpush1.msra.mxu0 0.0
  %255 = vmatprep.subr.mxu0 0.0
  %256 = vmatpush1.msra.mxu0 0.0
  %257 = vmatprep.subr.mxu0 0.0
  %258 = vmatpush1.msra.mxu0 0.0
  %259 = vmatprep.subr.mxu0 0.0
  %260 = vmatpush1.msra.mxu0 0.0
  %261 = vmatprep.subr.mxu0 0.0
  %262 = vmatpush1.msra.mxu0 0.0
  %263 = vmatprep.subr.mxu0 0.0
  %264 = vmatpush1.msra.mxu0 0.0
  %265 = vmatprep.subr.mxu0 0.0
  %266 = vmatpush1.msra.mxu0 0.0
  %267 = vmatprep.subr.mxu0 0.0
  %268 = vmatpush1.msra.mxu0 0.0
  %269 = vmatprep.subr.mxu0 0.0
  %270 = vmatpush1.msra.mxu0 0.0
  %271 = vmatprep.subr.mxu0 0.0
  %272 = vmatpush1.msra.mxu0 0.0
  %273 = vmatprep.subr.mxu0 0.0
  %274 = vmatpush1.msra.mxu0 0.0
  %275 = vmatprep.subr.mxu0 0.0
  %276 = vmatpush1.msra.mxu0 0.0
  %277 = vmatprep.subr.mxu0 0.0
  %278 = vmatpush1.msra.mxu0 0.0
  %279 = vmatprep.subr.mxu0 0.0
  %280 = vmatpush1.msra.mxu0 0.0
  %281 = vmatprep.subr.mxu0 0.0
  %282 = vmatpush1.msra.mxu0 0.0
  %283 = vmatprep.subr.mxu0 0.0
  %284 = vmatpush1.msra.mxu0 0.0
  %285 = vmatprep.subr.mxu0 0.0
  %286 = vmatpush1.msra.mxu0 0.0
  %287 = vmatprep.mubr.f32.mxu0 0.0
  %288 = vmatmul.mubr.f32.gmra.mrb[0].mxu0 %v79
  %v289 = vpop.f32.mrb[0].mxu0
  %v290 = vadd.f32 0.0, %v289
  %v291 = vpop.f32.mrb[0].mxu0
  %v292 = vadd.f32 0.0, %v291
  %293 = vdwg.mxu0
  %294 = vmatprep.subr.mxu0 %v20
  %295 = vmatpush1.msra.mxu0 %v19
  %296 = vmatprep.subr.mxu0 %v28
  %297 = vmatpush1.msra.mxu0 %v27
  %298 = vmatprep.subr.mxu0 %v36
  %299 = vmatpush1.msra.mxu0 %v35
  %300 = vmatprep.subr.mxu0 %v44
  %301 = vmatpush1.msra.mxu0 %v43
  %302 = vmatprep.subr.mxu0 %v52
  %303 = vmatpush1.msra.mxu0 %v51
  %304 = vmatprep.subr.mxu0 %v60
  %305 = vmatpush1.msra.mxu0 %v59
  %306 = vmatprep.subr.mxu0 %v68
  %307 = vmatpush1.msra.mxu0 %v67
  %308 = vmatprep.subr.mxu0 %v76
  %309 = vmatpush1.msra.mxu0 %v75
  %310 = vmatprep.subr.mxu0 0.0
  %311 = vmatpush1.msra.mxu0 0.0
  %312 = vmatprep.subr.mxu0 0.0
  %313 = vmatpush1.msra.mxu0 0.0
  %314 = vmatprep.subr.mxu0 0.0
  %315 = vmatpush1.msra.mxu0 0.0
  %316 = vmatprep.subr.mxu0 0.0
  %317 = vmatpush1.msra.mxu0 0.0
  %318 = vmatprep.subr.mxu0 0.0
  %319 = vmatpush1.msra.mxu0 0.0
  %320 = vmatprep.subr.mxu0 0.0
  %321 = vmatpush1.msra.mxu0 0.0
  %322 = vmatprep.subr.mxu0 0.0
  %323 = vmatpush1.msra.mxu0 0.0
  %324 = vmatprep.subr.mxu0 0.0
  %325 = vmatpush1.msra.mxu0 0.0
  %326 = vmatprep.subr.mxu0 0.0
  %327 = vmatpush1.msra.mxu0 0.0
  %328 = vmatprep.subr.mxu0 0.0
  %329 = vmatpush1.msra.mxu0 0.0
  %330 = vmatprep.subr.mxu0 0.0
  %331 = vmatpush1.msra.mxu0 0.0
  %332 = vmatprep.subr.mxu0 0.0
  %333 = vmatpush1.msra.mxu0 0.0
  %334 = vmatprep.subr.mxu0 0.0
  %335 = vmatpush1.msra.mxu0 0.0
  %336 = vmatprep.subr.mxu0 0.0
  %337 = vmatpush1.msra.mxu0 0.0
  %338 = vmatprep.subr.mxu0 0.0
  %339 = vmatpush1.msra.mxu0 0.0
  %340 = vmatprep.subr.mxu0 0.0
  %341 = vmatpush1.msra.mxu0 0.0
  %342 = vmatprep.subr.mxu0 0.0
  %343 = vmatpush1.msra.mxu0 0.0
  %344 = vmatprep.subr.mxu0 0.0
  %345 = vmatpush1.msra.mxu0 0.0
  %346 = vmatprep.subr.mxu0 0.0
  %347 = vmatpush1.msra.mxu0 0.0
  %348 = vmatprep.subr.mxu0 0.0
  %349 = vmatpush1.msra.mxu0 0.0
  %350 = vmatprep.subr.mxu0 0.0
  %351 = vmatpush1.msra.mxu0 0.0
  %352 = vmatprep.subr.mxu0 0.0
  %353 = vmatpush1.msra.mxu0 0.0
  %354 = vmatprep.subr.mxu0 0.0
  %355 = vmatpush1.msra.mxu0 0.0
  %356 = vmatprep.subr.mxu0 0.0
  %357 = vmatpush1.msra.mxu0 0.0
  %358 = vmatprep.mubr.f32.mxu0 0.0
  %359 = vmatmul.mubr.f32.gmra.mrb[0].mxu0 %v79
  %v360 = vpop.f32.mrb[0].mxu0
  %v361 = vadd.f32 0.0, %v360
  %v362 = vpop.f32.mrb[0].mxu0
  %v363 = vadd.f32 0.0, %v362
  %364 = vdwg.mxu0
  %365 = vst [vmem:[%s2] sm:$0xff] %v148
  %366 = vst [vmem:[%s2 + $0x8] sm:$0xff] %v150
  %367 = vst [vmem:[%s2 + $0x10] sm:$0xff] %v219
  %368 = vst [vmem:[%s2 + $0x18] sm:$0xff] %v221
  %369 = vst [vmem:[%s2 + $0x20] sm:$0xff] %v290
  %370 = vst [vmem:[%s2 + $0x28] sm:$0xff] %v292
  %371 = vst [vmem:[%s2 + $0x30] sm:$0xff] %v361
  %372 = vst [vmem:[%s2 + $0x38] sm:$0xff] %v363
  // Predicated region
  $region10: #{_lambda_.26} parent=0 // pred_check
    _
  $region11: #{_lambda_.26} parent=0 // pred_check_branch
    %374 = sbr.rel (0) target = $region13
  $region12: #{_lambda_.26} parent=0 // pred_region
    _
  $region13: #{_lambda_.26} parent=0 // pred_fallthru
    _
  // Predicated region
  $region14: #{_lambda_.26} parent=0 // pred_check
    _
  $region15: #{_lambda_.26} parent=0 // pred_check_branch
    %376 = sbr.rel (0) target = $region17
  $region16: #{_lambda_.26} parent=0 // pred_region
    _
  $region17: #{_lambda_.26} parent=0 // pred_fallthru
    _

// kernel: _lambda_.28
$region0: #{_lambda_.28}
  #allocation0 [shape = 'u32[]', space=smem, size = 0x4, offset = 0x4, fixed_abs, tag = 'smem constant byte address 0x4 - core index']
  #allocation1 [shape = 'u32[144,128]{1,0:T(1,128)}', space=vmem, size = 0x12000, scoped, tag = 'internal scratch']
  %s0 = inlined_call_operand.vmem [shape: f32[8,128], index: 0, kind: input, shape index: {}]
  %s1 = inlined_call_operand.vmem [shape: f32[128,512], index: 1, kind: input, shape index: {}]
  %s2 = inlined_call_operand.vmem [shape: f32[8,512], index: 2, kind: output, shape index: {}]
  %s3 = sld [smem:[#allocation0]]
  $region18: #{_lambda_.28} parent=0
    _
  %s5 = ssub.s32 1, %s3
  %s6 = scalar_select 0, %s5, %s3
  // Predicated region
  $region2: #{_lambda_.28} parent=0 // pred_check
    _
  $region3: #{_lambda_.28} parent=0 // pred_check_branch
    %8 = sbr.rel (0) target = $region5
  $region4: #{_lambda_.28} parent=0 // pred_region
    _
  $region5: #{_lambda_.28} parent=0 // pred_fallthru
    _
  // Predicated region
  $region6: #{_lambda_.28} parent=0 // pred_check
    _
  $region7: #{_lambda_.28} parent=0 // pred_check_branch
    %10 = sbr.rel (0) target = $region9
  $region8: #{_lambda_.28} parent=0 // pred_region
    _
  $region9: #{_lambda_.28} parent=0 // pred_fallthru
    _
  %v11 = vld [vmem:[%s0] sm:$0xff]
  %v12 = vmax.f32 %v11, 0.0
  %v13 = vld [vmem:[%s1] sm:$0xff]
  %v14 = vld [vmem:[%s1 + $0x8] sm:$0xff]
  %v15 = vld [vmem:[%s1 + $0x10] sm:$0xff]
  %v16 = vld [vmem:[%s1 + $0x18] sm:$0xff]
  %v17 = vld [vmem:[%s1 + $0x20] sm:$0xff]
  %v18 = vld [vmem:[%s1 + $0x28] sm:$0xff]
  %v19 = vld [vmem:[%s1 + $0x30] sm:$0xff]
  %v20 = vld [vmem:[%s1 + $0x38] sm:$0xff]
  %v21 = vld [vmem:[%s1 + $0x40] sm:$0xff]
  %v22 = vld [vmem:[%s1 + $0x48] sm:$0xff]
  %v23 = vld [vmem:[%s1 + $0x50] sm:$0xff]
  %v24 = vld [vmem:[%s1 + $0x58] sm:$0xff]
  %v25 = vld [vmem:[%s1 + $0x60] sm:$0xff]
  %v26 = vld [vmem:[%s1 + $0x68] sm:$0xff]
  %v27 = vld [vmem:[%s1 + $0x70] sm:$0xff]
  %v28 = vld [vmem:[%s1 + $0x78] sm:$0xff]
  %v29 = vld [vmem:[%s1 + $0x80] sm:$0xff]
  %v30 = vld [vmem:[%s1 + $0x88] sm:$0xff]
  %v31 = vld [vmem:[%s1 + $0x90] sm:$0xff]
  %v32 = vld [vmem:[%s1 + $0x98] sm:$0xff]
  %v33 = vld [vmem:[%s1 + $0xa0] sm:$0xff]
  %v34 = vld [vmem:[%s1 + $0xa8] sm:$0xff]
  %v35 = vld [vmem:[%s1 + $0xb0] sm:$0xff]
  %v36 = vld [vmem:[%s1 + $0xb8] sm:$0xff]
  %v37 = vld [vmem:[%s1 + $0xc0] sm:$0xff]
  %v38 = vld [vmem:[%s1 + $0xc8] sm:$0xff]
  %v39 = vld [vmem:[%s1 + $0xd0] sm:$0xff]
  %v40 = vld [vmem:[%s1 + $0xd8] sm:$0xff]
  %v41 = vld [vmem:[%s1 + $0xe0] sm:$0xff]
  %v42 = vld [vmem:[%s1 + $0xe8] sm:$0xff]
  %v43 = vld [vmem:[%s1 + $0xf0] sm:$0xff]
  %v44 = vld [vmem:[%s1 + $0xf8] sm:$0xff]
  %v45 = vld [vmem:[%s1 + $0x100] sm:$0xff]
  %v46 = vld [vmem:[%s1 + $0x108] sm:$0xff]
  %v47 = vld [vmem:[%s1 + $0x110] sm:$0xff]
  %v48 = vld [vmem:[%s1 + $0x118] sm:$0xff]
  %v49 = vld [vmem:[%s1 + $0x120] sm:$0xff]
  %v50 = vld [vmem:[%s1 + $0x128] sm:$0xff]
  %v51 = vld [vmem:[%s1 + $0x130] sm:$0xff]
  %v52 = vld [vmem:[%s1 + $0x138] sm:$0xff]
  %v53 = vld [vmem:[%s1 + $0x140] sm:$0xff]
  %v54 = vld [vmem:[%s1 + $0x148] sm:$0xff]
  %v55 = vld [vmem:[%s1 + $0x150] sm:$0xff]
  %v56 = vld [vmem:[%s1 + $0x158] sm:$0xff]
  %v57 = vld [vmem:[%s1 + $0x160] sm:$0xff]
  %v58 = vld [vmem:[%s1 + $0x168] sm:$0xff]
  %v59 = vld [vmem:[%s1 + $0x170] sm:$0xff]
  %v60 = vld [vmem:[%s1 + $0x178] sm:$0xff]
  %v61 = vld [vmem:[%s1 + $0x180] sm:$0xff]
  %v62 = vld [vmem:[%s1 + $0x188] sm:$0xff]
  %v63 = vld [vmem:[%s1 + $0x190] sm:$0xff]
  %v64 = vld [vmem:[%s1 + $0x198] sm:$0xff]
  %v65 = vld [vmem:[%s1 + $0x1a0] sm:$0xff]
  %v66 = vld [vmem:[%s1 + $0x1a8] sm:$0xff]
  %v67 = vld [vmem:[%s1 + $0x1b0] sm:$0xff]
  %v68 = vld [vmem:[%s1 + $0x1b8] sm:$0xff]
  %v69 = vld [vmem:[%s1 + $0x1c0] sm:$0xff]
  %v70 = vld [vmem:[%s1 + $0x1c8] sm:$0xff]
  %v71 = vld [vmem:[%s1 + $0x1d0] sm:$0xff]
  %v72 = vld [vmem:[%s1 + $0x1d8] sm:$0xff]
  %v73 = vld [vmem:[%s1 + $0x1e0] sm:$0xff]
  %v74 = vld [vmem:[%s1 + $0x1e8] sm:$0xff]
  %v75 = vld [vmem:[%s1 + $0x1f0] sm:$0xff]
  %v76 = vld [vmem:[%s1 + $0x1f8] sm:$0xff]
  %77 = vmatprep.subr.mxu0 %v14
  %78 = vmatpush1.msra.mxu0 %v13
  %79 = vmatprep.subr.mxu0 %v18
  %80 = vmatpush1.msra.mxu0 %v17
  %81 = vmatprep.subr.mxu0 %v22
  %82 = vmatpush1.msra.mxu0 %v21
  %83 = vmatprep.subr.mxu0 %v26
  %84 = vmatpush1.msra.mxu0 %v25
  %85 = vmatprep.subr.mxu0 %v30
  %86 = vmatpush1.msra.mxu0 %v29
  %87 = vmatprep.subr.mxu0 %v34
  %88 = vmatpush1.msra.mxu0 %v33
  %89 = vmatprep.subr.mxu0 %v38
  %90 = vmatpush1.msra.mxu0 %v37
  %91 = vmatprep.subr.mxu0 %v42
  %92 = vmatpush1.msra.mxu0 %v41
  %93 = vmatprep.subr.mxu0 %v46
  %94 = vmatpush1.msra.mxu0 %v45
  %95 = vmatprep.subr.mxu0 %v50
  %96 = vmatpush1.msra.mxu0 %v49
  %97 = vmatprep.subr.mxu0 %v54
  %98 = vmatpush1.msra.mxu0 %v53
  %99 = vmatprep.subr.mxu0 %v58
  %100 = vmatpush1.msra.mxu0 %v57
  %101 = vmatprep.subr.mxu0 %v62
  %102 = vmatpush1.msra.mxu0 %v61
  %103 = vmatprep.subr.mxu0 %v66
  %104 = vmatpush1.msra.mxu0 %v65
  %105 = vmatprep.subr.mxu0 %v70
  %106 = vmatpush1.msra.mxu0 %v69
  %107 = vmatprep.subr.mxu0 %v74
  %108 = vmatpush1.msra.mxu0 %v73
  %109 = vmatprep.subr.mxu0 0.0
  %110 = vmatpush1.msra.mxu0 0.0
  %111 = vmatprep.subr.mxu0 0.0
  %112 = vmatpush1.msra.mxu0 0.0
  %113 = vmatprep.subr.mxu0 0.0
  %114 = vmatpush1.msra.mxu0 0.0
  %115 = vmatprep.subr.mxu0 0.0
  %116 = vmatpush1.msra.mxu0 0.0
  %117 = vmatprep.subr.mxu0 0.0
  %118 = vmatpush1.msra.mxu0 0.0
  %119 = vmatprep.subr.mxu0 0.0
  %120 = vmatpush1.msra.mxu0 0.0
  %121 = vmatprep.subr.mxu0 0.0
  %122 = vmatpush1.msra.mxu0 0.0
  %123 = vmatprep.subr.mxu0 0.0
  %124 = vmatpush1.msra.mxu0 0.0
  %125 = vmatprep.subr.mxu0 0.0
  %126 = vmatpush1.msra.mxu0 0.0
  %127 = vmatprep.subr.mxu0 0.0
  %128 = vmatpush1.msra.mxu0 0.0
  %129 = vmatprep.subr.mxu0 0.0
  %130 = vmatpush1.msra.mxu0 0.0
  %131 = vmatprep.subr.mxu0 0.0
  %132 = vmatpush1.msra.mxu0 0.0
  %133 = vmatprep.subr.mxu0 0.0
  %134 = vmatpush1.msra.mxu0 0.0
  %135 = vmatprep.subr.mxu0 0.0
  %136 = vmatpush1.msra.mxu0 0.0
  %137 = vmatprep.subr.mxu0 0.0
  %138 = vmatpush1.msra.mxu0 0.0
  %139 = vmatprep.subr.mxu0 0.0
  %140 = vmatpush1.msra.mxu0 0.0
  %141 = vmatprep.mubr.f32.mxu0 0.0
  %142 = vmatmul.mubr.f32.gmra.mrb[0].mxu0 %v12
  %v143 = vpop.f32.mrb[0].mxu0
  %v144 = vadd.f32 0.0, %v143
  %v145 = vpop.f32.mrb[0].mxu0
  %v146 = vadd.f32 0.0, %v145
  %147 = vdwg.mxu0
  %148 = vmatprep.subr.mxu0 %v16
  %149 = vmatpush1.msra.mxu0 %v15
  %150 = vmatprep.subr.mxu0 %v20
  %151 = vmatpush1.msra.mxu0 %v19
  %152 = vmatprep.subr.mxu0 %v24
  %153 = vmatpush1.msra.mxu0 %v23
  %154 = vmatprep.subr.mxu0 %v28
  %155 = vmatpush1.msra.mxu0 %v27
  %156 = vmatprep.subr.mxu0 %v32
  %157 = vmatpush1.msra.mxu0 %v31
  %158 = vmatprep.subr.mxu0 %v36
  %159 = vmatpush1.msra.mxu0 %v35
  %160 = vmatprep.subr.mxu0 %v40
  %161 = vmatpush1.msra.mxu0 %v39
  %162 = vmatprep.subr.mxu0 %v44
  %163 = vmatpush1.msra.mxu0 %v43
  %164 = vmatprep.subr.mxu0 %v48
  %165 = vmatpush1.msra.mxu0 %v47
  %166 = vmatprep.subr.mxu0 %v52
  %167 = vmatpush1.msra.mxu0 %v51
  %168 = vmatprep.subr.mxu0 %v56
  %169 = vmatpush1.msra.mxu0 %v55
  %170 = vmatprep.subr.mxu0 %v60
  %171 = vmatpush1.msra.mxu0 %v59
  %172 = vmatprep.subr.mxu0 %v64
  %173 = vmatpush1.msra.mxu0 %v63
  %174 = vmatprep.subr.mxu0 %v68
  %175 = vmatpush1.msra.mxu0 %v67
  %176 = vmatprep.subr.mxu0 %v72
  %177 = vmatpush1.msra.mxu0 %v71
  %178 = vmatprep.subr.mxu0 %v76
  %179 = vmatpush1.msra.mxu0 %v75
  %180 = vmatprep.subr.mxu0 0.0
  %181 = vmatpush1.msra.mxu0 0.0
  %182 = vmatprep.subr.mxu0 0.0
  %183 = vmatpush1.msra.mxu0 0.0
  %184 = vmatprep.subr.mxu0 0.0
  %185 = vmatpush1.msra.mxu0 0.0
  %186 = vmatprep.subr.mxu0 0.0
  %187 = vmatpush1.msra.mxu0 0.0
  %188 = vmatprep.subr.mxu0 0.0
  %189 = vmatpush1.msra.mxu0 0.0
  %190 = vmatprep.subr.mxu0 0.0
  %191 = vmatpush1.msra.mxu0 0.0
  %192 = vmatprep.subr.mxu0 0.0
  %193 = vmatpush1.msra.mxu0 0.0
  %194 = vmatprep.subr.mxu0 0.0
  %195 = vmatpush1.msra.mxu0 0.0
  %196 = vmatprep.subr.mxu0 0.0
  %197 = vmatpush1.msra.mxu0 0.0
  %198 = vmatprep.subr.mxu0 0.0
  %199 = vmatpush1.msra.mxu0 0.0
  %200 = vmatprep.subr.mxu0 0.0
  %201 = vmatpush1.msra.mxu0 0.0
  %202 = vmatprep.subr.mxu0 0.0
  %203 = vmatpush1.msra.mxu0 0.0
  %204 = vmatprep.subr.mxu0 0.0
  %205 = vmatpush1.msra.mxu0 0.0
  %206 = vmatprep.subr.mxu0 0.0
  %207 = vmatpush1.msra.mxu0 0.0
  %208 = vmatprep.subr.mxu0 0.0
  %209 = vmatpush1.msra.mxu0 0.0
  %210 = vmatprep.subr.mxu0 0.0
  %211 = vmatpush1.msra.mxu0 0.0
  %212 = vmatprep.mubr.f32.mxu0 0.0
  %213 = vmatmul.mubr.f32.gmra.mrb[0].mxu0 %v12
  %v214 = vpop.f32.mrb[0].mxu0
  %v215 = vadd.f32 0.0, %v214
  %v216 = vpop.f32.mrb[0].mxu0
  %v217 = vadd.f32 0.0, %v216
  %218 = vdwg.mxu0
  %219 = vst [vmem:[%s2] sm:$0xff] %v144
  %220 = vst [vmem:[%s2 + $0x8] sm:$0xff] %v146
  %221 = vst [vmem:[%s2 + $0x10] sm:$0xff] %v215
  %222 = vst [vmem:[%s2 + $0x18] sm:$0xff] %v217
  // Predicated region
  $region10: #{_lambda_.28} parent=0 // pred_check
    _
  $region11: #{_lambda_.28} parent=0 // pred_check_branch
    %224 = sbr.rel (0) target = $region13
  $region12: #{_lambda_.28} parent=0 // pred_region
    _
  $region13: #{_lambda_.28} parent=0 // pred_fallthru
    _
  // Predicated region
  $region14: #{_lambda_.28} parent=0 // pred_check
    _
  $region15: #{_lambda_.28} parent=0 // pred_check_branch
    %226 = sbr.rel (0) target = $region17
  $region16: #{_lambda_.28} parent=0 // pred_region
    _
  $region17: #{_lambda_.28} parent=0 // pred_fallthru
    _

// kernel: _lambda_.30
$region0: #{_lambda_.30}
  #allocation0 [shape = 'u32[]', space=smem, size = 0x4, offset = 0x4, fixed_abs, tag = 'smem constant byte address 0x4 - core index']
  #allocation1 [shape = 'u32[144,128]{1,0:T(1,128)}', space=vmem, size = 0x12000, scoped, tag = 'internal scratch']
  %s0 = inlined_call_operand.vmem [shape: f32[32,64], index: 0, kind: input, shape index: {}]
  %s1 = inlined_call_operand.vmem [shape: f32[64,256], index: 1, kind: input, shape index: {}]
  %s2 = inlined_call_operand.vmem [shape: f32[32,256], index: 2, kind: output, shape index: {}]
  %s3 = sld [smem:[#allocation0]]
  $region18: #{_lambda_.30} parent=0
    _
  %s5 = ssub.s32 1, %s3
  %s6 = scalar_select 0, %s5, %s3
  // Predicated region
  $region2: #{_lambda_.30} parent=0 // pred_check
    _
  $region3: #{_lambda_.30} parent=0 // pred_check_branch
    %8 = sbr.rel (0) target = $region5
  $region4: #{_lambda_.30} parent=0 // pred_region
    _
  $region5: #{_lambda_.30} parent=0 // pred_fallthru
    _
  // Predicated region
  $region6: #{_lambda_.30} parent=0 // pred_check
    _
  $region7: #{_lambda_.30} parent=0 // pred_check_branch
    %10 = sbr.rel (0) target = $region9
  $region8: #{_lambda_.30} parent=0 // pred_region
    _
  $region9: #{_lambda_.30} parent=0 // pred_fallthru
    _
  %v11 = vld [vmem:[%s0] sm:$0xff]
  %v12 = vld [vmem:[%s0 + $0x8] sm:$0xff]
  %v13 = vld [vmem:[%s0 + $0x10] sm:$0xff]
  %v14 = vld [vmem:[%s0 + $0x18] sm:$0xff]
  %v15 = vmax.f32 %v11, 0.0
  %v16 = vmax.f32 %v12, 0.0
  %v17 = vmax.f32 %v13, 0.0
  %v18 = vmax.f32 %v14, 0.0
  %v19 = vld [vmem:[%s1] sm:$0xff]
  %v20 = vld [vmem:[%s1 + $0x8] sm:$0xff]
  %v21 = vld [vmem:[%s1 + $0x10] sm:$0xff]
  %v22 = vld [vmem:[%s1 + $0x18] sm:$0xff]
  %v23 = vld [vmem:[%s1 + $0x20] sm:$0xff]
  %v24 = vld [vmem:[%s1 + $0x28] sm:$0xff]
  %v25 = vld [vmem:[%s1 + $0x30] sm:$0xff]
  %v26 = vld [vmem:[%s1 + $0x38] sm:$0xff]
  %v27 = vld [vmem:[%s1 + $0x40] sm:$0xff]
  %v28 = vld [vmem:[%s1 + $0x48] sm:$0xff]
  %v29 = vld [vmem:[%s1 + $0x50] sm:$0xff]
  %v30 = vld [vmem:[%s1 + $0x58] sm:$0xff]
  %v31 = vld [vmem:[%s1 + $0x60] sm:$0xff]
  %v32 = vld [vmem:[%s1 + $0x68] sm:$0xff]
  %v33 = vld [vmem:[%s1 + $0x70] sm:$0xff]
  %v34 = vld [vmem:[%s1 + $0x78] sm:$0xff]
  %vm35 = vcmask 523264
  %v37 = vsel %vm35, %v15, 0
  %v40 = vsel %vm35, %v16, 0
  %v43 = vsel %vm35, %v17, 0
  %v46 = vsel %vm35, %v18, 0
  %48 = vmatprep.subr.mxu0 %v20
  %49 = vmatpush1.msra.mxu0 %v19
  %50 = vmatprep.subr.mxu0 %v22
  %51 = vmatpush1.msra.mxu0 %v21
  %52 = vmatprep.subr.mxu0 %v24
  %53 = vmatpush1.msra.mxu0 %v23
  %54 = vmatprep.subr.mxu0 %v26
  %55 = vmatpush1.msra.mxu0 %v25
  %56 = vmatprep.subr.mxu0 %v28
  %57 = vmatpush1.msra.mxu0 %v27
  %58 = vmatprep.subr.mxu0 %v30
  %59 = vmatpush1.msra.mxu0 %v29
  %60 = vmatprep.subr.mxu0 %v32
  %61 = vmatpush1.msra.mxu0 %v31
  %62 = vmatprep.subr.mxu0 %v34
  %63 = vmatpush1.msra.mxu0 %v33
  %64 = vmatprep.subr.mxu0 0.0
  %65 = vmatpush1.msra.mxu0 0.0
  %66 = vmatprep.subr.mxu0 0.0
  %67 = vmatpush1.msra.mxu0 0.0
  %68 = vmatprep.subr.mxu0 0.0
  %69 = vmatpush1.msra.mxu0 0.0
  %70 = vmatprep.subr.mxu0 0.0
  %71 = vmatpush1.msra.mxu0 0.0
  %72 = vmatprep.subr.mxu0 0.0
  %73 = vmatpush1.msra.mxu0 0.0
  %74 = vmatprep.subr.mxu0 0.0
  %75 = vmatpush1.msra.mxu0 0.0
  %76 = vmatprep.subr.mxu0 0.0
  %77 = vmatpush1.msra.mxu0 0.0
  %78 = vmatprep.subr.mxu0 0.0
  %79 = vmatpush1.msra.mxu0 0.0
  %80 = vmatprep.subr.mxu0 0.0
  %81 = vmatpush1.msra.mxu0 0.0
  %82 = vmatprep.subr.mxu0 0.0
  %83 = vmatpush1.msra.mxu0 0.0
  %84 = vmatprep.subr.mxu0 0.0
  %85 = vmatpush1.msra.mxu0 0.0
  %86 = vmatprep.subr.mxu0 0.0
  %87 = vmatpush1.msra.mxu0 0.0
  %88 = vmatprep.subr.mxu0 0.0
  %89 = vmatpush1.msra.mxu0 0.0
  %90 = vmatprep.subr.mxu0 0.0
  %91 = vmatpush1.msra.mxu0 0.0
  %92 = vmatprep.subr.mxu0 0.0
  %93 = vmatpush1.msra.mxu0 0.0
  %94 = vmatprep.subr.mxu0 0.0
  %95 = vmatpush1.msra.mxu0 0.0
  %96 = vmatprep.subr.mxu0 0.0
  %97 = vmatpush1.msra.mxu0 0.0
  %98 = vmatprep.subr.mxu0 0.0
  %99 = vmatpush1.msra.mxu0 0.0
  %100 = vmatprep.subr.mxu0 0.0
  %101 = vmatpush1.msra.mxu0 0.0
  %102 = vmatprep.subr.mxu0 0.0
  %103 = vmatpush1.msra.mxu0 0.0
  %104 = vmatprep.subr.mxu0 0.0
  %105 = vmatpush1.msra.mxu0 0.0
  %106 = vmatprep.subr.mxu0 0.0
  %107 = vmatpush1.msra.mxu0 0.0
  %108 = vmatprep.subr.mxu0 0.0
  %109 = vmatpush1.msra.mxu0 0.0
  %110 = vmatprep.subr.mxu0 0.0
  %111 = vmatpush1.msra.mxu0 0.0
  %112 = vmatprep.mubr.f32.mxu0 0.0
  %113 = vmatmul.mubr.f32.gmra.mrb[0].mxu0 %v37
  %v114 = vpop.f32.mrb[0].mxu0
  %v115 = vadd.f32 0.0, %v114
  %v116 = vpop.f32.mrb[0].mxu0
  %v117 = vadd.f32 0.0, %v116
  %118 = vmatprep.mubr.f32.mxu0 0.0
  %119 = vmatmul.mubr.f32.gmra.mrb[0].mxu0 %v40
  %v120 = vpop.f32.mrb[0].mxu0
  %v121 = vadd.f32 0.0, %v120
  %v122 = vpop.f32.mrb[0].mxu0
  %v123 = vadd.f32 0.0, %v122
  %124 = vmatprep.mubr.f32.mxu0 0.0
  %125 = vmatmul.mubr.f32.gmra.mrb[0].mxu0 %v43
  %v126 = vpop.f32.mrb[0].mxu0
  %v127 = vadd.f32 0.0, %v126
  %v128 = vpop.f32.mrb[0].mxu0
  %v129 = vadd.f32 0.0, %v128
  %130 = vmatprep.mubr.f32.mxu0 0.0
  %131 = vmatmul.mubr.f32.gmra.mrb[0].mxu0 %v46
  %v132 = vpop.f32.mrb[0].mxu0
  %v133 = vadd.f32 0.0, %v132
  %v134 = vpop.f32.mrb[0].mxu0
  %v135 = vadd.f32 0.0, %v134
  %136 = vdwg.mxu0
  %137 = vst [vmem:[%s2] sm:$0xff] %v115
  %138 = vst [vmem:[%s2 + $0x8] sm:$0xff] %v117
  %139 = vst [vmem:[%s2 + $0x10] sm:$0xff] %v121
  %140 = vst [vmem:[%s2 + $0x18] sm:$0xff] %v123
  %141 = vst [vmem:[%s2 + $0x20] sm:$0xff] %v127
  %142 = vst [vmem:[%s2 + $0x28] sm:$0xff] %v129
  %143 = vst [vmem:[%s2 + $0x30] sm:$0xff] %v133
  %144 = vst [vmem:[%s2 + $0x38] sm:$0xff] %v135
  // Predicated region
  $region10: #{_lambda_.30} parent=0 // pred_check
    _
  $region11: #{_lambda_.30} parent=0 // pred_check_branch
    %146 = sbr.rel (0) target = $region13
  $region12: #{_lambda_.30} parent=0 // pred_region
    _
  $region13: #{_lambda_.30} parent=0 // pred_fallthru
    _
  // Predicated region
  $region14: #{_lambda_.30} parent=0 // pred_check
    _
  $region15: #{_lambda_.30} parent=0 // pred_check_branch
    %148 = sbr.rel (0) target = $region17
  $region16: #{_lambda_.30} parent=0 // pred_region
    _
  $region17: #{_lambda_.30} parent=0 // pred_fallthru
    _

// kernel: _lambda_.32
$region0: #{_lambda_.32}
  #allocation0 [shape = 'u32[]', space=smem, size = 0x4, offset = 0x4, fixed_abs, tag = 'smem constant byte address 0x4 - core index']
  #allocation1 [shape = 'u32[144,128]{1,0:T(1,128)}', space=vmem, size = 0x12000, scoped, tag = 'internal scratch']
  %s0 = inlined_call_operand.vmem [shape: f32[128,32], index: 0, kind: input, shape index: {}]
  %s1 = inlined_call_operand.vmem [shape: f32[32,128], index: 1, kind: input, shape index: {}]
  %s2 = inlined_call_operand.vmem [shape: f32[128,128], index: 2, kind: output, shape index: {}]
  %s3 = sld [smem:[#allocation0]]
  $region18: #{_lambda_.32} parent=0
    _
  %s5 = ssub.s32 1, %s3
  %s6 = scalar_select 0, %s5, %s3
  // Predicated region
  $region2: #{_lambda_.32} parent=0 // pred_check
    _
  $region3: #{_lambda_.32} parent=0 // pred_check_branch
    %8 = sbr.rel (0) target = $region5
  $region4: #{_lambda_.32} parent=0 // pred_region
    _
  $region5: #{_lambda_.32} parent=0 // pred_fallthru
    _
  // Predicated region
  $region6: #{_lambda_.32} parent=0 // pred_check
    _
  $region7: #{_lambda_.32} parent=0 // pred_check_branch
    %10 = sbr.rel (0) target = $region9
  $region8: #{_lambda_.32} parent=0 // pred_region
    _
  $region9: #{_lambda_.32} parent=0 // pred_fallthru
    _
  %v11 = vld [vmem:[%s0] sm:$0xff]
  %v12 = vld [vmem:[%s0 + $0x8] sm:$0xff]
  %v13 = vld [vmem:[%s0 + $0x10] sm:$0xff]
  %v14 = vld [vmem:[%s0 + $0x18] sm:$0xff]
  %v15 = vld [vmem:[%s0 + $0x20] sm:$0xff]
  %v16 = vld [vmem:[%s0 + $0x28] sm:$0xff]
  %v17 = vld [vmem:[%s0 + $0x30] sm:$0xff]
  %v18 = vld [vmem:[%s0 + $0x38] sm:$0xff]
  %v19 = vld [vmem:[%s0 + $0x40] sm:$0xff]
  %v20 = vld [vmem:[%s0 + $0x48] sm:$0xff]
  %v21 = vld [vmem:[%s0 + $0x50] sm:$0xff]
  %v22 = vld [vmem:[%s0 + $0x58] sm:$0xff]
  %v23 = vld [vmem:[%s0 + $0x60] sm:$0xff]
  %v24 = vld [vmem:[%s0 + $0x68] sm:$0xff]
  %v25 = vld [vmem:[%s0 + $0x70] sm:$0xff]
  %v26 = vld [vmem:[%s0 + $0x78] sm:$0xff]
  %v27 = vmax.f32 %v11, 0.0
  %v28 = vmax.f32 %v12, 0.0
  %v29 = vmax.f32 %v13, 0.0
  %v30 = vmax.f32 %v14, 0.0
  %v31 = vmax.f32 %v15, 0.0
  %v32 = vmax.f32 %v16, 0.0
  %v33 = vmax.f32 %v17, 0.0
  %v34 = vmax.f32 %v18, 0.0
  %v35 = vmax.f32 %v19, 0.0
  %v36 = vmax.f32 %v20, 0.0
  %v37 = vmax.f32 %v21, 0.0
  %v38 = vmax.f32 %v22, 0.0
  %v39 = vmax.f32 %v23, 0.0
  %v40 = vmax.f32 %v24, 0.0
  %v41 = vmax.f32 %v25, 0.0
  %v42 = vmax.f32 %v26, 0.0
  %v43 = vld [vmem:[%s1] sm:$0xff]
  %v44 = vld [vmem:[%s1 + $0x8] sm:$0xff]
  %v45 = vld [vmem:[%s1 + $0x10] sm:$0xff]
  %v46 = vld [vmem:[%s1 + $0x18] sm:$0xff]
  %vm47 = vcmask 261120
  %v49 = vsel %vm47, %v27, 0
  %v52 = vsel %vm47, %v28, 0
  %v55 = vsel %vm47, %v29, 0
  %v58 = vsel %vm47, %v30, 0
  %v61 = vsel %vm47, %v31, 0
  %v64 = vsel %vm47, %v32, 0
  %v67 = vsel %vm47, %v33, 0
  %v70 = vsel %vm47, %v34, 0
  %v73 = vsel %vm47, %v35, 0
  %v76 = vsel %vm47, %v36, 0
  %v79 = vsel %vm47, %v37, 0
  %v82 = vsel %vm47, %v38, 0
  %v85 = vsel %vm47, %v39, 0
  %v88 = vsel %vm47, %v40, 0
  %v91 = vsel %vm47, %v41, 0
  %v94 = vsel %vm47, %v42, 0
  %96 = vmatprep.subr.mxu0 0.0
  %97 = vmatpush1.msra.mxu0 %v43
  %98 = vmatprep.subr.mxu0 0.0
  %99 = vmatpush1.msra.mxu0 %v44
  %100 = vmatprep.subr.mxu0 0.0
  %101 = vmatpush1.msra.mxu0 %v45
  %102 = vmatprep.subr.mxu0 0.0
  %103 = vmatpush1.msra.mxu0 %v46
  %104 = vmatprep.subr.mxu0 0.0
  %105 = vmatpush1.msra.mxu0 0.0
  %106 = vmatprep.subr.mxu0 0.0
  %107 = vmatpush1.msra.mxu0 0.0
  %108 = vmatprep.subr.mxu0 0.0
  %109 = vmatpush1.msra.mxu0 0.0
  %110 = vmatprep.subr.mxu0 0.0
  %111 = vmatpush1.msra.mxu0 0.0
  %112 = vmatprep.subr.mxu0 0.0
  %113 = vmatpush1.msra.mxu0 0.0
  %114 = vmatprep.subr.mxu0 0.0
  %115 = vmatpush1.msra.mxu0 0.0
  %116 = vmatprep.subr.mxu0 0.0
  %117 = vmatpush1.msra.mxu0 0.0
  %118 = vmatprep.subr.mxu0 0.0
  %119 = vmatpush1.msra.mxu0 0.0
  %120 = vmatprep.subr.mxu0 0.0
  %121 = vmatpush1.msra.mxu0 0.0
  %122 = vmatprep.subr.mxu0 0.0
  %123 = vmatpush1.msra.mxu0 0.0
  %124 = vmatprep.subr.mxu0 0.0
  %125 = vmatpush1.msra.mxu0 0.0
  %126 = vmatprep.subr.mxu0 0.0
  %127 = vmatpush1.msra.mxu0 0.0
  %128 = vmatprep.subr.mxu0 0.0
  %129 = vmatpush1.msra.mxu0 0.0
  %130 = vmatprep.subr.mxu0 0.0
  %131 = vmatpush1.msra.mxu0 0.0
  %132 = vmatprep.subr.mxu0 0.0
  %133 = vmatpush1.msra.mxu0 0.0
  %134 = vmatprep.subr.mxu0 0.0
  %135 = vmatpush1.msra.mxu0 0.0
  %136 = vmatprep.subr.mxu0 0.0
  %137 = vmatpush1.msra.mxu0 0.0
  %138 = vmatprep.subr.mxu0 0.0
  %139 = vmatpush1.msra.mxu0 0.0
  %140 = vmatprep.subr.mxu0 0.0
  %141 = vmatpush1.msra.mxu0 0.0
  %142 = vmatprep.subr.mxu0 0.0
  %143 = vmatpush1.msra.mxu0 0.0
  %144 = vmatprep.subr.mxu0 0.0
  %145 = vmatpush1.msra.mxu0 0.0
  %146 = vmatprep.subr.mxu0 0.0
  %147 = vmatpush1.msra.mxu0 0.0
  %148 = vmatprep.subr.mxu0 0.0
  %149 = vmatpush1.msra.mxu0 0.0
  %150 = vmatprep.subr.mxu0 0.0
  %151 = vmatpush1.msra.mxu0 0.0
  %152 = vmatprep.subr.mxu0 0.0
  %153 = vmatpush1.msra.mxu0 0.0
  %154 = vmatprep.subr.mxu0 0.0
  %155 = vmatpush1.msra.mxu0 0.0
  %156 = vmatprep.subr.mxu0 0.0
  %157 = vmatpush1.msra.mxu0 0.0
  %158 = vmatprep.subr.mxu0 0.0
  %159 = vmatpush1.msra.mxu0 0.0
  %160 = vmatprep.mubr.f32.mxu0 0.0
  %161 = vmatmul.mubr.f32.gmra.mrb[0].mxu0 %v49
  %v162 = vpop.f32.mrb[0].mxu0
  %v163 = vadd.f32 0.0, %v162
  %v164 = vpop.f32.mrb[0].mxu0
  %165 = vmatprep.mubr.f32.mxu0 0.0
  %166 = vmatmul.mubr.f32.gmra.mrb[0].mxu0 %v52
  %v167 = vpop.f32.mrb[0].mxu0
  %v168 = vadd.f32 0.0, %v167
  %v169 = vpop.f32.mrb[0].mxu0
  %170 = vmatprep.mubr.f32.mxu0 0.0
  %171 = vmatmul.mubr.f32.gmra.mrb[0].mxu0 %v55
  %v172 = vpop.f32.mrb[0].mxu0
  %v173 = vadd.f32 0.0, %v172
  %v174 = vpop.f32.mrb[0].mxu0
  %175 = vmatprep.mubr.f32.mxu0 0.0
  %176 = vmatmul.mubr.f32.gmra.mrb[0].mxu0 %v58
  %v177 = vpop.f32.mrb[0].mxu0
  %v178 = vadd.f32 0.0, %v177
  %v179 = vpop.f32.mrb[0].mxu0
  %180 = vmatprep.mubr.f32.mxu0 0.0
  %181 = vmatmul.mubr.f32.gmra.mrb[0].mxu0 %v61
  %v182 = vpop.f32.mrb[0].mxu0
  %v183 = vadd.f32 0.0, %v182
  %v184 = vpop.f32.mrb[0].mxu0
  %185 = vmatprep.mubr.f32.mxu0 0.0
  %186 = vmatmul.mubr.f32.gmra.mrb[0].mxu0 %v64
  %v187 = vpop.f32.mrb[0].mxu0
  %v188 = vadd.f32 0.0, %v187
  %v189 = vpop.f32.mrb[0].mxu0
  %190 = vmatprep.mubr.f32.mxu0 0.0
  %191 = vmatmul.mubr.f32.gmra.mrb[0].mxu0 %v67
  %v192 = vpop.f32.mrb[0].mxu0
  %v193 = vadd.f32 0.0, %v192
  %v194 = vpop.f32.mrb[0].mxu0
  %195 = vmatprep.mubr.f32.mxu0 0.0
  %196 = vmatmul.mubr.f32.gmra.mrb[0].mxu0 %v70
  %v197 = vpop.f32.mrb[0].mxu0
  %v198 = vadd.f32 0.0, %v197
  %v199 = vpop.f32.mrb[0].mxu0
  %200 = vmatprep.mubr.f32.mxu0 0.0
  %201 = vmatmul.mubr.f32.gmra.mrb[0].mxu0 %v73
  %v202 = vpop.f32.mrb[0].mxu0
  %v203 = vadd.f32 0.0, %v202
  %v204 = vpop.f32.mrb[0].mxu0
  %205 = vmatprep.mubr.f32.mxu0 0.0
  %206 = vmatmul.mubr.f32.gmra.mrb[0].mxu0 %v76
  %v207 = vpop.f32.mrb[0].mxu0
  %v208 = vadd.f32 0.0, %v207
  %v209 = vpop.f32.mrb[0].mxu0
  %210 = vmatprep.mubr.f32.mxu0 0.0
  %211 = vmatmul.mubr.f32.gmra.mrb[0].mxu0 %v79
  %v212 = vpop.f32.mrb[0].mxu0
  %v213 = vadd.f32 0.0, %v212
  %v214 = vpop.f32.mrb[0].mxu0
  %215 = vmatprep.mubr.f32.mxu0 0.0
  %216 = vmatmul.mubr.f32.gmra.mrb[0].mxu0 %v82
  %v217 = vpop.f32.mrb[0].mxu0
  %v218 = vadd.f32 0.0, %v217
  %v219 = vpop.f32.mrb[0].mxu0
  %220 = vmatprep.mubr.f32.mxu0 0.0
  %221 = vmatmul.mubr.f32.gmra.mrb[0].mxu0 %v85
  %v222 = vpop.f32.mrb[0].mxu0
  %v223 = vadd.f32 0.0, %v222
  %v224 = vpop.f32.mrb[0].mxu0
  %225 = vmatprep.mubr.f32.mxu0 0.0
  %226 = vmatmul.mubr.f32.gmra.mrb[0].mxu0 %v88
  %v227 = vpop.f32.mrb[0].mxu0
  %v228 = vadd.f32 0.0, %v227
  %v229 = vpop.f32.mrb[0].mxu0
  %230 = vmatprep.mubr.f32.mxu0 0.0
  %231 = vmatmul.mubr.f32.gmra.mrb[0].mxu0 %v91
  %v232 = vpop.f32.mrb[0].mxu0
  %v233 = vadd.f32 0.0, %v232
  %v234 = vpop.f32.mrb[0].mxu0
  %235 = vmatprep.mubr.f32.mxu0 0.0
  %236 = vmatmul.mubr.f32.gmra.mrb[0].mxu0 %v94
  %v237 = vpop.f32.mrb[0].mxu0
  %v238 = vadd.f32 0.0, %v237
  %v239 = vpop.f32.mrb[0].mxu0
  %240 = vdwg.mxu0
  %241 = vst [vmem:[%s2] sm:$0xff] %v163
  %242 = vst [vmem:[%s2 + $0x8] sm:$0xff] %v168
  %243 = vst [vmem:[%s2 + $0x10] sm:$0xff] %v173
  %244 = vst [vmem:[%s2 + $0x18] sm:$0xff] %v178
  %245 = vst [vmem:[%s2 + $0x20] sm:$0xff] %v183
  %246 = vst [vmem:[%s2 + $0x28] sm:$0xff] %v188
  %247 = vst [vmem:[%s2 + $0x30] sm:$0xff] %v193
  %248 = vst [vmem:[%s2 + $0x38] sm:$0xff] %v198
  %249 = vst [vmem:[%s2 + $0x40] sm:$0xff] %v203
  %250 = vst [vmem:[%s2 + $0x48] sm:$0xff] %v208
  %251 = vst [vmem:[%s2 + $0x50] sm:$0xff] %v213
  %252 = vst [vmem:[%s2 + $0x58] sm:$0xff] %v218
  %253 = vst [vmem:[%s2 + $0x60] sm:$0xff] %v223
  %254 = vst [vmem:[%s2 + $0x68] sm:$0xff] %v228
  %255 = vst [vmem:[%s2 + $0x70] sm:$0xff] %v233
  %256 = vst [vmem:[%s2 + $0x78] sm:$0xff] %v238
  // Predicated region
  $region10: #{_lambda_.32} parent=0 // pred_check
    _
  $region11: #{_lambda_.32} parent=0 // pred_check_branch
    %258 = sbr.rel (0) target = $region13
  $region12: #{_lambda_.32} parent=0 // pred_region
    _
  $region13: #{_lambda_.32} parent=0 // pred_fallthru
    _
  // Predicated region
  $region14: #{_lambda_.32} parent=0 // pred_check
    _
  $region15: #{_lambda_.32} parent=0 // pred_check_branch
    %260 = sbr.rel (0) target = $region17
  $region16: #{_lambda_.32} parent=0 // pred_region
    _
  $region17: #{_lambda_.32} parent=0 // pred_fallthru
    _

// kernel: tile.137
$region0: #{tile.137}
  #allocation0 [shape = 's32[1]{0}', space=sflag, size = 0x4, scoped, tag = 'scoped memory for tile.137']
  %s0 = inlined_call_operand.vmem [shape: f32[8], index: 0, kind: input, shape index: {}]
  %s1 = inlined_call_operand.vmem [shape: f32[16,8], index: 1, kind: output, shape index: {}]
  // Predicated region
  $region2: #{tile.137} parent=0 // pred_check
    _
  $region3: #{tile.137} parent=0 // pred_check_branch
    %3 = sbr.rel (0) target = $region5
  $region4: #{tile.137} parent=0 // pred_region
    _
  $region5: #{tile.137} parent=0 // pred_fallthru
    _
  %v4 = vld [vmem:[%s0] ss:$0 sm:$0xff]
  %5 = vst [vmem:[%s1] sm:$0xff] %v4
  %s6 = scalar_lea.vmem %s1, 8
  %7 = vst [vmem:[%s6] sm:$0xff] %v4

// kernel: tile.138
$region0: #{tile.138}
  %s0 = inlined_call_operand.vmem [shape: f32[16,8], index: 0, kind: input, shape index: {}]
  %s1 = inlined_call_operand.vmem [shape: f32[1,128], index: 1, kind: output, shape index: {}]
  $region1: #{tile.138} parent=0
    #allocation0 [shape = 'u8[4096]{0}', space=vmem, size = 0x1000, scoped, tag = 'scoped mem for output reshape']
    %v2 = vld [vmem:[%s0] sm:$0x1]
    %vm3 = vcmask 64512
    %4 = vst.msk [vmem:[#allocation0] sm:$0x1] %vm3, %v2
    %s5 = scalar_lea.vmem %s0, 15
    %v6 = vld [vmem:[%s5] sm:$0x1]
    %7 = vrot.lane.b32.xlu0 %v6, 120
    %v8 = vpop.permute.xlu0 %7
    %vm9 = vcmask 1048512
    %10 = vst.msk [vmem:[#allocation0] sm:$0x1] %vm9, %v8
    %s11 = scalar_lea.vmem %s0, 14
    %v12 = vld [vmem:[%s11] sm:$0x1]
    %13 = vrot.lane.b32.xlu0 %v12, 112
    %v14 = vpop.permute.xlu0 %13
    %vm15 = vcmask 982912
    %16 = vst.msk [vmem:[#allocation0] sm:$0x1] %vm15, %v14
    %s17 = scalar_lea.vmem %s0, 13
    %v18 = vld [vmem:[%s17] sm:$0x1]
    %19 = vrot.lane.b32.xlu0 %v18, 104
    %v20 = vpop.permute.xlu0 %19
    %vm21 = vcmask 917312
    %22 = vst.msk [vmem:[#allocation0] sm:$0x1] %vm21, %v20
    %s23 = scalar_lea.vmem %s0, 12
    %v24 = vld [vmem:[%s23] sm:$0x1]
    %25 = vrot.lane.b32.xlu0 %v24, 96
    %v26 = vpop.permute.xlu0 %25
    %vm27 = vcmask 851712
    %28 = vst.msk [vmem:[#allocation0] sm:$0x1] %vm27, %v26
    %s29 = scalar_lea.vmem %s0, 11
    %v30 = vld [vmem:[%s29] sm:$0x1]
    %31 = vrot.lane.b32.xlu0 %v30, 88
    %v32 = vpop.permute.xlu0 %31
    %vm33 = vcmask 786112
    %34 = vst.msk [vmem:[#allocation0] sm:$0x1] %vm33, %v32
    %s35 = scalar_lea.vmem %s0, 10
    %v36 = vld [vmem:[%s35] sm:$0x1]
    %37 = vrot.lane.b32.xlu0 %v36, 80
    %v38 = vpop.permute.xlu0 %37
    %vm39 = vcmask 720512
    %40 = vst.msk [vmem:[#allocation0] sm:$0x1] %vm39, %v38
    %s41 = scalar_lea.vmem %s0, 9
    %v42 = vld [vmem:[%s41] sm:$0x1]
    %43 = vrot.lane.b32.xlu0 %v42, 72
    %v44 = vpop.permute.xlu0 %43
    %vm45 = vcmask 654912
    %46 = vst.msk [vmem:[#allocation0] sm:$0x1] %vm45, %v44
    %s47 = scalar_lea.vmem %s0, 8
    %v48 = vld [vmem:[%s47] sm:$0x1]
    %49 = vrot.lane.b32.xlu0 %v48, 64
    %v50 = vpop.permute.xlu0 %49
    %vm51 = vcmask 589312
    %52 = vst.msk [vmem:[#allocation0] sm:$0x1] %vm51, %v50
    %s53 = scalar_lea.vmem %s0, 7
    %v54 = vld [vmem:[%s53] sm:$0x1]
    %55 = vrot.lane.b32.xlu0 %v54, 56
    %v56 = vpop.permute.xlu0 %55
    %vm57 = vcmask 523712
    %58 = vst.msk [vmem:[#allocation0] sm:$0x1] %vm57, %v56
    %s59 = scalar_lea.vmem %s0, 6
    %v60 = vld [vmem:[%s59] sm:$0x1]
    %61 = vrot.lane.b32.xlu0 %v60, 48
    %v62 = vpop.permute.xlu0 %61
    %vm63 = vcmask 458112
    %64 = vst.msk [vmem:[#allocation0] sm:$0x1] %vm63, %v62
    %s65 = scalar_lea.vmem %s0, 5
    %v66 = vld [vmem:[%s65] sm:$0x1]
    %67 = vrot.lane.b32.xlu0 %v66, 40
    %v68 = vpop.permute.xlu0 %67
    %vm69 = vcmask 392512
    %70 = vst.msk [vmem:[#allocation0] sm:$0x1] %vm69, %v68
    %s71 = scalar_lea.vmem %s0, 4
    %v72 = vld [vmem:[%s71] sm:$0x1]
    %73 = vrot.lane.b32.xlu0 %v72, 32
    %v74 = vpop.permute.xlu0 %73
    %vm75 = vcmask 326912
    %76 = vst.msk [vmem:[#allocation0] sm:$0x1] %vm75, %v74
    %s77 = scalar_lea.vmem %s0, 3
    %v78 = vld [vmem:[%s77] sm:$0x1]
    %79 = vrot.lane.b32.xlu0 %v78, 24
    %v80 = vpop.permute.xlu0 %79
    %vm81 = vcmask 261312
    %82 = vst.msk [vmem:[#allocation0] sm:$0x1] %vm81, %v80
    %s83 = scalar_lea.vmem %s0, 2
    %v84 = vld [vmem:[%s83] sm:$0x1]
    %85 = vrot.lane.b32.xlu0 %v84, 16
    %v86 = vpop.permute.xlu0 %85
    %vm87 = vcmask 195712
    %88 = vst.msk [vmem:[#allocation0] sm:$0x1] %vm87, %v86
    %s89 = scalar_lea.vmem %s0, 1
    %v90 = vld [vmem:[%s89] sm:$0x1]
    %91 = vrot.lane.b32.xlu0 %v90, 8
    %v92 = vpop.permute.xlu0 %91
    %vm93 = vcmask 130112
    %94 = vst.msk [vmem:[#allocation0] sm:$0x1] %vm93, %v92
    %s96 = sshllo.u32 0, 1
    %v98 = vld [vmem:[#allocation0] sm:%s96]
    %s99 = sshllo.u32 0, 1
    %100 = vst [vmem:[%s1] sm:%s99] %v98

// kernel: _lambda_.33
$region0: #{_lambda_.33}
  #allocation0 [shape = 'u32[]', space=smem, size = 0x4, offset = 0x4, fixed_abs, tag = 'smem constant byte address 0x4 - core index']
  #allocation1 [shape = 'u32[144,128]{1,0:T(1,128)}', space=vmem, size = 0x12000, scoped, tag = 'internal scratch']
  %s0 = inlined_call_operand.vmem [shape: f32[32,128], index: 0, kind: input, shape index: {}]
  %s1 = inlined_call_operand.vmem [shape: f32[1,128], index: 1, kind: input, shape index: {}]
  %s2 = inlined_call_operand.vmem [shape: f32[1,128], index: 2, kind: input, shape index: {}]
  %s3 = inlined_call_operand.vmem [shape: f32[32,128], index: 3, kind: output, shape index: {}]
  %s4 = sld [smem:[#allocation0]]
  $region22: #{_lambda_.33} parent=0
    _
  %s6 = ssub.s32 1, %s4
  %s7 = scalar_select 0, %s6, %s4
  // Predicated region
  $region2: #{_lambda_.33} parent=0 // pred_check
    _
  $region3: #{_lambda_.33} parent=0 // pred_check_branch
    %9 = sbr.rel (0) target = $region5
  $region4: #{_lambda_.33} parent=0 // pred_region
    _
  $region5: #{_lambda_.33} parent=0 // pred_fallthru
    _
  // Predicated region
  $region6: #{_lambda_.33} parent=0 // pred_check
    _
  $region7: #{_lambda_.33} parent=0 // pred_check_branch
    %11 = sbr.rel (0) target = $region9
  $region8: #{_lambda_.33} parent=0 // pred_region
    _
  $region9: #{_lambda_.33} parent=0 // pred_fallthru
    _
  // Predicated region
  $region10: #{_lambda_.33} parent=0 // pred_check
    _
  $region11: #{_lambda_.33} parent=0 // pred_check_branch
    %13 = sbr.rel (0) target = $region13
  $region12: #{_lambda_.33} parent=0 // pred_region
    _
  $region13: #{_lambda_.33} parent=0 // pred_fallthru
    _
  %v14 = vld [vmem:[%s0] sm:$0xff]
  %v15 = vld [vmem:[%s0 + $0x8] sm:$0xff]
  %v16 = vld [vmem:[%s0 + $0x10] sm:$0xff]
  %v17 = vld [vmem:[%s0 + $0x18] sm:$0xff]
  %v18 = vld [vmem:[%s1] sm:$0x1]
  %v20 = vlaneseq
  %v21 = vshrl.u32 %v20, 7
  %v22 = vsub.s32 0, %v21
  %v23 = vrot.slane %v18, %v22
  %v25 = vmul.f32 %v14, %v23
  %v26 = vmul.f32 %v15, %v23
  %v27 = vmul.f32 %v16, %v23
  %v28 = vmul.f32 %v17, %v23
  %v29 = vld [vmem:[%s2] sm:$0x1]
  %v31 = vlaneseq
  %v32 = vshrl.u32 %v31, 7
  %v33 = vsub.s32 0, %v32
  %v34 = vrot.slane %v29, %v33
  %v36 = vadd.f32 %v25, %v34
  %v37 = vadd.f32 %v26, %v34
  %v38 = vadd.f32 %v27, %v34
  %v39 = vadd.f32 %v28, %v34
  %40 = vst [vmem:[%s3] sm:$0xff] %v36
  %41 = vst [vmem:[%s3 + $0x8] sm:$0xff] %v37
  %42 = vst [vmem:[%s3 + $0x10] sm:$0xff] %v38
  %43 = vst [vmem:[%s3 + $0x18] sm:$0xff] %v39
  // Predicated region
  $region14: #{_lambda_.33} parent=0 // pred_check
    _
  $region15: #{_lambda_.33} parent=0 // pred_check_branch
    %45 = sbr.rel (0) target = $region17
  $region16: #{_lambda_.33} parent=0 // pred_region
    _
  $region17: #{_lambda_.33} parent=0 // pred_fallthru
    _
  // Predicated region
  $region18: #{_lambda_.33} parent=0 // pred_check
    _
  $region19: #{_lambda_.33} parent=0 // pred_check_branch
    %47 = sbr.rel (0) target = $region21
  $region20: #{_lambda_.33} parent=0 // pred_region
    _
  $region21: #{_lambda_.33} parent=0 // pred_fallthru
    _

// kernel: _lambda_.34
$region0: #{_lambda_.34}
  #allocation0 [shape = 'u32[]', space=smem, size = 0x4, offset = 0x4, fixed_abs, tag = 'smem constant byte address 0x4 - core index']
  #allocation1 [shape = 'u32[144,128]{1,0:T(1,128)}', space=vmem, size = 0x12000, scoped, tag = 'internal scratch']
  %s0 = inlined_call_operand.vmem [shape: f32[512,16], index: 0, kind: input, shape index: {}]
  %s1 = inlined_call_operand.vmem [shape: f32[16,128], index: 1, kind: input, shape index: {}]
  %s2 = inlined_call_operand.vmem [shape: f32[512,128], index: 2, kind: output, shape index: {}]
  %s3 = sld [smem:[#allocation0]]
  $region18: #{_lambda_.34} parent=0
    _
  %s5 = ssub.s32 1, %s3
  %s6 = scalar_select 0, %s5, %s3
  // Predicated region
  $region2: #{_lambda_.34} parent=0 // pred_check
    _
  $region3: #{_lambda_.34} parent=0 // pred_check_branch
    %8 = sbr.rel (0) target = $region5
  $region4: #{_lambda_.34} parent=0 // pred_region
    _
  $region5: #{_lambda_.34} parent=0 // pred_fallthru
    _
  // Predicated region
  $region6: #{_lambda_.34} parent=0 // pred_check
    _
  $region7: #{_lambda_.34} parent=0 // pred_check_branch
    %10 = sbr.rel (0) target = $region9
  $region8: #{_lambda_.34} parent=0 // pred_region
    _
  $region9: #{_lambda_.34} parent=0 // pred_fallthru
    _
  %v11 = vld [vmem:[%s0] sm:$0xff]
  %v12 = vld [vmem:[%s0 + $0x8] sm:$0xff]
  %v13 = vld [vmem:[%s0 + $0x10] sm:$0xff]
  %v14 = vld [vmem:[%s0 + $0x18] sm:$0xff]
  %v15 = vld [vmem:[%s0 + $0x20] sm:$0xff]
  %v16 = vld [vmem:[%s0 + $0x28] sm:$0xff]
  %v17 = vld [vmem:[%s0 + $0x30] sm:$0xff]
  %v18 = vld [vmem:[%s0 + $0x38] sm:$0xff]
  %v19 = vld [vmem:[%s0 + $0x40] sm:$0xff]
  %v20 = vld [vmem:[%s0 + $0x48] sm:$0xff]
  %v21 = vld [vmem:[%s0 + $0x50] sm:$0xff]
  %v22 = vld [vmem:[%s0 + $0x58] sm:$0xff]
  %v23 = vld [vmem:[%s0 + $0x60] sm:$0xff]
  %v24 = vld [vmem:[%s0 + $0x68] sm:$0xff]
  %v25 = vld [vmem:[%s0 + $0x70] sm:$0xff]
  %v26 = vld [vmem:[%s0 + $0x78] sm:$0xff]
  %v27 = vld [vmem:[%s0 + $0x80] sm:$0xff]
  %v28 = vld [vmem:[%s0 + $0x88] sm:$0xff]
  %v29 = vld [vmem:[%s0 + $0x90] sm:$0xff]
  %v30 = vld [vmem:[%s0 + $0x98] sm:$0xff]
  %v31 = vld [vmem:[%s0 + $0xa0] sm:$0xff]
  %v32 = vld [vmem:[%s0 + $0xa8] sm:$0xff]
  %v33 = vld [vmem:[%s0 + $0xb0] sm:$0xff]
  %v34 = vld [vmem:[%s0 + $0xb8] sm:$0xff]
  %v35 = vld [vmem:[%s0 + $0xc0] sm:$0xff]
  %v36 = vld [vmem:[%s0 + $0xc8] sm:$0xff]
  %v37 = vld [vmem:[%s0 + $0xd0] sm:$0xff]
  %v38 = vld [vmem:[%s0 + $0xd8] sm:$0xff]
  %v39 = vld [vmem:[%s0 + $0xe0] sm:$0xff]
  %v40 = vld [vmem:[%s0 + $0xe8] sm:$0xff]
  %v41 = vld [vmem:[%s0 + $0xf0] sm:$0xff]
  %v42 = vld [vmem:[%s0 + $0xf8] sm:$0xff]
  %v43 = vld [vmem:[%s0 + $0x100] sm:$0xff]
  %v44 = vld [vmem:[%s0 + $0x108] sm:$0xff]
  %v45 = vld [vmem:[%s0 + $0x110] sm:$0xff]
  %v46 = vld [vmem:[%s0 + $0x118] sm:$0xff]
  %v47 = vld [vmem:[%s0 + $0x120] sm:$0xff]
  %v48 = vld [vmem:[%s0 + $0x128] sm:$0xff]
  %v49 = vld [vmem:[%s0 + $0x130] sm:$0xff]
  %v50 = vld [vmem:[%s0 + $0x138] sm:$0xff]
  %v51 = vld [vmem:[%s0 + $0x140] sm:$0xff]
  %v52 = vld [vmem:[%s0 + $0x148] sm:$0xff]
  %v53 = vld [vmem:[%s0 + $0x150] sm:$0xff]
  %v54 = vld [vmem:[%s0 + $0x158] sm:$0xff]
  %v55 = vld [vmem:[%s0 + $0x160] sm:$0xff]
  %v56 = vld [vmem:[%s0 + $0x168] sm:$0xff]
  %v57 = vld [vmem:[%s0 + $0x170] sm:$0xff]
  %v58 = vld [vmem:[%s0 + $0x178] sm:$0xff]
  %v59 = vld [vmem:[%s0 + $0x180] sm:$0xff]
  %v60 = vld [vmem:[%s0 + $0x188] sm:$0xff]
  %v61 = vld [vmem:[%s0 + $0x190] sm:$0xff]
  %v62 = vld [vmem:[%s0 + $0x198] sm:$0xff]
  %v63 = vld [vmem:[%s0 + $0x1a0] sm:$0xff]
  %v64 = vld [vmem:[%s0 + $0x1a8] sm:$0xff]
  %v65 = vld [vmem:[%s0 + $0x1b0] sm:$0xff]
  %v66 = vld [vmem:[%s0 + $0x1b8] sm:$0xff]
  %v67 = vld [vmem:[%s0 + $0x1c0] sm:$0xff]
  %v68 = vld [vmem:[%s0 + $0x1c8] sm:$0xff]
  %v69 = vld [vmem:[%s0 + $0x1d0] sm:$0xff]
  %v70 = vld [vmem:[%s0 + $0x1d8] sm:$0xff]
  %v71 = vld [vmem:[%s0 + $0x1e0] sm:$0xff]
  %v72 = vld [vmem:[%s0 + $0x1e8] sm:$0xff]
  %v73 = vld [vmem:[%s0 + $0x1f0] sm:$0xff]
  %v74 = vld [vmem:[%s0 + $0x1f8] sm:$0xff]
  %v75 = vmax.f32 %v11, 0.0
  %v76 = vmax.f32 %v12, 0.0
  %v77 = vmax.f32 %v13, 0.0
  %v78 = vmax.f32 %v14, 0.0
  %v79 = vmax.f32 %v15, 0.0
  %v80 = vmax.f32 %v16, 0.0
  %v81 = vmax.f32 %v17, 0.0
  %v82 = vmax.f32 %v18, 0.0
  %v83 = vmax.f32 %v19, 0.0
  %v84 = vmax.f32 %v20, 0.0
  %v85 = vmax.f32 %v21, 0.0
  %v86 = vmax.f32 %v22, 0.0
  %v87 = vmax.f32 %v23, 0.0
  %v88 = vmax.f32 %v24, 0.0
  %v89 = vmax.f32 %v25, 0.0
  %v90 = vmax.f32 %v26, 0.0
  %v91 = vmax.f32 %v27, 0.0
  %v92 = vmax.f32 %v28, 0.0
  %v93 = vmax.f32 %v29, 0.0
  %v94 = vmax.f32 %v30, 0.0
  %v95 = vmax.f32 %v31, 0.0
  %v96 = vmax.f32 %v32, 0.0
  %v97 = vmax.f32 %v33, 0.0
  %v98 = vmax.f32 %v34, 0.0
  %v99 = vmax.f32 %v35, 0.0
  %v100 = vmax.f32 %v36, 0.0
  %v101 = vmax.f32 %v37, 0.0
  %v102 = vmax.f32 %v38, 0.0
  %v103 = vmax.f32 %v39, 0.0
  %v104 = vmax.f32 %v40, 0.0
  %v105 = vmax.f32 %v41, 0.0
  %v106 = vmax.f32 %v42, 0.0
  %v107 = vmax.f32 %v43, 0.0
  %v108 = vmax.f32 %v44, 0.0
  %v109 = vmax.f32 %v45, 0.0
  %v110 = vmax.f32 %v46, 0.0
  %v111 = vmax.f32 %v47, 0.0
  %v112 = vmax.f32 %v48, 0.0
  %v113 = vmax.f32 %v49, 0.0
  %v114 = vmax.f32 %v50, 0.0
  %v115 = vmax.f32 %v51, 0.0
  %v116 = vmax.f32 %v52, 0.0
  %v117 = vmax.f32 %v53, 0.0
  %v118 = vmax.f32 %v54, 0.0
  %v119 = vmax.f32 %v55, 0.0
  %v120 = vmax.f32 %v56, 0.0
  %v121 = vmax.f32 %v57, 0.0
  %v122 = vmax.f32 %v58, 0.0
  %v123 = vmax.f32 %v59, 0.0
  %v124 = vmax.f32 %v60, 0.0
  %v125 = vmax.f32 %v61, 0.0
  %v126 = vmax.f32 %v62, 0.0
  %v127 = vmax.f32 %v63, 0.0
  %v128 = vmax.f32 %v64, 0.0
  %v129 = vmax.f32 %v65, 0.0
  %v130 = vmax.f32 %v66, 0.0
  %v131 = vmax.f32 %v67, 0.0
  %v132 = vmax.f32 %v68, 0.0
  %v133 = vmax.f32 %v69, 0.0
  %v134 = vmax.f32 %v70, 0.0
  %v135 = vmax.f32 %v71, 0.0
  %v136 = vmax.f32 %v72, 0.0
  %v137 = vmax.f32 %v73, 0.0
  %v138 = vmax.f32 %v74, 0.0
  %v139 = vld [vmem:[%s1] sm:$0xff]
  %v140 = vld [vmem:[%s1 + $0x8] sm:$0xff]
  %vm141 = vcmask 130048
  %v143 = vsel %vm141, %v75, 0
  %v146 = vsel %vm141, %v76, 0
  %v149 = vsel %vm141, %v77, 0
  %v152 = vsel %vm141, %v78, 0
  %v155 = vsel %vm141, %v79, 0
  %v158 = vsel %vm141, %v80, 0
  %v161 = vsel %vm141, %v81, 0
  %v164 = vsel %vm141, %v82, 0
  %v167 = vsel %vm141, %v83, 0
  %v170 = vsel %vm141, %v84, 0
  %v173 = vsel %vm141, %v85, 0
  %v176 = vsel %vm141, %v86, 0
  %v179 = vsel %vm141, %v87, 0
  %v182 = vsel %vm141, %v88, 0
  %v185 = vsel %vm141, %v89, 0
  %v188 = vsel %vm141, %v90, 0
  %v191 = vsel %vm141, %v91, 0
  %v194 = vsel %vm141, %v92, 0
  %v197 = vsel %vm141, %v93, 0
  %v200 = vsel %vm141, %v94, 0
  %v203 = vsel %vm141, %v95, 0
  %v206 = vsel %vm141, %v96, 0
  %v209 = vsel %vm141, %v97, 0
  %v212 = vsel %vm141, %v98, 0
  %v215 = vsel %vm141, %v99, 0
  %v218 = vsel %vm141, %v100, 0
  %v221 = vsel %vm141, %v101, 0
  %v224 = vsel %vm141, %v102, 0
  %v227 = vsel %vm141, %v103, 0
  %v230 = vsel %vm141, %v104, 0
  %v233 = vsel %vm141, %v105, 0
  %v236 = vsel %vm141, %v106, 0
  %v239 = vsel %vm141, %v107, 0
  %v242 = vsel %vm141, %v108, 0
  %v245 = vsel %vm141, %v109, 0
  %v248 = vsel %vm141, %v110, 0
  %v251 = vsel %vm141, %v111, 0
  %v254 = vsel %vm141, %v112, 0
  %v257 = vsel %vm141, %v113, 0
  %v260 = vsel %vm141, %v114, 0
  %v263 = vsel %vm141, %v115, 0
  %v266 = vsel %vm141, %v116, 0
  %v269 = vsel %vm141, %v117, 0
  %v272 = vsel %vm141, %v118, 0
  %v275 = vsel %vm141, %v119, 0
  %v278 = vsel %vm141, %v120, 0
  %v281 = vsel %vm141, %v121, 0
  %v284 = vsel %vm141, %v122, 0
  %v287 = vsel %vm141, %v123, 0
  %v290 = vsel %vm141, %v124, 0
  %v293 = vsel %vm141, %v125, 0
  %v296 = vsel %vm141, %v126, 0
  %v299 = vsel %vm141, %v127, 0
  %v302 = vsel %vm141, %v128, 0
  %v305 = vsel %vm141, %v129, 0
  %v308 = vsel %vm141, %v130, 0
  %v311 = vsel %vm141, %v131, 0
  %v314 = vsel %vm141, %v132, 0
  %v317 = vsel %vm141, %v133, 0
  %v320 = vsel %vm141, %v134, 0
  %v323 = vsel %vm141, %v135, 0
  %v326 = vsel %vm141, %v136, 0
  %v329 = vsel %vm141, %v137, 0
  %v332 = vsel %vm141, %v138, 0
  %334 = vmatprep.subr.mxu0 0.0
  %335 = vmatpush1.msra.mxu0 %v139
  %336 = vmatprep.subr.mxu0 0.0
  %337 = vmatpush1.msra.mxu0 %v140
  %338 = vmatprep.subr.mxu0 0.0
  %339 = vmatpush1.msra.mxu0 0.0
  %340 = vmatprep.subr.mxu0 0.0
  %341 = vmatpush1.msra.mxu0 0.0
  %342 = vmatprep.subr.mxu0 0.0
  %343 = vmatpush1.msra.mxu0 0.0
  %344 = vmatprep.subr.mxu0 0.0
  %345 = vmatpush1.msra.mxu0 0.0
  %346 = vmatprep.subr.mxu0 0.0
  %347 = vmatpush1.msra.mxu0 0.0
  %348 = vmatprep.subr.mxu0 0.0
  %349 = vmatpush1.msra.mxu0 0.0
  %350 = vmatprep.subr.mxu0 0.0
  %351 = vmatpush1.msra.mxu0 0.0
  %352 = vmatprep.subr.mxu0 0.0
  %353 = vmatpush1.msra.mxu0 0.0
  %354 = vmatprep.subr.mxu0 0.0
  %355 = vmatpush1.msra.mxu0 0.0
  %356 = vmatprep.subr.mxu0 0.0
  %357 = vmatpush1.msra.mxu0 0.0
  %358 = vmatprep.subr.mxu0 0.0
  %359 = vmatpush1.msra.mxu0 0.0
  %360 = vmatprep.subr.mxu0 0.0
  %361 = vmatpush1.msra.mxu0 0.0
  %362 = vmatprep.subr.mxu0 0.0
  %363 = vmatpush1.msra.mxu0 0.0
  %364 = vmatprep.subr.mxu0 0.0
  %365 = vmatpush1.msra.mxu0 0.0
  %366 = vmatprep.subr.mxu0 0.0
  %367 = vmatpush1.msra.mxu0 0.0
  %368 = vmatprep.subr.mxu0 0.0
  %369 = vmatpush1.msra.mxu0 0.0
  %370 = vmatprep.subr.mxu0 0.0
  %371 = vmatpush1.msra.mxu0 0.0
  %372 = vmatprep.subr.mxu0 0.0
  %373 = vmatpush1.msra.mxu0 0.0
  %374 = vmatprep.subr.mxu0 0.0
  %375 = vmatpush1.msra.mxu0 0.0
  %376 = vmatprep.subr.mxu0 0.0
  %377 = vmatpush1.msra.mxu0 0.0
  %378 = vmatprep.subr.mxu0 0.0
  %379 = vmatpush1.msra.mxu0 0.0
  %380 = vmatprep.subr.mxu0 0.0
  %381 = vmatpush1.msra.mxu0 0.0
  %382 = vmatprep.subr.mxu0 0.0
  %383 = vmatpush1.msra.mxu0 0.0
  %384 = vmatprep.subr.mxu0 0.0
  %385 = vmatpush1.msra.mxu0 0.0
  %386 = vmatprep.subr.mxu0 0.0
  %387 = vmatpush1.msra.mxu0 0.0
  %388 = vmatprep.subr.mxu0 0.0
  %389 = vmatpush1.msra.mxu0 0.0
  %390 = vmatprep.subr.mxu0 0.0
  %391 = vmatpush1.msra.mxu0 0.0
  %392 = vmatprep.subr.mxu0 0.0
  %393 = vmatpush1.msra.mxu0 0.0
  %394 = vmatprep.subr.mxu0 0.0
  %395 = vmatpush1.msra.mxu0 0.0
  %396 = vmatprep.subr.mxu0 0.0
  %397 = vmatpush1.msra.mxu0 0.0
  %398 = vmatprep.mubr.f32.mxu0 0.0
  %399 = vmatmul.mubr.f32.gmra.mrb[0].mxu0 %v143
  %v400 = vpop.f32.mrb[0].mxu0
  %v401 = vadd.f32 0.0, %v400
  %v402 = vpop.f32.mrb[0].mxu0
  %403 = vmatprep.mubr.f32.mxu0 0.0
  %404 = vmatmul.mubr.f32.gmra.mrb[0].mxu0 %v146
  %v405 = vpop.f32.mrb[0].mxu0
  %v406 = vadd.f32 0.0, %v405
  %v407 = vpop.f32.mrb[0].mxu0
  %408 = vmatprep.mubr.f32.mxu0 0.0
  %409 = vmatmul.mubr.f32.gmra.mrb[0].mxu0 %v149
  %v410 = vpop.f32.mrb[0].mxu0
  %v411 = vadd.f32 0.0, %v410
  %v412 = vpop.f32.mrb[0].mxu0
  %413 = vmatprep.mubr.f32.mxu0 0.0
  %414 = vmatmul.mubr.f32.gmra.mrb[0].mxu0 %v152
  %v415 = vpop.f32.mrb[0].mxu0
  %v416 = vadd.f32 0.0, %v415
  %v417 = vpop.f32.mrb[0].mxu0
  %418 = vmatprep.mubr.f32.mxu0 0.0
  %419 = vmatmul.mubr.f32.gmra.mrb[0].mxu0 %v155
  %v420 = vpop.f32.mrb[0].mxu0
  %v421 = vadd.f32 0.0, %v420
  %v422 = vpop.f32.mrb[0].mxu0
  %423 = vmatprep.mubr.f32.mxu0 0.0
  %424 = vmatmul.mubr.f32.gmra.mrb[0].mxu0 %v158
  %v425 = vpop.f32.mrb[0].mxu0
  %v426 = vadd.f32 0.0, %v425
  %v427 = vpop.f32.mrb[0].mxu0
  %428 = vmatprep.mubr.f32.mxu0 0.0
  %429 = vmatmul.mubr.f32.gmra.mrb[0].mxu0 %v161
  %v430 = vpop.f32.mrb[0].mxu0
  %v431 = vadd.f32 0.0, %v430
  %v432 = vpop.f32.mrb[0].mxu0
  %433 = vmatprep.mubr.f32.mxu0 0.0
  %434 = vmatmul.mubr.f32.gmra.mrb[0].mxu0 %v164
  %v435 = vpop.f32.mrb[0].mxu0
  %v436 = vadd.f32 0.0, %v435
  %v437 = vpop.f32.mrb[0].mxu0
  %438 = vmatprep.mubr.f32.mxu0 0.0
  %439 = vmatmul.mubr.f32.gmra.mrb[0].mxu0 %v167
  %v440 = vpop.f32.mrb[0].mxu0
  %v441 = vadd.f32 0.0, %v440
  %v442 = vpop.f32.mrb[0].mxu0
  %443 = vmatprep.mubr.f32.mxu0 0.0
  %444 = vmatmul.mubr.f32.gmra.mrb[0].mxu0 %v170
  %v445 = vpop.f32.mrb[0].mxu0
  %v446 = vadd.f32 0.0, %v445
  %v447 = vpop.f32.mrb[0].mxu0
  %448 = vmatprep.mubr.f32.mxu0 0.0
  %449 = vmatmul.mubr.f32.gmra.mrb[0].mxu0 %v173
  %v450 = vpop.f32.mrb[0].mxu0
  %v451 = vadd.f32 0.0, %v450
  %v452 = vpop.f32.mrb[0].mxu0
  %453 = vmatprep.mubr.f32.mxu0 0.0
  %454 = vmatmul.mubr.f32.gmra.mrb[0].mxu0 %v176
  %v455 = vpop.f32.mrb[0].mxu0
  %v456 = vadd.f32 0.0, %v455
  %v457 = vpop.f32.mrb[0].mxu0
  %458 = vmatprep.mubr.f32.mxu0 0.0
  %459 = vmatmul.mubr.f32.gmra.mrb[0].mxu0 %v179
  %v460 = vpop.f32.mrb[0].mxu0
  %v461 = vadd.f32 0.0, %v460
  %v462 = vpop.f32.mrb[0].mxu0
  %463 = vmatprep.mubr.f32.mxu0 0.0
  %464 = vmatmul.mubr.f32.gmra.mrb[0].mxu0 %v182
  %v465 = vpop.f32.mrb[0].mxu0
  %v466 = vadd.f32 0.0, %v465
  %v467 = vpop.f32.mrb[0].mxu0
  %468 = vmatprep.mubr.f32.mxu0 0.0
  %469 = vmatmul.mubr.f32.gmra.mrb[0].mxu0 %v185
  %v470 = vpop.f32.mrb[0].mxu0
  %v471 = vadd.f32 0.0, %v470
  %v472 = vpop.f32.mrb[0].mxu0
  %473 = vmatprep.mubr.f32.mxu0 0.0
  %474 = vmatmul.mubr.f32.gmra.mrb[0].mxu0 %v188
  %v475 = vpop.f32.mrb[0].mxu0
  %v476 = vadd.f32 0.0, %v475
  %v477 = vpop.f32.mrb[0].mxu0
  %478 = vmatprep.mubr.f32.mxu0 0.0
  %479 = vmatmul.mubr.f32.gmra.mrb[0].mxu0 %v191
  %v480 = vpop.f32.mrb[0].mxu0
  %v481 = vadd.f32 0.0, %v480
  %v482 = vpop.f32.mrb[0].mxu0
  %483 = vmatprep.mubr.f32.mxu0 0.0
  %484 = vmatmul.mubr.f32.gmra.mrb[0].mxu0 %v194
  %v485 = vpop.f32.mrb[0].mxu0
  %v486 = vadd.f32 0.0, %v485
  %v487 = vpop.f32.mrb[0].mxu0
  %488 = vmatprep.mubr.f32.mxu0 0.0
  %489 = vmatmul.mubr.f32.gmra.mrb[0].mxu0 %v197
  %v490 = vpop.f32.mrb[0].mxu0
  %v491 = vadd.f32 0.0, %v490
  %v492 = vpop.f32.mrb[0].mxu0
  %493 = vmatprep.mubr.f32.mxu0 0.0
  %494 = vmatmul.mubr.f32.gmra.mrb[0].mxu0 %v200
  %v495 = vpop.f32.mrb[0].mxu0
  %v496 = vadd.f32 0.0, %v495
  %v497 = vpop.f32.mrb[0].mxu0
  %498 = vmatprep.mubr.f32.mxu0 0.0
  %499 = vmatmul.mubr.f32.gmra.mrb[0].mxu0 %v203
  %v500 = vpop.f32.mrb[0].mxu0
  %v501 = vadd.f32 0.0, %v500
  %v502 = vpop.f32.mrb[0].mxu0
  %503 = vmatprep.mubr.f32.mxu0 0.0
  %504 = vmatmul.mubr.f32.gmra.mrb[0].mxu0 %v206
  %v505 = vpop.f32.mrb[0].mxu0
  %v506 = vadd.f32 0.0, %v505
  %v507 = vpop.f32.mrb[0].mxu0
  %508 = vmatprep.mubr.f32.mxu0 0.0
  %509 = vmatmul.mubr.f32.gmra.mrb[0].mxu0 %v209
  %v510 = vpop.f32.mrb[0].mxu0
  %v511 = vadd.f32 0.0, %v510
  %v512 = vpop.f32.mrb[0].mxu0
  %513 = vmatprep.mubr.f32.mxu0 0.0
  %514 = vmatmul.mubr.f32.gmra.mrb[0].mxu0 %v212
  %v515 = vpop.f32.mrb[0].mxu0
  %v516 = vadd.f32 0.0, %v515
  %v517 = vpop.f32.mrb[0].mxu0
  %518 = vmatprep.mubr.f32.mxu0 0.0
  %519 = vmatmul.mubr.f32.gmra.mrb[0].mxu0 %v215
  %v520 = vpop.f32.mrb[0].mxu0
  %v521 = vadd.f32 0.0, %v520
  %v522 = vpop.f32.mrb[0].mxu0
  %523 = vmatprep.mubr.f32.mxu0 0.0
  %524 = vmatmul.mubr.f32.gmra.mrb[0].mxu0 %v218
  %v525 = vpop.f32.mrb[0].mxu0
  %v526 = vadd.f32 0.0, %v525
  %v527 = vpop.f32.mrb[0].mxu0
  %528 = vmatprep.mubr.f32.mxu0 0.0
  %529 = vmatmul.mubr.f32.gmra.mrb[0].mxu0 %v221
  %v530 = vpop.f32.mrb[0].mxu0
  %v531 = vadd.f32 0.0, %v530
  %v532 = vpop.f32.mrb[0].mxu0
  %533 = vmatprep.mubr.f32.mxu0 0.0
  %534 = vmatmul.mubr.f32.gmra.mrb[0].mxu0 %v224
  %v535 = vpop.f32.mrb[0].mxu0
  %v536 = vadd.f32 0.0, %v535
  %v537 = vpop.f32.mrb[0].mxu0
  %538 = vmatprep.mubr.f32.mxu0 0.0
  %539 = vmatmul.mubr.f32.gmra.mrb[0].mxu0 %v227
  %v540 = vpop.f32.mrb[0].mxu0
  %v541 = vadd.f32 0.0, %v540
  %v542 = vpop.f32.mrb[0].mxu0
  %543 = vmatprep.mubr.f32.mxu0 0.0
  %544 = vmatmul.mubr.f32.gmra.mrb[0].mxu0 %v230
  %v545 = vpop.f32.mrb[0].mxu0
  %v546 = vadd.f32 0.0, %v545
  %v547 = vpop.f32.mrb[0].mxu0
  %548 = vmatprep.mubr.f32.mxu0 0.0
  %549 = vmatmul.mubr.f32.gmra.mrb[0].mxu0 %v233
  %v550 = vpop.f32.mrb[0].mxu0
  %v551 = vadd.f32 0.0, %v550
  %v552 = vpop.f32.mrb[0].mxu0
  %553 = vmatprep.mubr.f32.mxu0 0.0
  %554 = vmatmul.mubr.f32.gmra.mrb[0].mxu0 %v236
  %v555 = vpop.f32.mrb[0].mxu0
  %v556 = vadd.f32 0.0, %v555
  %v557 = vpop.f32.mrb[0].mxu0
  %558 = vmatprep.mubr.f32.mxu0 0.0
  %559 = vmatmul.mubr.f32.gmra.mrb[0].mxu0 %v239
  %v560 = vpop.f32.mrb[0].mxu0
  %v561 = vadd.f32 0.0, %v560
  %v562 = vpop.f32.mrb[0].mxu0
  %563 = vmatprep.mubr.f32.mxu0 0.0
  %564 = vmatmul.mubr.f32.gmra.mrb[0].mxu0 %v242
  %v565 = vpop.f32.mrb[0].mxu0
  %v566 = vadd.f32 0.0, %v565
  %v567 = vpop.f32.mrb[0].mxu0
  %568 = vmatprep.mubr.f32.mxu0 0.0
  %569 = vmatmul.mubr.f32.gmra.mrb[0].mxu0 %v245
  %v570 = vpop.f32.mrb[0].mxu0
  %v571 = vadd.f32 0.0, %v570
  %v572 = vpop.f32.mrb[0].mxu0
  %573 = vmatprep.mubr.f32.mxu0 0.0
  %574 = vmatmul.mubr.f32.gmra.mrb[0].mxu0 %v248
  %v575 = vpop.f32.mrb[0].mxu0
  %v576 = vadd.f32 0.0, %v575
  %v577 = vpop.f32.mrb[0].mxu0
  %578 = vmatprep.mubr.f32.mxu0 0.0
  %579 = vmatmul.mubr.f32.gmra.mrb[0].mxu0 %v251
  %v580 = vpop.f32.mrb[0].mxu0
  %v581 = vadd.f32 0.0, %v580
  %v582 = vpop.f32.mrb[0].mxu0
  %583 = vmatprep.mubr.f32.mxu0 0.0
  %584 = vmatmul.mubr.f32.gmra.mrb[0].mxu0 %v254
  %v585 = vpop.f32.mrb[0].mxu0
  %v586 = vadd.f32 0.0, %v585
  %v587 = vpop.f32.mrb[0].mxu0
  %588 = vmatprep.mubr.f32.mxu0 0.0
  %589 = vmatmul.mubr.f32.gmra.mrb[0].mxu0 %v257
  %v590 = vpop.f32.mrb[0].mxu0
  %v591 = vadd.f32 0.0, %v590
  %v592 = vpop.f32.mrb[0].mxu0
  %593 = vmatprep.mubr.f32.mxu0 0.0
  %594 = vmatmul.mubr.f32.gmra.mrb[0].mxu0 %v260
  %v595 = vpop.f32.mrb[0].mxu0
  %v596 = vadd.f32 0.0, %v595
  %v597 = vpop.f32.mrb[0].mxu0
  %598 = vmatprep.mubr.f32.mxu0 0.0
  %599 = vmatmul.mubr.f32.gmra.mrb[0].mxu0 %v263
  %v600 = vpop.f32.mrb[0].mxu0
  %v601 = vadd.f32 0.0, %v600
  %v602 = vpop.f32.mrb[0].mxu0
  %603 = vmatprep.mubr.f32.mxu0 0.0
  %604 = vmatmul.mubr.f32.gmra.mrb[0].mxu0 %v266
  %v605 = vpop.f32.mrb[0].mxu0
  %v606 = vadd.f32 0.0, %v605
  %v607 = vpop.f32.mrb[0].mxu0
  %608 = vmatprep.mubr.f32.mxu0 0.0
  %609 = vmatmul.mubr.f32.gmra.mrb[0].mxu0 %v269
  %v610 = vpop.f32.mrb[0].mxu0
  %v611 = vadd.f32 0.0, %v610
  %v612 = vpop.f32.mrb[0].mxu0
  %613 = vmatprep.mubr.f32.mxu0 0.0
  %614 = vmatmul.mubr.f32.gmra.mrb[0].mxu0 %v272
  %v615 = vpop.f32.mrb[0].mxu0
  %v616 = vadd.f32 0.0, %v615
  %v617 = vpop.f32.mrb[0].mxu0
  %618 = vmatprep.mubr.f32.mxu0 0.0
  %619 = vmatmul.mubr.f32.gmra.mrb[0].mxu0 %v275
  %v620 = vpop.f32.mrb[0].mxu0
  %v621 = vadd.f32 0.0, %v620
  %v622 = vpop.f32.mrb[0].mxu0
  %623 = vmatprep.mubr.f32.mxu0 0.0
  %624 = vmatmul.mubr.f32.gmra.mrb[0].mxu0 %v278
  %v625 = vpop.f32.mrb[0].mxu0
  %v626 = vadd.f32 0.0, %v625
  %v627 = vpop.f32.mrb[0].mxu0
  %628 = vmatprep.mubr.f32.mxu0 0.0
  %629 = vmatmul.mubr.f32.gmra.mrb[0].mxu0 %v281
  %v630 = vpop.f32.mrb[0].mxu0
  %v631 = vadd.f32 0.0, %v630
  %v632 = vpop.f32.mrb[0].mxu0
  %633 = vmatprep.mubr.f32.mxu0 0.0
  %634 = vmatmul.mubr.f32.gmra.mrb[0].mxu0 %v284
  %v635 = vpop.f32.mrb[0].mxu0
  %v636 = vadd.f32 0.0, %v635
  %v637 = vpop.f32.mrb[0].mxu0
  %638 = vmatprep.mubr.f32.mxu0 0.0
  %639 = vmatmul.mubr.f32.gmra.mrb[0].mxu0 %v287
  %v640 = vpop.f32.mrb[0].mxu0
  %v641 = vadd.f32 0.0, %v640
  %v642 = vpop.f32.mrb[0].mxu0
  %643 = vmatprep.mubr.f32.mxu0 0.0
  %644 = vmatmul.mubr.f32.gmra.mrb[0].mxu0 %v290
  %v645 = vpop.f32.mrb[0].mxu0
  %v646 = vadd.f32 0.0, %v645
  %v647 = vpop.f32.mrb[0].mxu0
  %648 = vmatprep.mubr.f32.mxu0 0.0
  %649 = vmatmul.mubr.f32.gmra.mrb[0].mxu0 %v293
  %v650 = vpop.f32.mrb[0].mxu0
  %v651 = vadd.f32 0.0, %v650
  %v652 = vpop.f32.mrb[0].mxu0
  %653 = vmatprep.mubr.f32.mxu0 0.0
  %654 = vmatmul.mubr.f32.gmra.mrb[0].mxu0 %v296
  %v655 = vpop.f32.mrb[0].mxu0
  %v656 = vadd.f32 0.0, %v655
  %v657 = vpop.f32.mrb[0].mxu0
  %658 = vmatprep.mubr.f32.mxu0 0.0
  %659 = vmatmul.mubr.f32.gmra.mrb[0].mxu0 %v299
  %v660 = vpop.f32.mrb[0].mxu0
  %v661 = vadd.f32 0.0, %v660
  %v662 = vpop.f32.mrb[0].mxu0
  %663 = vmatprep.mubr.f32.mxu0 0.0
  %664 = vmatmul.mubr.f32.gmra.mrb[0].mxu0 %v302
  %v665 = vpop.f32.mrb[0].mxu0
  %v666 = vadd.f32 0.0, %v665
  %v667 = vpop.f32.mrb[0].mxu0
  %668 = vmatprep.mubr.f32.mxu0 0.0
  %669 = vmatmul.mubr.f32.gmra.mrb[0].mxu0 %v305
  %v670 = vpop.f32.mrb[0].mxu0
  %v671 = vadd.f32 0.0, %v670
  %v672 = vpop.f32.mrb[0].mxu0
  %673 = vmatprep.mubr.f32.mxu0 0.0
  %674 = vmatmul.mubr.f32.gmra.mrb[0].mxu0 %v308
  %v675 = vpop.f32.mrb[0].mxu0
  %v676 = vadd.f32 0.0, %v675
  %v677 = vpop.f32.mrb[0].mxu0
  %678 = vmatprep.mubr.f32.mxu0 0.0
  %679 = vmatmul.mubr.f32.gmra.mrb[0].mxu0 %v311
  %v680 = vpop.f32.mrb[0].mxu0
  %v681 = vadd.f32 0.0, %v680
  %v682 = vpop.f32.mrb[0].mxu0
  %683 = vmatprep.mubr.f32.mxu0 0.0
  %684 = vmatmul.mubr.f32.gmra.mrb[0].mxu0 %v314
  %v685 = vpop.f32.mrb[0].mxu0
  %v686 = vadd.f32 0.0, %v685
  %v687 = vpop.f32.mrb[0].mxu0
  %688 = vmatprep.mubr.f32.mxu0 0.0
  %689 = vmatmul.mubr.f32.gmra.mrb[0].mxu0 %v317
  %v690 = vpop.f32.mrb[0].mxu0
  %v691 = vadd.f32 0.0, %v690
  %v692 = vpop.f32.mrb[0].mxu0
  %693 = vmatprep.mubr.f32.mxu0 0.0
  %694 = vmatmul.mubr.f32.gmra.mrb[0].mxu0 %v320
  %v695 = vpop.f32.mrb[0].mxu0
  %v696 = vadd.f32 0.0, %v695
  %v697 = vpop.f32.mrb[0].mxu0
  %698 = vmatprep.mubr.f32.mxu0 0.0
  %699 = vmatmul.mubr.f32.gmra.mrb[0].mxu0 %v323
  %v700 = vpop.f32.mrb[0].mxu0
  %v701 = vadd.f32 0.0, %v700
  %v702 = vpop.f32.mrb[0].mxu0
  %703 = vmatprep.mubr.f32.mxu0 0.0
  %704 = vmatmul.mubr.f32.gmra.mrb[0].mxu0 %v326
  %v705 = vpop.f32.mrb[0].mxu0
  %v706 = vadd.f32 0.0, %v705
  %v707 = vpop.f32.mrb[0].mxu0
  %708 = vmatprep.mubr.f32.mxu0 0.0
  %709 = vmatmul.mubr.f32.gmra.mrb[0].mxu0 %v329
  %v710 = vpop.f32.mrb[0].mxu0
  %v711 = vadd.f32 0.0, %v710
  %v712 = vpop.f32.mrb[0].mxu0
  %713 = vmatprep.mubr.f32.mxu0 0.0
  %714 = vmatmul.mubr.f32.gmra.mrb[0].mxu0 %v332
  %v715 = vpop.f32.mrb[0].mxu0
  %v716 = vadd.f32 0.0, %v715
  %v717 = vpop.f32.mrb[0].mxu0
  %718 = vdwg.mxu0
  %719 = vst [vmem:[%s2] sm:$0xff] %v401
  %720 = vst [vmem:[%s2 + $0x8] sm:$0xff] %v406
  %721 = vst [vmem:[%s2 + $0x10] sm:$0xff] %v411
  %722 = vst [vmem:[%s2 + $0x18] sm:$0xff] %v416
  %723 = vst [vmem:[%s2 + $0x20] sm:$0xff] %v421
  %724 = vst [vmem:[%s2 + $0x28] sm:$0xff] %v426
  %725 = vst [vmem:[%s2 + $0x30] sm:$0xff] %v431
  %726 = vst [vmem:[%s2 + $0x38] sm:$0xff] %v436
  %727 = vst [vmem:[%s2 + $0x40] sm:$0xff] %v441
  %728 = vst [vmem:[%s2 + $0x48] sm:$0xff] %v446
  %729 = vst [vmem:[%s2 + $0x50] sm:$0xff] %v451
  %730 = vst [vmem:[%s2 + $0x58] sm:$0xff] %v456
  %731 = vst [vmem:[%s2 + $0x60] sm:$0xff] %v461
  %732 = vst [vmem:[%s2 + $0x68] sm:$0xff] %v466
  %733 = vst [vmem:[%s2 + $0x70] sm:$0xff] %v471
  %734 = vst [vmem:[%s2 + $0x78] sm:$0xff] %v476
  %735 = vst [vmem:[%s2 + $0x80] sm:$0xff] %v481
  %736 = vst [vmem:[%s2 + $0x88] sm:$0xff] %v486
  %737 = vst [vmem:[%s2 + $0x90] sm:$0xff] %v491
  %738 = vst [vmem:[%s2 + $0x98] sm:$0xff] %v496
  %739 = vst [vmem:[%s2 + $0xa0] sm:$0xff] %v501
  %740 = vst [vmem:[%s2 + $0xa8] sm:$0xff] %v506
  %741 = vst [vmem:[%s2 + $0xb0] sm:$0xff] %v511
  %742 = vst [vmem:[%s2 + $0xb8] sm:$0xff] %v516
  %743 = vst [vmem:[%s2 + $0xc0] sm:$0xff] %v521
  %744 = vst [vmem:[%s2 + $0xc8] sm:$0xff] %v526
  %745 = vst [vmem:[%s2 + $0xd0] sm:$0xff] %v531
  %746 = vst [vmem:[%s2 + $0xd8] sm:$0xff] %v536
  %747 = vst [vmem:[%s2 + $0xe0] sm:$0xff] %v541
  %748 = vst [vmem:[%s2 + $0xe8] sm:$0xff] %v546
  %749 = vst [vmem:[%s2 + $0xf0] sm:$0xff] %v551
  %750 = vst [vmem:[%s2 + $0xf8] sm:$0xff] %v556
  %751 = vst [vmem:[%s2 + $0x100] sm:$0xff] %v561
  %752 = vst [vmem:[%s2 + $0x108] sm:$0xff] %v566
  %753 = vst [vmem:[%s2 + $0x110] sm:$0xff] %v571
  %754 = vst [vmem:[%s2 + $0x118] sm:$0xff] %v576
  %755 = vst [vmem:[%s2 + $0x120] sm:$0xff] %v581
  %756 = vst [vmem:[%s2 + $0x128] sm:$0xff] %v586
  %757 = vst [vmem:[%s2 + $0x130] sm:$0xff] %v591
  %758 = vst [vmem:[%s2 + $0x138] sm:$0xff] %v596
  %759 = vst [vmem:[%s2 + $0x140] sm:$0xff] %v601
  %760 = vst [vmem:[%s2 + $0x148] sm:$0xff] %v606
  %761 = vst [vmem:[%s2 + $0x150] sm:$0xff] %v611
  %762 = vst [vmem:[%s2 + $0x158] sm:$0xff] %v616
  %763 = vst [vmem:[%s2 + $0x160] sm:$0xff] %v621
  %764 = vst [vmem:[%s2 + $0x168] sm:$0xff] %v626
  %765 = vst [vmem:[%s2 + $0x170] sm:$0xff] %v631
  %766 = vst [vmem:[%s2 + $0x178] sm:$0xff] %v636
  %767 = vst [vmem:[%s2 + $0x180] sm:$0xff] %v641
  %768 = vst [vmem:[%s2 + $0x188] sm:$0xff] %v646
  %769 = vst [vmem:[%s2 + $0x190] sm:$0xff] %v651
  %770 = vst [vmem:[%s2 + $0x198] sm:$0xff] %v656
  %771 = vst [vmem:[%s2 + $0x1a0] sm:$0xff] %v661
  %772 = vst [vmem:[%s2 + $0x1a8] sm:$0xff] %v666
  %773 = vst [vmem:[%s2 + $0x1b0] sm:$0xff] %v671
  %774 = vst [vmem:[%s2 + $0x1b8] sm:$0xff] %v676
  %775 = vst [vmem:[%s2 + $0x1c0] sm:$0xff] %v681
  %776 = vst [vmem:[%s2 + $0x1c8] sm:$0xff] %v686
  %777 = vst [vmem:[%s2 + $0x1d0] sm:$0xff] %v691
  %778 = vst [vmem:[%s2 + $0x1d8] sm:$0xff] %v696
  %779 = vst [vmem:[%s2 + $0x1e0] sm:$0xff] %v701
  %780 = vst [vmem:[%s2 + $0x1e8] sm:$0xff] %v706
  %781 = vst [vmem:[%s2 + $0x1f0] sm:$0xff] %v711
  %782 = vst [vmem:[%s2 + $0x1f8] sm:$0xff] %v716
  // Predicated region
  $region10: #{_lambda_.34} parent=0 // pred_check
    _
  $region11: #{_lambda_.34} parent=0 // pred_check_branch
    %784 = sbr.rel (0) target = $region13
  $region12: #{_lambda_.34} parent=0 // pred_region
    _
  $region13: #{_lambda_.34} parent=0 // pred_fallthru
    _
  // Predicated region
  $region14: #{_lambda_.34} parent=0 // pred_check
    _
  $region15: #{_lambda_.34} parent=0 // pred_check_branch
    %786 = sbr.rel (0) target = $region17
  $region16: #{_lambda_.34} parent=0 // pred_region
    _
  $region17: #{_lambda_.34} parent=0 // pred_fallthru
    _

// kernel: tile.146
$region0: #{tile.146}
  #allocation0 [shape = 's32[1]{0}', space=sflag, size = 0x4, scoped, tag = 'scoped memory for tile.146']
  %s0 = inlined_call_operand.vmem [shape: f32[3], index: 0, kind: input, shape index: {}]
  %s1 = inlined_call_operand.vmem [shape: f32[32,3], index: 1, kind: output, shape index: {}]
  // Predicated region
  $region2: #{tile.146} parent=0 // pred_check
    _
  $region3: #{tile.146} parent=0 // pred_check_branch
    %3 = sbr.rel (0) target = $region5
  $region4: #{tile.146} parent=0 // pred_region
    _
  $region5: #{tile.146} parent=0 // pred_fallthru
    _
  %v4 = vld [vmem:[%s0] ss:$0 sm:$0xff]
  %5 = vst [vmem:[%s1] sm:$0xff] %v4
  %s6 = scalar_lea.vmem %s1, 8
  %7 = vst [vmem:[%s6] sm:$0xff] %v4
  %s8 = scalar_lea.vmem %s1, 16
  %9 = vst [vmem:[%s8] sm:$0xff] %v4
  %s10 = scalar_lea.vmem %s1, 24
  %11 = vst [vmem:[%s10] sm:$0xff] %v4

// kernel: tile.147
$region0: #{tile.147}
  %s0 = inlined_call_operand.vmem [shape: f32[32,3], index: 0, kind: input, shape index: {}]
  %s1 = inlined_call_operand.vmem [shape: f32[1,96], index: 1, kind: output, shape index: {}]
  $region1: #{tile.147} parent=0
    #allocation0 [shape = 'u8[4096]{0}', space=vmem, size = 0x1000, scoped, tag = 'scoped mem for output reshape']
    %v2 = vld [vmem:[%s0] sm:$0x1]
    %vm3 = vcmask 23552
    %4 = vst.msk [vmem:[#allocation0] sm:$0x1] %vm3, %v2
    %s5 = scalar_lea.vmem %s0, 31
    %v6 = vld [vmem:[%s5] sm:$0x1]
    %7 = vrot.lane.b32.xlu0 %v6, 93
    %v8 = vpop.permute.xlu0 %7
    %vm9 = vcmask 786152
    %10 = vst.msk [vmem:[#allocation0] sm:$0x1] %vm9, %v8
    %s11 = scalar_lea.vmem %s0, 30
    %v12 = vld [vmem:[%s11] sm:$0x1]
    %13 = vrot.lane.b32.xlu0 %v12, 90
    %v14 = vpop.permute.xlu0 %13
    %vm15 = vcmask 761552
    %16 = vst.msk [vmem:[#allocation0] sm:$0x1] %vm15, %v14
    %s17 = scalar_lea.vmem %s0, 29
    %v18 = vld [vmem:[%s17] sm:$0x1]
    %19 = vrot.lane.b32.xlu0 %v18, 87
    %v20 = vpop.permute.xlu0 %19
    %vm21 = vcmask 736952
    %22 = vst.msk [vmem:[#allocation0] sm:$0x1] %vm21, %v20
    %s23 = scalar_lea.vmem %s0, 28
    %v24 = vld [vmem:[%s23] sm:$0x1]
    %25 = vrot.lane.b32.xlu0 %v24, 84
    %v26 = vpop.permute.xlu0 %25
    %vm27 = vcmask 712352
    %28 = vst.msk [vmem:[#allocation0] sm:$0x1] %vm27, %v26
    %s29 = scalar_lea.vmem %s0, 27
    %v30 = vld [vmem:[%s29] sm:$0x1]
    %31 = vrot.lane.b32.xlu0 %v30, 81
    %v32 = vpop.permute.xlu0 %31
    %vm33 = vcmask 687752
    %34 = vst.msk [vmem:[#allocation0] sm:$0x1] %vm33, %v32
    %s35 = scalar_lea.vmem %s0, 26
    %v36 = vld [vmem:[%s35] sm:$0x1]
    %37 = vrot.lane.b32.xlu0 %v36, 78
    %v38 = vpop.permute.xlu0 %37
    %vm39 = vcmask 663152
    %40 = vst.msk [vmem:[#allocation0] sm:$0x1] %vm39, %v38
    %s41 = scalar_lea.vmem %s0, 25
    %v42 = vld [vmem:[%s41] sm:$0x1]
    %43 = vrot.lane.b32.xlu0 %v42, 75
    %v44 = vpop.permute.xlu0 %43
    %vm45 = vcmask 638552
    %46 = vst.msk [vmem:[#allocation0] sm:$0x1] %vm45, %v44
    %s47 = scalar_lea.vmem %s0, 24
    %v48 = vld [vmem:[%s47] sm:$0x1]
    %49 = vrot.lane.b32.xlu0 %v48, 72
    %v50 = vpop.permute.xlu0 %49
    %vm51 = vcmask 613952
    %52 = vst.msk [vmem:[#allocation0] sm:$0x1] %vm51, %v50
    %s53 = scalar_lea.vmem %s0, 23
    %v54 = vld [vmem:[%s53] sm:$0x1]
    %55 = vrot.lane.b32.xlu0 %v54, 69
    %v56 = vpop.permute.xlu0 %55
    %vm57 = vcmask 589352
    %58 = vst.msk [vmem:[#allocation0] sm:$0x1] %vm57, %v56
    %s59 = scalar_lea.vmem %s0, 22
    %v60 = vld [vmem:[%s59] sm:$0x1]
    %61 = vrot.lane.b32.xlu0 %v60, 66
    %v62 = vpop.permute.xlu0 %61
    %vm63 = vcmask 564752
    %64 = vst.msk [vmem:[#allocation0] sm:$0x1] %vm63, %v62
    %s65 = scalar_lea.vmem %s0, 21
    %v66 = vld [vmem:[%s65] sm:$0x1]
    %67 = vrot.lane.b32.xlu0 %v66, 63
    %v68 = vpop.permute.xlu0 %67
    %vm69 = vcmask 540152
    %70 = vst.msk [vmem:[#allocation0] sm:$0x1] %vm69, %v68
    %s71 = scalar_lea.vmem %s0, 20
    %v72 = vld [vmem:[%s71] sm:$0x1]
    %73 = vrot.lane.b32.xlu0 %v72, 60
    %v74 = vpop.permute.xlu0 %73
    %vm75 = vcmask 515552
    %76 = vst.msk [vmem:[#allocation0] sm:$0x1] %vm75, %v74
    %s77 = scalar_lea.vmem %s0, 19
    %v78 = vld [vmem:[%s77] sm:$0x1]
    %79 = vrot.lane.b32.xlu0 %v78, 57
    %v80 = vpop.permute.xlu0 %79
    %vm81 = vcmask 490952
    %82 = vst.msk [vmem:[#allocation0] sm:$0x1] %vm81, %v80
    %s83 = scalar_lea.vmem %s0, 18
    %v84 = vld [vmem:[%s83] sm:$0x1]
    %85 = vrot.lane.b32.xlu0 %v84, 54
    %v86 = vpop.permute.xlu0 %85
    %vm87 = vcmask 466352
    %88 = vst.msk [vmem:[#allocation0] sm:$0x1] %vm87, %v86
    %s89 = scalar_lea.vmem %s0, 17
    %v90 = vld [vmem:[%s89] sm:$0x1]
    %91 = vrot.lane.b32.xlu0 %v90, 51
    %v92 = vpop.permute.xlu0 %91
    %vm93 = vcmask 441752
    %94 = vst.msk [vmem:[#allocation0] sm:$0x1] %vm93, %v92
    %s95 = scalar_lea.vmem %s0, 16
    %v96 = vld [vmem:[%s95] sm:$0x1]
    %97 = vrot.lane.b32.xlu0 %v96, 48
    %v98 = vpop.permute.xlu0 %97
    %vm99 = vcmask 417152
    %100 = vst.msk [vmem:[#allocation0] sm:$0x1] %vm99, %v98
    %s101 = scalar_lea.vmem %s0, 15
    %v102 = vld [vmem:[%s101] sm:$0x1]
    %103 = vrot.lane.b32.xlu0 %v102, 45
    %v104 = vpop.permute.xlu0 %103
    %vm105 = vcmask 392552
    %106 = vst.msk [vmem:[#allocation0] sm:$0x1] %vm105, %v104
    %s107 = scalar_lea.vmem %s0, 14
    %v108 = vld [vmem:[%s107] sm:$0x1]
    %109 = vrot.lane.b32.xlu0 %v108, 42
    %v110 = vpop.permute.xlu0 %109
    %vm111 = vcmask 367952
    %112 = vst.msk [vmem:[#allocation0] sm:$0x1] %vm111, %v110
    %s113 = scalar_lea.vmem %s0, 13
    %v114 = vld [vmem:[%s113] sm:$0x1]
    %115 = vrot.lane.b32.xlu0 %v114, 39
    %v116 = vpop.permute.xlu0 %115
    %vm117 = vcmask 343352
    %118 = vst.msk [vmem:[#allocation0] sm:$0x1] %vm117, %v116
    %s119 = scalar_lea.vmem %s0, 12
    %v120 = vld [vmem:[%s119] sm:$0x1]
    %121 = vrot.lane.b32.xlu0 %v120, 36
    %v122 = vpop.permute.xlu0 %121
    %vm123 = vcmask 318752
    %124 = vst.msk [vmem:[#allocation0] sm:$0x1] %vm123, %v122
    %s125 = scalar_lea.vmem %s0, 11
    %v126 = vld [vmem:[%s125] sm:$0x1]
    %127 = vrot.lane.b32.xlu0 %v126, 33
    %v128 = vpop.permute.xlu0 %127
    %vm129 = vcmask 294152
    %130 = vst.msk [vmem:[#allocation0] sm:$0x1] %vm129, %v128
    %s131 = scalar_lea.vmem %s0, 10
    %v132 = vld [vmem:[%s131] sm:$0x1]
    %133 = vrot.lane.b32.xlu0 %v132, 30
    %v134 = vpop.permute.xlu0 %133
    %vm135 = vcmask 269552
    %136 = vst.msk [vmem:[#allocation0] sm:$0x1] %vm135, %v134
    %s137 = scalar_lea.vmem %s0, 9
    %v138 = vld [vmem:[%s137] sm:$0x1]
    %139 = vrot.lane.b32.xlu0 %v138, 27
    %v140 = vpop.permute.xlu0 %139
    %vm141 = vcmask 244952
    %142 = vst.msk [vmem:[#allocation0] sm:$0x1] %vm141, %v140
    %s143 = scalar_lea.vmem %s0, 8
    %v144 = vld [vmem:[%s143] sm:$0x1]
    %145 = vrot.lane.b32.xlu0 %v144, 24
    %v146 = vpop.permute.xlu0 %145
    %vm147 = vcmask 220352
    %148 = vst.msk [vmem:[#allocation0] sm:$0x1] %vm147, %v146
    %s149 = scalar_lea.vmem %s0, 7
    %v150 = vld [vmem:[%s149] sm:$0x1]
    %151 = vrot.lane.b32.xlu0 %v150, 21
    %v152 = vpop.permute.xlu0 %151
    %vm153 = vcmask 195752
    %154 = vst.msk [vmem:[#allocation0] sm:$0x1] %vm153, %v152
    %s155 = scalar_lea.vmem %s0, 6
    %v156 = vld [vmem:[%s155] sm:$0x1]
    %157 = vrot.lane.b32.xlu0 %v156, 18
    %v158 = vpop.permute.xlu0 %157
    %vm159 = vcmask 171152
    %160 = vst.msk [vmem:[#allocation0] sm:$0x1] %vm159, %v158
    %s161 = scalar_lea.vmem %s0, 5
    %v162 = vld [vmem:[%s161] sm:$0x1]
    %163 = vrot.lane.b32.xlu0 %v162, 15
    %v164 = vpop.permute.xlu0 %163
    %vm165 = vcmask 146552
    %166 = vst.msk [vmem:[#allocation0] sm:$0x1] %vm165, %v164
    %s167 = scalar_lea.vmem %s0, 4
    %v168 = vld [vmem:[%s167] sm:$0x1]
    %169 = vrot.lane.b32.xlu0 %v168, 12
    %v170 = vpop.permute.xlu0 %169
    %vm171 = vcmask 121952
    %172 = vst.msk [vmem:[#allocation0] sm:$0x1] %vm171, %v170
    %s173 = scalar_lea.vmem %s0, 3
    %v174 = vld [vmem:[%s173] sm:$0x1]
    %175 = vrot.lane.b32.xlu0 %v174, 9
    %v176 = vpop.permute.xlu0 %175
    %vm177 = vcmask 97352
    %178 = vst.msk [vmem:[#allocation0] sm:$0x1] %vm177, %v176
    %s179 = scalar_lea.vmem %s0, 2
    %v180 = vld [vmem:[%s179] sm:$0x1]
    %181 = vrot.lane.b32.xlu0 %v180, 6
    %v182 = vpop.permute.xlu0 %181
    %vm183 = vcmask 72752
    %184 = vst.msk [vmem:[#allocation0] sm:$0x1] %vm183, %v182
    %s185 = scalar_lea.vmem %s0, 1
    %v186 = vld [vmem:[%s185] sm:$0x1]
    %187 = vrot.lane.b32.xlu0 %v186, 3
    %v188 = vpop.permute.xlu0 %187
    %vm189 = vcmask 48152
    %190 = vst.msk [vmem:[#allocation0] sm:$0x1] %vm189, %v188
    %s192 = sshllo.u32 0, 1
    %v194 = vld [vmem:[#allocation0] sm:%s192]
    %s195 = sshllo.u32 0, 1
    %196 = vst [vmem:[%s1] sm:%s195] %v194

// kernel: _lambda_.35
$region0: #{_lambda_.35}
  #allocation0 [shape = 'u32[]', space=smem, size = 0x4, offset = 0x4, fixed_abs, tag = 'smem constant byte address 0x4 - core index']
  #allocation1 [shape = 'u32[144,128]{1,0:T(1,128)}', space=vmem, size = 0x12000, scoped, tag = 'internal scratch']
  %s0 = inlined_call_operand.vmem [shape: f32[64,96], index: 0, kind: input, shape index: {}]
  %s1 = inlined_call_operand.vmem [shape: f32[1,96], index: 1, kind: input, shape index: {}]
  %s2 = inlined_call_operand.vmem [shape: f32[64,96], index: 2, kind: output, shape index: {}]
  %s3 = sld [smem:[#allocation0]]
  $region18: #{_lambda_.35} parent=0
    _
  %s5 = ssub.s32 1, %s3
  %s6 = scalar_select 0, %s5, %s3
  // Predicated region
  $region2: #{_lambda_.35} parent=0 // pred_check
    _
  $region3: #{_lambda_.35} parent=0 // pred_check_branch
    %8 = sbr.rel (0) target = $region5
  $region4: #{_lambda_.35} parent=0 // pred_region
    _
  $region5: #{_lambda_.35} parent=0 // pred_fallthru
    _
  // Predicated region
  $region6: #{_lambda_.35} parent=0 // pred_check
    _
  $region7: #{_lambda_.35} parent=0 // pred_check_branch
    %10 = sbr.rel (0) target = $region9
  $region8: #{_lambda_.35} parent=0 // pred_region
    _
  $region9: #{_lambda_.35} parent=0 // pred_fallthru
    _
  %v11 = vld [vmem:[%s0] sm:$0xff]
  %v12 = vld [vmem:[%s0 + $0x8] sm:$0xff]
  %v13 = vld [vmem:[%s0 + $0x10] sm:$0xff]
  %v14 = vld [vmem:[%s0 + $0x18] sm:$0xff]
  %v15 = vld [vmem:[%s0 + $0x20] sm:$0xff]
  %v16 = vld [vmem:[%s0 + $0x28] sm:$0xff]
  %v17 = vld [vmem:[%s0 + $0x30] sm:$0xff]
  %v18 = vld [vmem:[%s0 + $0x38] sm:$0xff]
  %v19 = vld [vmem:[%s1] sm:$0x1]
  %v21 = vlaneseq
  %v22 = vshrl.u32 %v21, 7
  %v23 = vsub.s32 0, %v22
  %v24 = vrot.slane %v19, %v23
  %v26 = vadd.f32 %v11, %v24
  %v27 = vadd.f32 %v12, %v24
  %v28 = vadd.f32 %v13, %v24
  %v29 = vadd.f32 %v14, %v24
  %v30 = vadd.f32 %v15, %v24
  %v31 = vadd.f32 %v16, %v24
  %v32 = vadd.f32 %v17, %v24
  %v33 = vadd.f32 %v18, %v24
  %v34 = vtanh.pop %v26
  %v35 = vtanh.pop %v27
  %v36 = vtanh.pop %v28
  %v37 = vtanh.pop %v29
  %v38 = vtanh.pop %v30
  %v39 = vtanh.pop %v31
  %v40 = vtanh.pop %v32
  %v41 = vtanh.pop %v33
  %vm42 = vcmask 785408
  %43 = vst.msk [vmem:[%s2] sm:$0xff] %vm42, %v34
  %44 = vst.msk [vmem:[%s2 + $0x8] sm:$0xff] %vm42, %v35
  %45 = vst.msk [vmem:[%s2 + $0x10] sm:$0xff] %vm42, %v36
  %46 = vst.msk [vmem:[%s2 + $0x18] sm:$0xff] %vm42, %v37
  %47 = vst.msk [vmem:[%s2 + $0x20] sm:$0xff] %vm42, %v38
  %48 = vst.msk [vmem:[%s2 + $0x28] sm:$0xff] %vm42, %v39
  %49 = vst.msk [vmem:[%s2 + $0x30] sm:$0xff] %vm42, %v40
  %50 = vst.msk [vmem:[%s2 + $0x38] sm:$0xff] %vm42, %v41
  // Predicated region
  $region10: #{_lambda_.35} parent=0 // pred_check
    _
  $region11: #{_lambda_.35} parent=0 // pred_check_branch
    %52 = sbr.rel (0) target = $region13
  $region12: #{_lambda_.35} parent=0 // pred_region
    _
  $region13: #{_lambda_.35} parent=0 // pred_fallthru
    _
  // Predicated region
  $region14: #{_lambda_.35} parent=0 // pred_check
    _
  $region15: #{_lambda_.35} parent=0 // pred_check_branch
    %54 = sbr.rel (0) target = $region17
  $region16: #{_lambda_.35} parent=0 // pred_region
    _
  $region17: #{_lambda_.35} parent=0 // pred_fallthru
    _

</llo_original>
